<compile_context>
chip_gen: v7x
topology: tpu7x:2x2x1
jax: 0.10.0
libtpu: 0.0.40
codegen_flags: <defaults>
</compile_context>

<pallas_src>
import math

import jax
import jax.numpy as jnp
from jax import lax
from jax.experimental import pallas as pl
from jax.experimental.pallas import tpu as pltpu


# ------------------------------ helpers --------------------------------------

def _maybe_loop(n, body, unroll_limit=8):
    """Python-unroll short loops, lax.fori_loop long ones (bounds live ranges)."""
    if n <= unroll_limit:
        for i in range(n):
            body(i)
    else:
        def _body(i, carry):
            body(i)
            return carry
        lax.fori_loop(0, n, _body, 0)


def _pick_batch_block(B, max_bb=4):
    # Several images per grid step (amortizes ~0.35us/step overhead and makes
    # bigger DMAs), but keep >= 2 grid steps when possible so both TensorCores
    # get work on dual-TC chips (v7x).
    upper = max(1, min(max_bb, B // 2))
    for bb in range(upper, 0, -1):
        if B % bb == 0:
            return bb
    return 1


# ----------------------------- fused kernel ----------------------------------

def _make_encoder_kernel(bb, Hp, Wp, Cin, shapes):
    (H1, W1), (H2, W2), (H3, W3), (H4, W4) = shapes

    def kernel(x_ref, w1_ref, b1_ref, w2_ref, b2_ref, w3_ref, b3_ref,
               w4_ref, b4_ref, o_ref, act1, act2, act3):
        # Hoist all weight / bias loads out of the loops.
        w1 = w1_ref[...]                      # (9*Cin, 32) f32 (norm folded in)
        b1 = b1_ref[...]                      # (1, 32)     f32
        w2, b2 = w2_ref[...], b2_ref[...]     # (288, 32) bf16 / (1, 32) f32
        w3, b3 = w3_ref[...], b3_ref[...]
        w4, b4 = w4_ref[...], b4_ref[...]

        def conv_s1_row(src, b, oh, Wo, w, bias):
            """One output row of a 3x3 stride-1 VALID conv as a single matmul."""
            pieces = []
            for kh in range(3):
                row = src[b, oh + kh]                       # (W_in, 32) bf16
                for kw in range(3):
                    pieces.append(row[kw:kw + Wo, :])
            patch = jnp.concatenate(pieces, axis=-1)        # (Wo, 9*32) bf16
            y = jnp.dot(patch, w, preferred_element_type=jnp.float32)
            return jnp.maximum(y + bias, 0.0)               # (Wo, 32) f32

        for b in range(bb):
            # ------------- layer 1: 3x3 stride-2 conv on phases --------------
            # x_ref holds 4 space-to-depth phases per image (phase = 2*(kh%2)
            # + (kw%2)); the /255-0.5 normalization is folded into (w1, b1).
            def l1_row(oh):
                pieces = []
                for kh in range(3):
                    pa, dh = kh % 2, kh // 2
                    rows = [x_ref[b * 4 + 2 * pa + pb, oh + dh] for pb in (0, 1)]
                    for kw in range(3):
                        pb, dw = kw % 2, kw // 2
                        pieces.append(rows[pb][dw:dw + W1, :])
                # layer 1 in f32: phases are exact integers, K is tiny (9*Cin).
                patch = jnp.concatenate(pieces, axis=-1).astype(jnp.float32)
                y = jnp.dot(patch, w1, preferred_element_type=jnp.float32)
                act1[b, oh] = jnp.maximum(y + b1, 0.0).astype(jnp.bfloat16)
            _maybe_loop(H1, l1_row)

            # ------------- layers 2 & 3: VMEM -> VMEM ------------------------
            def l2_row(oh):
                act2[b, oh] = conv_s1_row(act1, b, oh, W2, w2, b2).astype(jnp.bfloat16)
            _maybe_loop(H2, l2_row)

            def l3_row(oh):
                act3[b, oh] = conv_s1_row(act2, b, oh, W3, w3, b3).astype(jnp.bfloat16)
            _maybe_loop(H3, l3_row)

            # ------------- layer 4: VMEM -> HBM output (f32) -----------------
            def l4_row(oh):
                y = conv_s1_row(act3, b, oh, W4, w4, b4)    # (W4, 32) f32
                o_ref[b, pl.ds(oh * W4, W4), :] = y
            _maybe_loop(H4, l4_row)

    return kernel


# --------------------------- Encoder forward ----------------------------------

@jax.jit
def encoder_forward(obs_nchw, params):
    """Pallas version of Encoder.forward.  obs_nchw: (B, C, H, W) pixel values."""
    x = jnp.transpose(obs_nchw, (0, 2, 3, 1)).astype(jnp.float32)   # NCHW -> NHWC
    B, H, W, Cin = x.shape
    assert H % 2 == 0 and W % 2 == 0, "stride-2 phase split assumes even H, W"
    (w1, b1), (w2, b2), (w3, b3), (w4, b4) = params
    Cout = w1.shape[-1]

    H1, W1 = (H - 3) // 2 + 1, (W - 3) // 2 + 1
    H2, W2 = H1 - 2, W1 - 2
    H3, W3 = H2 - 2, W2 - 2
    H4, W4 = H3 - 2, W3 - 2
    Hp, Wp = H // 2, W // 2

    # Fold (x/255 - 0.5) into the first conv:
    #   conv(x/255 - 0.5, w) + b == conv(x, w/255) + (b - 0.5 * sum_{kh,kw,ci} w)
    w1f = (w1 / 255.0).reshape(9 * Cin, Cout).astype(jnp.float32)
    b1f = (b1.reshape(1, Cout)
           - 0.5 * jnp.sum(w1, axis=(0, 1, 2)).reshape(1, Cout)).astype(jnp.float32)
    w2f = w2.reshape(9 * Cout, Cout).astype(jnp.bfloat16)
    w3f = w3.reshape(9 * Cout, Cout).astype(jnp.bfloat16)
    w4f = w4.reshape(9 * Cout, Cout).astype(jnp.bfloat16)
    b2f = b2.reshape(1, Cout).astype(jnp.float32)
    b3f = b3.reshape(1, Cout).astype(jnp.float32)
    b4f = b4.reshape(1, Cout).astype(jnp.float32)

    # Space-to-depth phases for the stride-2 layer (layout glue only; pixel
    # values are integers so the bf16 cast is exact).
    phases = jnp.stack([x[:, a::2, c::2, :] for a in range(2) for c in range(2)],
                       axis=1).reshape(B * 4, Hp, Wp, Cin).astype(jnp.bfloat16)

    bb = _pick_batch_block(B)
    grid = (B // bb,)
    kernel = _make_encoder_kernel(
        bb, Hp, Wp, Cin, ((H1, W1), (H2, W2), (H3, W3), (H4, W4)))

    out = pl.pallas_call(
        kernel,
        out_shape=jax.ShapeDtypeStruct((B, H4 * W4, Cout), jnp.float32),
        grid=grid,
        in_specs=[
            pl.BlockSpec((bb * 4, Hp, Wp, Cin), lambda i: (i, 0, 0, 0)),
            pl.BlockSpec((9 * Cin, Cout), lambda i: (0, 0)),
            pl.BlockSpec((1, Cout), lambda i: (0, 0)),
            pl.BlockSpec((9 * Cout, Cout), lambda i: (0, 0)),
            pl.BlockSpec((1, Cout), lambda i: (0, 0)),
            pl.BlockSpec((9 * Cout, Cout), lambda i: (0, 0)),
            pl.BlockSpec((1, Cout), lambda i: (0, 0)),
            pl.BlockSpec((9 * Cout, Cout), lambda i: (0, 0)),
            pl.BlockSpec((1, Cout), lambda i: (0, 0)),
        ],
        out_specs=pl.BlockSpec((bb, H4 * W4, Cout), lambda i: (i, 0, 0)),
        scratch_shapes=[
            pltpu.VMEM((bb, H1, W1, Cout), jnp.bfloat16),   # layer-1 activations
            pltpu.VMEM((bb, H2, W2, Cout), jnp.bfloat16),   # layer-2 activations
            pltpu.VMEM((bb, H3, W3, Cout), jnp.bfloat16),   # layer-3 activations
        ],
        compiler_params=pltpu.CompilerParams(
            dimension_semantics=("parallel",),
            # raise scoped VMEM (v5e default is 16 MiB); safe on 64 MiB v7x.
            vmem_limit_bytes=32 * 1024 * 1024,
        ),
    )(phases, w1f, b1f, w2f, b2f, w3f, b3f, w4f, b4f)

    # Kernel output is NHWC-flat (B, H4*W4, 32); reorder to the PyTorch
    # h.view(B, -1) (NCHW-flatten) ordering.  This is a tiny final tensor.
    return jnp.transpose(out, (0, 2, 1)).reshape(B, Cout * H4 * W4)


# ------------------------------- reference ------------------------------------

def _conv_relu_ref(x, w, b, stride):
    y = jax.lax.conv_general_dilated(
        x, w, window_strides=(stride, stride), padding="VALID",
        dimension_numbers=("NHWC", "HWIO", "NHWC"))
    return jnp.maximum(y + b.reshape(1, 1, 1, -1), 0.0)


def encoder_ref(obs_nchw, params):
    x = jnp.transpose(obs_nchw, (0, 2, 3, 1)).astype(jnp.float32)
    x = x / 255.0 - 0.5
    (w1, b1), (w2, b2), (w3, b3), (w4, b4) = params
    h = _conv_relu_ref(x, w1, b1, 2)
    h = _conv_relu_ref(h, w2, b2, 1)
    h = _conv_relu_ref(h, w3, b3, 1)
    h = _conv_relu_ref(h, w4, b4, 1)
    return jnp.transpose(h, (0, 3, 1, 2)).reshape(h.shape[0], -1)


# ----------------------------- parameter init ---------------------------------

def init_params(key, in_ch):
    # Deterministic synthetic init (PyTorch's utils.weight_init is an
    # orthogonal init; any deterministic init is acceptable here).
    chans = [in_ch, 32, 32, 32, 32]
    params = []
    keys = jax.random.split(key, 4)
    for i in range(4):
        cin, cout = chans[i], chans[i + 1]
        kw_, kb_ = jax.random.split(keys[i])
        fan_in = 3 * 3 * cin
        w = jax.random.normal(kw_, (3, 3, cin, cout), jnp.float32) / math.sqrt(fan_in)
        b = jax.random.normal(kb_, (1, cout), jnp.float32) * 0.05
        params.append((w, b))
    return params


# ----------------------------------- main --------------------------------------

if __name__ == "__main__":
    key = jax.random.PRNGKey(0)
    k_obs, k_par = jax.random.split(key)

    # small shapes: batch=2, channels=4, spatial=16x16 -> repr_dim = 32*1*1
    B, C, H, W = 2, 4, 16, 16
    # integer pixel values, like real uint8 observations (exact in bf16)
    obs = jnp.round(jax.random.uniform(k_obs, (B, C, H, W), jnp.float32, 0.0, 255.0))
    params = init_params(k_par, C)

    out = jax.block_until_ready(encoder_forward(obs, params))
    ref = encoder_ref(obs, params)

    assert out.shape == (B, 32 * 1 * 1), out.shape
    # layers 2-4 use bf16 matmul inputs -> tolerance loosened vs. pure f32
    if not bool(jnp.allclose(out, ref, atol=2e-2, rtol=2e-2)):
        max_err = float(jnp.max(jnp.abs(out - ref)))
        raise AssertionError(f"Pallas encoder mismatch, max abs err {max_err}")

    print("KERNEL_OK")
</pallas_src>

<mosaic_0001>
module attributes {stable_mosaic.version = 11 : i64} {
  func.func @kernel(%arg0: i32, %arg1: memref<4x8x8x4xbf16, #tpu.memory_space<vmem>>, %arg2: memref<36x32xf32, #tpu.memory_space<vmem>>, %arg3: memref<1x32xf32, #tpu.memory_space<vmem>>, %arg4: memref<288x32xbf16, #tpu.memory_space<vmem>>, %arg5: memref<1x32xf32, #tpu.memory_space<vmem>>, %arg6: memref<288x32xbf16, #tpu.memory_space<vmem>>, %arg7: memref<1x32xf32, #tpu.memory_space<vmem>>, %arg8: memref<288x32xbf16, #tpu.memory_space<vmem>>, %arg9: memref<1x32xf32, #tpu.memory_space<vmem>>, %arg10: memref<1x1x32xf32, #tpu.memory_space<vmem>>, %arg11: memref<1x7x7x32xbf16, #tpu.memory_space<vmem>>, %arg12: memref<1x5x5x32xbf16, #tpu.memory_space<vmem>>, %arg13: memref<1x3x3x32xbf16, #tpu.memory_space<vmem>>) attributes {dimension_semantics = [#tpu.dimension_semantics<parallel>], iteration_bounds = array<i64: 2>, scalar_prefetch = 0 : i64, scratch_operands = 3 : i64, tpu.core_type = #tpu.core_type<tc>, window_params = [{transform_indices = @transform_0, window_bounds = array<i64: 4, 8, 8, 4>}, {pipeline_mode = #tpu.pipeline_mode<synchronous>, transform_indices = @transform_1, window_bounds = array<i64: 36, 32>}, {pipeline_mode = #tpu.pipeline_mode<synchronous>, transform_indices = @transform_2, window_bounds = array<i64: 1, 32>}, {pipeline_mode = #tpu.pipeline_mode<synchronous>, transform_indices = @transform_3, window_bounds = array<i64: 288, 32>}, {pipeline_mode = #tpu.pipeline_mode<synchronous>, transform_indices = @transform_4, window_bounds = array<i64: 1, 32>}, {pipeline_mode = #tpu.pipeline_mode<synchronous>, transform_indices = @transform_5, window_bounds = array<i64: 288, 32>}, {pipeline_mode = #tpu.pipeline_mode<synchronous>, transform_indices = @transform_6, window_bounds = array<i64: 1, 32>}, {pipeline_mode = #tpu.pipeline_mode<synchronous>, transform_indices = @transform_7, window_bounds = array<i64: 288, 32>}, {pipeline_mode = #tpu.pipeline_mode<synchronous>, transform_indices = @transform_8, window_bounds = array<i64: 1, 32>}, {transform_indices = @transform_9, window_bounds = array<i64: 1, 1, 32>}]} {
    %c0 = arith.constant 0 : index
    %c0_0 = arith.constant 0 : index
    %0 = vector.load %arg2[%c0, %c0_0] : memref<36x32xf32, #tpu.memory_space<vmem>>, vector<36x32xf32>
    %c0_1 = arith.constant 0 : index
    %c0_2 = arith.constant 0 : index
    %1 = vector.load %arg3[%c0_1, %c0_2] : memref<1x32xf32, #tpu.memory_space<vmem>>, vector<1x32xf32>
    %c0_3 = arith.constant 0 : index
    %c0_4 = arith.constant 0 : index
    %2 = vector.load %arg4[%c0_3, %c0_4] : memref<288x32xbf16, #tpu.memory_space<vmem>>, vector<288x32xbf16>
    %c0_5 = arith.constant 0 : index
    %c0_6 = arith.constant 0 : index
    %3 = vector.load %arg5[%c0_5, %c0_6] : memref<1x32xf32, #tpu.memory_space<vmem>>, vector<1x32xf32>
    %c0_7 = arith.constant 0 : index
    %c0_8 = arith.constant 0 : index
    %4 = vector.load %arg6[%c0_7, %c0_8] : memref<288x32xbf16, #tpu.memory_space<vmem>>, vector<288x32xbf16>
    %c0_9 = arith.constant 0 : index
    %c0_10 = arith.constant 0 : index
    %5 = vector.load %arg7[%c0_9, %c0_10] : memref<1x32xf32, #tpu.memory_space<vmem>>, vector<1x32xf32>
    %c0_11 = arith.constant 0 : index
    %c0_12 = arith.constant 0 : index
    %6 = vector.load %arg8[%c0_11, %c0_12] : memref<288x32xbf16, #tpu.memory_space<vmem>>, vector<288x32xbf16>
    %c0_13 = arith.constant 0 : index
    %c0_14 = arith.constant 0 : index
    %7 = vector.load %arg9[%c0_13, %c0_14] : memref<1x32xf32, #tpu.memory_space<vmem>>, vector<1x32xf32>
    %c0_15 = arith.constant 0 : index
    %c0_16 = arith.constant 0 : index
    %c0_17 = arith.constant 0 : index
    %c0_18 = arith.constant 0 : index
    %8 = vector.load %arg1[%c0_15, %c0_16, %c0_17, %c0_18] : memref<4x8x8x4xbf16, #tpu.memory_space<vmem>>, vector<1x1x8x4xbf16>
    %9 = vector.shape_cast %8 : vector<1x1x8x4xbf16> to vector<8x4xbf16>
    %c1 = arith.constant 1 : index
    %c0_19 = arith.constant 0 : index
    %c0_20 = arith.constant 0 : index
    %c0_21 = arith.constant 0 : index
    %10 = vector.load %arg1[%c1, %c0_19, %c0_20, %c0_21] : memref<4x8x8x4xbf16, #tpu.memory_space<vmem>>, vector<1x1x8x4xbf16>
    %11 = vector.shape_cast %10 : vector<1x1x8x4xbf16> to vector<8x4xbf16>
    %12 = vector.extract_strided_slice %9 {offsets = [0, 0], sizes = [7, 4], strides = [1, 1]} : vector<8x4xbf16> to vector<7x4xbf16>
    %13 = vector.extract_strided_slice %11 {offsets = [0, 0], sizes = [7, 4], strides = [1, 1]} : vector<8x4xbf16> to vector<7x4xbf16>
    %14 = vector.extract_strided_slice %9 {offsets = [1, 0], sizes = [7, 4], strides = [1, 1]} : vector<8x4xbf16> to vector<7x4xbf16>
    %c2 = arith.constant 2 : index
    %c0_22 = arith.constant 0 : index
    %c0_23 = arith.constant 0 : index
    %c0_24 = arith.constant 0 : index
    %15 = vector.load %arg1[%c2, %c0_22, %c0_23, %c0_24] : memref<4x8x8x4xbf16, #tpu.memory_space<vmem>>, vector<1x1x8x4xbf16>
    %16 = vector.shape_cast %15 : vector<1x1x8x4xbf16> to vector<8x4xbf16>
    %c3 = arith.constant 3 : index
    %c0_25 = arith.constant 0 : index
    %c0_26 = arith.constant 0 : index
    %c0_27 = arith.constant 0 : index
    %17 = vector.load %arg1[%c3, %c0_25, %c0_26, %c0_27] : memref<4x8x8x4xbf16, #tpu.memory_space<vmem>>, vector<1x1x8x4xbf16>
    %18 = vector.shape_cast %17 : vector<1x1x8x4xbf16> to vector<8x4xbf16>
    %19 = vector.extract_strided_slice %16 {offsets = [0, 0], sizes = [7, 4], strides = [1, 1]} : vector<8x4xbf16> to vector<7x4xbf16>
    %20 = vector.extract_strided_slice %18 {offsets = [0, 0], sizes = [7, 4], strides = [1, 1]} : vector<8x4xbf16> to vector<7x4xbf16>
    %21 = vector.extract_strided_slice %16 {offsets = [1, 0], sizes = [7, 4], strides = [1, 1]} : vector<8x4xbf16> to vector<7x4xbf16>
    %c0_28 = arith.constant 0 : index
    %c1_29 = arith.constant 1 : index
    %c0_30 = arith.constant 0 : index
    %c0_31 = arith.constant 0 : index
    %22 = vector.load %arg1[%c0_28, %c1_29, %c0_30, %c0_31] : memref<4x8x8x4xbf16, #tpu.memory_space<vmem>>, vector<1x1x8x4xbf16>
    %23 = vector.shape_cast %22 : vector<1x1x8x4xbf16> to vector<8x4xbf16>
    %c1_32 = arith.constant 1 : index
    %c1_33 = arith.constant 1 : index
    %c0_34 = arith.constant 0 : index
    %c0_35 = arith.constant 0 : index
    %24 = vector.load %arg1[%c1_32, %c1_33, %c0_34, %c0_35] : memref<4x8x8x4xbf16, #tpu.memory_space<vmem>>, vector<1x1x8x4xbf16>
    %25 = vector.shape_cast %24 : vector<1x1x8x4xbf16> to vector<8x4xbf16>
    %26 = vector.extract_strided_slice %23 {offsets = [0, 0], sizes = [7, 4], strides = [1, 1]} : vector<8x4xbf16> to vector<7x4xbf16>
    %27 = vector.extract_strided_slice %25 {offsets = [0, 0], sizes = [7, 4], strides = [1, 1]} : vector<8x4xbf16> to vector<7x4xbf16>
    %28 = vector.extract_strided_slice %23 {offsets = [1, 0], sizes = [7, 4], strides = [1, 1]} : vector<8x4xbf16> to vector<7x4xbf16>
    %29 = tpu.concatenate %12, %13, %14, %19, %20, %21, %26, %27, %28 in 1 : vector<7x4xbf16>, vector<7x4xbf16>, vector<7x4xbf16>, vector<7x4xbf16>, vector<7x4xbf16>, vector<7x4xbf16>, vector<7x4xbf16>, vector<7x4xbf16>, vector<7x4xbf16> -> vector<7x36xbf16>
    %30 = arith.extf %29 : vector<7x36xbf16> to vector<7x36xf32>
    %cst = arith.constant dense<0.000000e+00> : vector<7x32xf32>
    %31 = tpu.matmul %30, %0, %cst {dimension_numbers = #tpu.dot_dimension_numbers<[1], [0], [0], [1], [0, 0, 1, 1], [], []>} : vector<7x36xf32>, vector<36x32xf32>, vector<7x32xf32> -> vector<7x32xf32>
    %32 = vector.broadcast %1 : vector<1x32xf32> to vector<7x32xf32>
    %33 = arith.addf %31, %32 : vector<7x32xf32>
    %cst_36 = arith.constant 0.000000e+00 : f32
    %34 = vector.broadcast %cst_36 : f32 to vector<7x32xf32>
    %35 = arith.maximumf %33, %34 : vector<7x32xf32>
    %36 = arith.truncf %35 : vector<7x32xf32> to vector<7x32xbf16>
    %c0_37 = arith.constant 0 : index
    %c0_38 = arith.constant 0 : index
    %c0_39 = arith.constant 0 : index
    %c0_40 = arith.constant 0 : index
    %37 = vector.load %arg11[%c0_37, %c0_38, %c0_39, %c0_40] : memref<1x7x7x32xbf16, #tpu.memory_space<vmem>>, vector<1x1x7x32xbf16>
    %38 = vector.shape_cast %37 : vector<1x1x7x32xbf16> to vector<7x32xbf16>
    %39 = vector.shape_cast %36 : vector<7x32xbf16> to vector<1x1x7x32xbf16>
    tpu.vector_store %arg11[%c0_37, %c0_38, %c0_39, %c0_40], %39 {strides = array<i32>} : memref<1x7x7x32xbf16, #tpu.memory_space<vmem>>, vector<1x1x7x32xbf16>,
    %c0_41 = arith.constant 0 : index
    %c1_42 = arith.constant 1 : index
    %c0_43 = arith.constant 0 : index
    %c0_44 = arith.constant 0 : index
    %40 = vector.load %arg1[%c0_41, %c1_42, %c0_43, %c0_44] : memref<4x8x8x4xbf16, #tpu.memory_space<vmem>>, vector<1x1x8x4xbf16>
    %41 = vector.shape_cast %40 : vector<1x1x8x4xbf16> to vector<8x4xbf16>
    %c1_45 = arith.constant 1 : index
    %c1_46 = arith.constant 1 : index
    %c0_47 = arith.constant 0 : index
    %c0_48 = arith.constant 0 : index
    %42 = vector.load %arg1[%c1_45, %c1_46, %c0_47, %c0_48] : memref<4x8x8x4xbf16, #tpu.memory_space<vmem>>, vector<1x1x8x4xbf16>
    %43 = vector.shape_cast %42 : vector<1x1x8x4xbf16> to vector<8x4xbf16>
    %44 = vector.extract_strided_slice %41 {offsets = [0, 0], sizes = [7, 4], strides = [1, 1]} : vector<8x4xbf16> to vector<7x4xbf16>
    %45 = vector.extract_strided_slice %43 {offsets = [0, 0], sizes = [7, 4], strides = [1, 1]} : vector<8x4xbf16> to vector<7x4xbf16>
    %46 = vector.extract_strided_slice %41 {offsets = [1, 0], sizes = [7, 4], strides = [1, 1]} : vector<8x4xbf16> to vector<7x4xbf16>
    %c2_49 = arith.constant 2 : index
    %c1_50 = arith.constant 1 : index
    %c0_51 = arith.constant 0 : index
    %c0_52 = arith.constant 0 : index
    %47 = vector.load %arg1[%c2_49, %c1_50, %c0_51, %c0_52] : memref<4x8x8x4xbf16, #tpu.memory_space<vmem>>, vector<1x1x8x4xbf16>
    %48 = vector.shape_cast %47 : vector<1x1x8x4xbf16> to vector<8x4xbf16>
    %c3_53 = arith.constant 3 : index
    %c1_54 = arith.constant 1 : index
    %c0_55 = arith.constant 0 : index
    %c0_56 = arith.constant 0 : index
    %49 = vector.load %arg1[%c3_53, %c1_54, %c0_55, %c0_56] : memref<4x8x8x4xbf16, #tpu.memory_space<vmem>>, vector<1x1x8x4xbf16>
    %50 = vector.shape_cast %49 : vector<1x1x8x4xbf16> to vector<8x4xbf16>
    %51 = vector.extract_strided_slice %48 {offsets = [0, 0], sizes = [7, 4], strides = [1, 1]} : vector<8x4xbf16> to vector<7x4xbf16>
    %52 = vector.extract_strided_slice %50 {offsets = [0, 0], sizes = [7, 4], strides = [1, 1]} : vector<8x4xbf16> to vector<7x4xbf16>
    %53 = vector.extract_strided_slice %48 {offsets = [1, 0], sizes = [7, 4], strides = [1, 1]} : vector<8x4xbf16> to vector<7x4xbf16>
    %c0_57 = arith.constant 0 : index
    %c2_58 = arith.constant 2 : index
    %c0_59 = arith.constant 0 : index
    %c0_60 = arith.constant 0 : index
    %54 = vector.load %arg1[%c0_57, %c2_58, %c0_59, %c0_60] : memref<4x8x8x4xbf16, #tpu.memory_space<vmem>>, vector<1x1x8x4xbf16>
    %55 = vector.shape_cast %54 : vector<1x1x8x4xbf16> to vector<8x4xbf16>
    %c1_61 = arith.constant 1 : index
    %c2_62 = arith.constant 2 : index
    %c0_63 = arith.constant 0 : index
    %c0_64 = arith.constant 0 : index
    %56 = vector.load %arg1[%c1_61, %c2_62, %c0_63, %c0_64] : memref<4x8x8x4xbf16, #tpu.memory_space<vmem>>, vector<1x1x8x4xbf16>
    %57 = vector.shape_cast %56 : vector<1x1x8x4xbf16> to vector<8x4xbf16>
    %58 = vector.extract_strided_slice %55 {offsets = [0, 0], sizes = [7, 4], strides = [1, 1]} : vector<8x4xbf16> to vector<7x4xbf16>
    %59 = vector.extract_strided_slice %57 {offsets = [0, 0], sizes = [7, 4], strides = [1, 1]} : vector<8x4xbf16> to vector<7x4xbf16>
    %60 = vector.extract_strided_slice %55 {offsets = [1, 0], sizes = [7, 4], strides = [1, 1]} : vector<8x4xbf16> to vector<7x4xbf16>
    %61 = tpu.concatenate %44, %45, %46, %51, %52, %53, %58, %59, %60 in 1 : vector<7x4xbf16>, vector<7x4xbf16>, vector<7x4xbf16>, vector<7x4xbf16>, vector<7x4xbf16>, vector<7x4xbf16>, vector<7x4xbf16>, vector<7x4xbf16>, vector<7x4xbf16> -> vector<7x36xbf16>
    %62 = arith.extf %61 : vector<7x36xbf16> to vector<7x36xf32>
    %cst_65 = arith.constant dense<0.000000e+00> : vector<7x32xf32>
    %63 = tpu.matmul %62, %0, %cst_65 {dimension_numbers = #tpu.dot_dimension_numbers<[1], [0], [0], [1], [0, 0, 1, 1], [], []>} : vector<7x36xf32>, vector<36x32xf32>, vector<7x32xf32> -> vector<7x32xf32>
    %64 = vector.broadcast %1 : vector<1x32xf32> to vector<7x32xf32>
    %65 = arith.addf %63, %64 : vector<7x32xf32>
    %cst_66 = arith.constant 0.000000e+00 : f32
    %66 = vector.broadcast %cst_66 : f32 to vector<7x32xf32>
    %67 = arith.maximumf %65, %66 : vector<7x32xf32>
    %68 = arith.truncf %67 : vector<7x32xf32> to vector<7x32xbf16>
    %c0_67 = arith.constant 0 : index
    %c1_68 = arith.constant 1 : index
    %c0_69 = arith.constant 0 : index
    %c0_70 = arith.constant 0 : index
    %69 = vector.load %arg11[%c0_67, %c1_68, %c0_69, %c0_70] : memref<1x7x7x32xbf16, #tpu.memory_space<vmem>>, vector<1x1x7x32xbf16>
    %70 = vector.shape_cast %69 : vector<1x1x7x32xbf16> to vector<7x32xbf16>
    %71 = vector.shape_cast %68 : vector<7x32xbf16> to vector<1x1x7x32xbf16>
    tpu.vector_store %arg11[%c0_67, %c1_68, %c0_69, %c0_70], %71 {strides = array<i32>} : memref<1x7x7x32xbf16, #tpu.memory_space<vmem>>, vector<1x1x7x32xbf16>,
    %c0_71 = arith.constant 0 : index
    %c2_72 = arith.constant 2 : index
    %c0_73 = arith.constant 0 : index
    %c0_74 = arith.constant 0 : index
    %72 = vector.load %arg1[%c0_71, %c2_72, %c0_73, %c0_74] : memref<4x8x8x4xbf16, #tpu.memory_space<vmem>>, vector<1x1x8x4xbf16>
    %73 = vector.shape_cast %72 : vector<1x1x8x4xbf16> to vector<8x4xbf16>
    %c1_75 = arith.constant 1 : index
    %c2_76 = arith.constant 2 : index
    %c0_77 = arith.constant 0 : index
    %c0_78 = arith.constant 0 : index
    %74 = vector.load %arg1[%c1_75, %c2_76, %c0_77, %c0_78] : memref<4x8x8x4xbf16, #tpu.memory_space<vmem>>, vector<1x1x8x4xbf16>
    %75 = vector.shape_cast %74 : vector<1x1x8x4xbf16> to vector<8x4xbf16>
    %76 = vector.extract_strided_slice %73 {offsets = [0, 0], sizes = [7, 4], strides = [1, 1]} : vector<8x4xbf16> to vector<7x4xbf16>
    %77 = vector.extract_strided_slice %75 {offsets = [0, 0], sizes = [7, 4], strides = [1, 1]} : vector<8x4xbf16> to vector<7x4xbf16>
    %78 = vector.extract_strided_slice %73 {offsets = [1, 0], sizes = [7, 4], strides = [1, 1]} : vector<8x4xbf16> to vector<7x4xbf16>
    %c2_79 = arith.constant 2 : index
    %c2_80 = arith.constant 2 : index
    %c0_81 = arith.constant 0 : index
    %c0_82 = arith.constant 0 : index
    %79 = vector.load %arg1[%c2_79, %c2_80, %c0_81, %c0_82] : memref<4x8x8x4xbf16, #tpu.memory_space<vmem>>, vector<1x1x8x4xbf16>
    %80 = vector.shape_cast %79 : vector<1x1x8x4xbf16> to vector<8x4xbf16>
    %c3_83 = arith.constant 3 : index
    %c2_84 = arith.constant 2 : index
    %c0_85 = arith.constant 0 : index
    %c0_86 = arith.constant 0 : index
    %81 = vector.load %arg1[%c3_83, %c2_84, %c0_85, %c0_86] : memref<4x8x8x4xbf16, #tpu.memory_space<vmem>>, vector<1x1x8x4xbf16>
    %82 = vector.shape_cast %81 : vector<1x1x8x4xbf16> to vector<8x4xbf16>
    %83 = vector.extract_strided_slice %80 {offsets = [0, 0], sizes = [7, 4], strides = [1, 1]} : vector<8x4xbf16> to vector<7x4xbf16>
    %84 = vector.extract_strided_slice %82 {offsets = [0, 0], sizes = [7, 4], strides = [1, 1]} : vector<8x4xbf16> to vector<7x4xbf16>
    %85 = vector.extract_strided_slice %80 {offsets = [1, 0], sizes = [7, 4], strides = [1, 1]} : vector<8x4xbf16> to vector<7x4xbf16>
    %c0_87 = arith.constant 0 : index
    %c3_88 = arith.constant 3 : index
    %c0_89 = arith.constant 0 : index
    %c0_90 = arith.constant 0 : index
    %86 = vector.load %arg1[%c0_87, %c3_88, %c0_89, %c0_90] : memref<4x8x8x4xbf16, #tpu.memory_space<vmem>>, vector<1x1x8x4xbf16>
    %87 = vector.shape_cast %86 : vector<1x1x8x4xbf16> to vector<8x4xbf16>
    %c1_91 = arith.constant 1 : index
    %c3_92 = arith.constant 3 : index
    %c0_93 = arith.constant 0 : index
    %c0_94 = arith.constant 0 : index
    %88 = vector.load %arg1[%c1_91, %c3_92, %c0_93, %c0_94] : memref<4x8x8x4xbf16, #tpu.memory_space<vmem>>, vector<1x1x8x4xbf16>
    %89 = vector.shape_cast %88 : vector<1x1x8x4xbf16> to vector<8x4xbf16>
    %90 = vector.extract_strided_slice %87 {offsets = [0, 0], sizes = [7, 4], strides = [1, 1]} : vector<8x4xbf16> to vector<7x4xbf16>
    %91 = vector.extract_strided_slice %89 {offsets = [0, 0], sizes = [7, 4], strides = [1, 1]} : vector<8x4xbf16> to vector<7x4xbf16>
    %92 = vector.extract_strided_slice %87 {offsets = [1, 0], sizes = [7, 4], strides = [1, 1]} : vector<8x4xbf16> to vector<7x4xbf16>
    %93 = tpu.concatenate %76, %77, %78, %83, %84, %85, %90, %91, %92 in 1 : vector<7x4xbf16>, vector<7x4xbf16>, vector<7x4xbf16>, vector<7x4xbf16>, vector<7x4xbf16>, vector<7x4xbf16>, vector<7x4xbf16>, vector<7x4xbf16>, vector<7x4xbf16> -> vector<7x36xbf16>
    %94 = arith.extf %93 : vector<7x36xbf16> to vector<7x36xf32>
    %cst_95 = arith.constant dense<0.000000e+00> : vector<7x32xf32>
    %95 = tpu.matmul %94, %0, %cst_95 {dimension_numbers = #tpu.dot_dimension_numbers<[1], [0], [0], [1], [0, 0, 1, 1], [], []>} : vector<7x36xf32>, vector<36x32xf32>, vector<7x32xf32> -> vector<7x32xf32>
    %96 = vector.broadcast %1 : vector<1x32xf32> to vector<7x32xf32>
    %97 = arith.addf %95, %96 : vector<7x32xf32>
    %cst_96 = arith.constant 0.000000e+00 : f32
    %98 = vector.broadcast %cst_96 : f32 to vector<7x32xf32>
    %99 = arith.maximumf %97, %98 : vector<7x32xf32>
    %100 = arith.truncf %99 : vector<7x32xf32> to vector<7x32xbf16>
    %c0_97 = arith.constant 0 : index
    %c2_98 = arith.constant 2 : index
    %c0_99 = arith.constant 0 : index
    %c0_100 = arith.constant 0 : index
    %101 = vector.load %arg11[%c0_97, %c2_98, %c0_99, %c0_100] : memref<1x7x7x32xbf16, #tpu.memory_space<vmem>>, vector<1x1x7x32xbf16>
    %102 = vector.shape_cast %101 : vector<1x1x7x32xbf16> to vector<7x32xbf16>
    %103 = vector.shape_cast %100 : vector<7x32xbf16> to vector<1x1x7x32xbf16>
    tpu.vector_store %arg11[%c0_97, %c2_98, %c0_99, %c0_100], %103 {strides = array<i32>} : memref<1x7x7x32xbf16, #tpu.memory_space<vmem>>, vector<1x1x7x32xbf16>,
    %c0_101 = arith.constant 0 : index
    %c3_102 = arith.constant 3 : index
    %c0_103 = arith.constant 0 : index
    %c0_104 = arith.constant 0 : index
    %104 = vector.load %arg1[%c0_101, %c3_102, %c0_103, %c0_104] : memref<4x8x8x4xbf16, #tpu.memory_space<vmem>>, vector<1x1x8x4xbf16>
    %105 = vector.shape_cast %104 : vector<1x1x8x4xbf16> to vector<8x4xbf16>
    %c1_105 = arith.constant 1 : index
    %c3_106 = arith.constant 3 : index
    %c0_107 = arith.constant 0 : index
    %c0_108 = arith.constant 0 : index
    %106 = vector.load %arg1[%c1_105, %c3_106, %c0_107, %c0_108] : memref<4x8x8x4xbf16, #tpu.memory_space<vmem>>, vector<1x1x8x4xbf16>
    %107 = vector.shape_cast %106 : vector<1x1x8x4xbf16> to vector<8x4xbf16>
    %108 = vector.extract_strided_slice %105 {offsets = [0, 0], sizes = [7, 4], strides = [1, 1]} : vector<8x4xbf16> to vector<7x4xbf16>
    %109 = vector.extract_strided_slice %107 {offsets = [0, 0], sizes = [7, 4], strides = [1, 1]} : vector<8x4xbf16> to vector<7x4xbf16>
    %110 = vector.extract_strided_slice %105 {offsets = [1, 0], sizes = [7, 4], strides = [1, 1]} : vector<8x4xbf16> to vector<7x4xbf16>
    %c2_109 = arith.constant 2 : index
    %c3_110 = arith.constant 3 : index
    %c0_111 = arith.constant 0 : index
    %c0_112 = arith.constant 0 : index
    %111 = vector.load %arg1[%c2_109, %c3_110, %c0_111, %c0_112] : memref<4x8x8x4xbf16, #tpu.memory_space<vmem>>, vector<1x1x8x4xbf16>
    %112 = vector.shape_cast %111 : vector<1x1x8x4xbf16> to vector<8x4xbf16>
    %c3_113 = arith.constant 3 : index
    %c3_114 = arith.constant 3 : index
    %c0_115 = arith.constant 0 : index
    %c0_116 = arith.constant 0 : index
    %113 = vector.load %arg1[%c3_113, %c3_114, %c0_115, %c0_116] : memref<4x8x8x4xbf16, #tpu.memory_space<vmem>>, vector<1x1x8x4xbf16>
    %114 = vector.shape_cast %113 : vector<1x1x8x4xbf16> to vector<8x4xbf16>
    %115 = vector.extract_strided_slice %112 {offsets = [0, 0], sizes = [7, 4], strides = [1, 1]} : vector<8x4xbf16> to vector<7x4xbf16>
    %116 = vector.extract_strided_slice %114 {offsets = [0, 0], sizes = [7, 4], strides = [1, 1]} : vector<8x4xbf16> to vector<7x4xbf16>
    %117 = vector.extract_strided_slice %112 {offsets = [1, 0], sizes = [7, 4], strides = [1, 1]} : vector<8x4xbf16> to vector<7x4xbf16>
    %c0_117 = arith.constant 0 : index
    %c4 = arith.constant 4 : index
    %c0_118 = arith.constant 0 : index
    %c0_119 = arith.constant 0 : index
    %118 = vector.load %arg1[%c0_117, %c4, %c0_118, %c0_119] : memref<4x8x8x4xbf16, #tpu.memory_space<vmem>>, vector<1x1x8x4xbf16>
    %119 = vector.shape_cast %118 : vector<1x1x8x4xbf16> to vector<8x4xbf16>
    %c1_120 = arith.constant 1 : index
    %c4_121 = arith.constant 4 : index
    %c0_122 = arith.constant 0 : index
    %c0_123 = arith.constant 0 : index
    %120 = vector.load %arg1[%c1_120, %c4_121, %c0_122, %c0_123] : memref<4x8x8x4xbf16, #tpu.memory_space<vmem>>, vector<1x1x8x4xbf16>
    %121 = vector.shape_cast %120 : vector<1x1x8x4xbf16> to vector<8x4xbf16>
    %122 = vector.extract_strided_slice %119 {offsets = [0, 0], sizes = [7, 4], strides = [1, 1]} : vector<8x4xbf16> to vector<7x4xbf16>
    %123 = vector.extract_strided_slice %121 {offsets = [0, 0], sizes = [7, 4], strides = [1, 1]} : vector<8x4xbf16> to vector<7x4xbf16>
    %124 = vector.extract_strided_slice %119 {offsets = [1, 0], sizes = [7, 4], strides = [1, 1]} : vector<8x4xbf16> to vector<7x4xbf16>
    %125 = tpu.concatenate %108, %109, %110, %115, %116, %117, %122, %123, %124 in 1 : vector<7x4xbf16>, vector<7x4xbf16>, vector<7x4xbf16>, vector<7x4xbf16>, vector<7x4xbf16>, vector<7x4xbf16>, vector<7x4xbf16>, vector<7x4xbf16>, vector<7x4xbf16> -> vector<7x36xbf16>
    %126 = arith.extf %125 : vector<7x36xbf16> to vector<7x36xf32>
    %cst_124 = arith.constant dense<0.000000e+00> : vector<7x32xf32>
    %127 = tpu.matmul %126, %0, %cst_124 {dimension_numbers = #tpu.dot_dimension_numbers<[1], [0], [0], [1], [0, 0, 1, 1], [], []>} : vector<7x36xf32>, vector<36x32xf32>, vector<7x32xf32> -> vector<7x32xf32>
    %128 = vector.broadcast %1 : vector<1x32xf32> to vector<7x32xf32>
    %129 = arith.addf %127, %128 : vector<7x32xf32>
    %cst_125 = arith.constant 0.000000e+00 : f32
    %130 = vector.broadcast %cst_125 : f32 to vector<7x32xf32>
    %131 = arith.maximumf %129, %130 : vector<7x32xf32>
    %132 = arith.truncf %131 : vector<7x32xf32> to vector<7x32xbf16>
    %c0_126 = arith.constant 0 : index
    %c3_127 = arith.constant 3 : index
    %c0_128 = arith.constant 0 : index
    %c0_129 = arith.constant 0 : index
    %133 = vector.load %arg11[%c0_126, %c3_127, %c0_128, %c0_129] : memref<1x7x7x32xbf16, #tpu.memory_space<vmem>>, vector<1x1x7x32xbf16>
    %134 = vector.shape_cast %133 : vector<1x1x7x32xbf16> to vector<7x32xbf16>
    %135 = vector.shape_cast %132 : vector<7x32xbf16> to vector<1x1x7x32xbf16>
    tpu.vector_store %arg11[%c0_126, %c3_127, %c0_128, %c0_129], %135 {strides = array<i32>} : memref<1x7x7x32xbf16, #tpu.memory_space<vmem>>, vector<1x1x7x32xbf16>,
    %c0_130 = arith.constant 0 : index
    %c4_131 = arith.constant 4 : index
    %c0_132 = arith.constant 0 : index
    %c0_133 = arith.constant 0 : index
    %136 = vector.load %arg1[%c0_130, %c4_131, %c0_132, %c0_133] : memref<4x8x8x4xbf16, #tpu.memory_space<vmem>>, vector<1x1x8x4xbf16>
    %137 = vector.shape_cast %136 : vector<1x1x8x4xbf16> to vector<8x4xbf16>
    %c1_134 = arith.constant 1 : index
    %c4_135 = arith.constant 4 : index
    %c0_136 = arith.constant 0 : index
    %c0_137 = arith.constant 0 : index
    %138 = vector.load %arg1[%c1_134, %c4_135, %c0_136, %c0_137] : memref<4x8x8x4xbf16, #tpu.memory_space<vmem>>, vector<1x1x8x4xbf16>
    %139 = vector.shape_cast %138 : vector<1x1x8x4xbf16> to vector<8x4xbf16>
    %140 = vector.extract_strided_slice %137 {offsets = [0, 0], sizes = [7, 4], strides = [1, 1]} : vector<8x4xbf16> to vector<7x4xbf16>
    %141 = vector.extract_strided_slice %139 {offsets = [0, 0], sizes = [7, 4], strides = [1, 1]} : vector<8x4xbf16> to vector<7x4xbf16>
    %142 = vector.extract_strided_slice %137 {offsets = [1, 0], sizes = [7, 4], strides = [1, 1]} : vector<8x4xbf16> to vector<7x4xbf16>
    %c2_138 = arith.constant 2 : index
    %c4_139 = arith.constant 4 : index
    %c0_140 = arith.constant 0 : index
    %c0_141 = arith.constant 0 : index
    %143 = vector.load %arg1[%c2_138, %c4_139, %c0_140, %c0_141] : memref<4x8x8x4xbf16, #tpu.memory_space<vmem>>, vector<1x1x8x4xbf16>
    %144 = vector.shape_cast %143 : vector<1x1x8x4xbf16> to vector<8x4xbf16>
    %c3_142 = arith.constant 3 : index
    %c4_143 = arith.constant 4 : index
    %c0_144 = arith.constant 0 : index
    %c0_145 = arith.constant 0 : index
    %145 = vector.load %arg1[%c3_142, %c4_143, %c0_144, %c0_145] : memref<4x8x8x4xbf16, #tpu.memory_space<vmem>>, vector<1x1x8x4xbf16>
    %146 = vector.shape_cast %145 : vector<1x1x8x4xbf16> to vector<8x4xbf16>
    %147 = vector.extract_strided_slice %144 {offsets = [0, 0], sizes = [7, 4], strides = [1, 1]} : vector<8x4xbf16> to vector<7x4xbf16>
    %148 = vector.extract_strided_slice %146 {offsets = [0, 0], sizes = [7, 4], strides = [1, 1]} : vector<8x4xbf16> to vector<7x4xbf16>
    %149 = vector.extract_strided_slice %144 {offsets = [1, 0], sizes = [7, 4], strides = [1, 1]} : vector<8x4xbf16> to vector<7x4xbf16>
    %c0_146 = arith.constant 0 : index
    %c5 = arith.constant 5 : index
    %c0_147 = arith.constant 0 : index
    %c0_148 = arith.constant 0 : index
    %150 = vector.load %arg1[%c0_146, %c5, %c0_147, %c0_148] : memref<4x8x8x4xbf16, #tpu.memory_space<vmem>>, vector<1x1x8x4xbf16>
    %151 = vector.shape_cast %150 : vector<1x1x8x4xbf16> to vector<8x4xbf16>
    %c1_149 = arith.constant 1 : index
    %c5_150 = arith.constant 5 : index
    %c0_151 = arith.constant 0 : index
    %c0_152 = arith.constant 0 : index
    %152 = vector.load %arg1[%c1_149, %c5_150, %c0_151, %c0_152] : memref<4x8x8x4xbf16, #tpu.memory_space<vmem>>, vector<1x1x8x4xbf16>
    %153 = vector.shape_cast %152 : vector<1x1x8x4xbf16> to vector<8x4xbf16>
    %154 = vector.extract_strided_slice %151 {offsets = [0, 0], sizes = [7, 4], strides = [1, 1]} : vector<8x4xbf16> to vector<7x4xbf16>
    %155 = vector.extract_strided_slice %153 {offsets = [0, 0], sizes = [7, 4], strides = [1, 1]} : vector<8x4xbf16> to vector<7x4xbf16>
    %156 = vector.extract_strided_slice %151 {offsets = [1, 0], sizes = [7, 4], strides = [1, 1]} : vector<8x4xbf16> to vector<7x4xbf16>
    %157 = tpu.concatenate %140, %141, %142, %147, %148, %149, %154, %155, %156 in 1 : vector<7x4xbf16>, vector<7x4xbf16>, vector<7x4xbf16>, vector<7x4xbf16>, vector<7x4xbf16>, vector<7x4xbf16>, vector<7x4xbf16>, vector<7x4xbf16>, vector<7x4xbf16> -> vector<7x36xbf16>
    %158 = arith.extf %157 : vector<7x36xbf16> to vector<7x36xf32>
    %cst_153 = arith.constant dense<0.000000e+00> : vector<7x32xf32>
    %159 = tpu.matmul %158, %0, %cst_153 {dimension_numbers = #tpu.dot_dimension_numbers<[1], [0], [0], [1], [0, 0, 1, 1], [], []>} : vector<7x36xf32>, vector<36x32xf32>, vector<7x32xf32> -> vector<7x32xf32>
    %160 = vector.broadcast %1 : vector<1x32xf32> to vector<7x32xf32>
    %161 = arith.addf %159, %160 : vector<7x32xf32>
    %cst_154 = arith.constant 0.000000e+00 : f32
    %162 = vector.broadcast %cst_154 : f32 to vector<7x32xf32>
    %163 = arith.maximumf %161, %162 : vector<7x32xf32>
    %164 = arith.truncf %163 : vector<7x32xf32> to vector<7x32xbf16>
    %c0_155 = arith.constant 0 : index
    %c4_156 = arith.constant 4 : index
    %c0_157 = arith.constant 0 : index
    %c0_158 = arith.constant 0 : index
    %165 = vector.load %arg11[%c0_155, %c4_156, %c0_157, %c0_158] : memref<1x7x7x32xbf16, #tpu.memory_space<vmem>>, vector<1x1x7x32xbf16>
    %166 = vector.shape_cast %165 : vector<1x1x7x32xbf16> to vector<7x32xbf16>
    %167 = vector.shape_cast %164 : vector<7x32xbf16> to vector<1x1x7x32xbf16>
    tpu.vector_store %arg11[%c0_155, %c4_156, %c0_157, %c0_158], %167 {strides = array<i32>} : memref<1x7x7x32xbf16, #tpu.memory_space<vmem>>, vector<1x1x7x32xbf16>,
    %c0_159 = arith.constant 0 : index
    %c5_160 = arith.constant 5 : index
    %c0_161 = arith.constant 0 : index
    %c0_162 = arith.constant 0 : index
    %168 = vector.load %arg1[%c0_159, %c5_160, %c0_161, %c0_162] : memref<4x8x8x4xbf16, #tpu.memory_space<vmem>>, vector<1x1x8x4xbf16>
    %169 = vector.shape_cast %168 : vector<1x1x8x4xbf16> to vector<8x4xbf16>
    %c1_163 = arith.constant 1 : index
    %c5_164 = arith.constant 5 : index
    %c0_165 = arith.constant 0 : index
    %c0_166 = arith.constant 0 : index
    %170 = vector.load %arg1[%c1_163, %c5_164, %c0_165, %c0_166] : memref<4x8x8x4xbf16, #tpu.memory_space<vmem>>, vector<1x1x8x4xbf16>
    %171 = vector.shape_cast %170 : vector<1x1x8x4xbf16> to vector<8x4xbf16>
    %172 = vector.extract_strided_slice %169 {offsets = [0, 0], sizes = [7, 4], strides = [1, 1]} : vector<8x4xbf16> to vector<7x4xbf16>
    %173 = vector.extract_strided_slice %171 {offsets = [0, 0], sizes = [7, 4], strides = [1, 1]} : vector<8x4xbf16> to vector<7x4xbf16>
    %174 = vector.extract_strided_slice %169 {offsets = [1, 0], sizes = [7, 4], strides = [1, 1]} : vector<8x4xbf16> to vector<7x4xbf16>
    %c2_167 = arith.constant 2 : index
    %c5_168 = arith.constant 5 : index
    %c0_169 = arith.constant 0 : index
    %c0_170 = arith.constant 0 : index
    %175 = vector.load %arg1[%c2_167, %c5_168, %c0_169, %c0_170] : memref<4x8x8x4xbf16, #tpu.memory_space<vmem>>, vector<1x1x8x4xbf16>
    %176 = vector.shape_cast %175 : vector<1x1x8x4xbf16> to vector<8x4xbf16>
    %c3_171 = arith.constant 3 : index
    %c5_172 = arith.constant 5 : index
    %c0_173 = arith.constant 0 : index
    %c0_174 = arith.constant 0 : index
    %177 = vector.load %arg1[%c3_171, %c5_172, %c0_173, %c0_174] : memref<4x8x8x4xbf16, #tpu.memory_space<vmem>>, vector<1x1x8x4xbf16>
    %178 = vector.shape_cast %177 : vector<1x1x8x4xbf16> to vector<8x4xbf16>
    %179 = vector.extract_strided_slice %176 {offsets = [0, 0], sizes = [7, 4], strides = [1, 1]} : vector<8x4xbf16> to vector<7x4xbf16>
    %180 = vector.extract_strided_slice %178 {offsets = [0, 0], sizes = [7, 4], strides = [1, 1]} : vector<8x4xbf16> to vector<7x4xbf16>
    %181 = vector.extract_strided_slice %176 {offsets = [1, 0], sizes = [7, 4], strides = [1, 1]} : vector<8x4xbf16> to vector<7x4xbf16>
    %c0_175 = arith.constant 0 : index
    %c6 = arith.constant 6 : index
    %c0_176 = arith.constant 0 : index
    %c0_177 = arith.constant 0 : index
    %182 = vector.load %arg1[%c0_175, %c6, %c0_176, %c0_177] : memref<4x8x8x4xbf16, #tpu.memory_space<vmem>>, vector<1x1x8x4xbf16>
    %183 = vector.shape_cast %182 : vector<1x1x8x4xbf16> to vector<8x4xbf16>
    %c1_178 = arith.constant 1 : index
    %c6_179 = arith.constant 6 : index
    %c0_180 = arith.constant 0 : index
    %c0_181 = arith.constant 0 : index
    %184 = vector.load %arg1[%c1_178, %c6_179, %c0_180, %c0_181] : memref<4x8x8x4xbf16, #tpu.memory_space<vmem>>, vector<1x1x8x4xbf16>
    %185 = vector.shape_cast %184 : vector<1x1x8x4xbf16> to vector<8x4xbf16>
    %186 = vector.extract_strided_slice %183 {offsets = [0, 0], sizes = [7, 4], strides = [1, 1]} : vector<8x4xbf16> to vector<7x4xbf16>
    %187 = vector.extract_strided_slice %185 {offsets = [0, 0], sizes = [7, 4], strides = [1, 1]} : vector<8x4xbf16> to vector<7x4xbf16>
    %188 = vector.extract_strided_slice %183 {offsets = [1, 0], sizes = [7, 4], strides = [1, 1]} : vector<8x4xbf16> to vector<7x4xbf16>
    %189 = tpu.concatenate %172, %173, %174, %179, %180, %181, %186, %187, %188 in 1 : vector<7x4xbf16>, vector<7x4xbf16>, vector<7x4xbf16>, vector<7x4xbf16>, vector<7x4xbf16>, vector<7x4xbf16>, vector<7x4xbf16>, vector<7x4xbf16>, vector<7x4xbf16> -> vector<7x36xbf16>
    %190 = arith.extf %189 : vector<7x36xbf16> to vector<7x36xf32>
    %cst_182 = arith.constant dense<0.000000e+00> : vector<7x32xf32>
    %191 = tpu.matmul %190, %0, %cst_182 {dimension_numbers = #tpu.dot_dimension_numbers<[1], [0], [0], [1], [0, 0, 1, 1], [], []>} : vector<7x36xf32>, vector<36x32xf32>, vector<7x32xf32> -> vector<7x32xf32>
    %192 = vector.broadcast %1 : vector<1x32xf32> to vector<7x32xf32>
    %193 = arith.addf %191, %192 : vector<7x32xf32>
    %cst_183 = arith.constant 0.000000e+00 : f32
    %194 = vector.broadcast %cst_183 : f32 to vector<7x32xf32>
    %195 = arith.maximumf %193, %194 : vector<7x32xf32>
    %196 = arith.truncf %195 : vector<7x32xf32> to vector<7x32xbf16>
    %c0_184 = arith.constant 0 : index
    %c5_185 = arith.constant 5 : index
    %c0_186 = arith.constant 0 : index
    %c0_187 = arith.constant 0 : index
    %197 = vector.load %arg11[%c0_184, %c5_185, %c0_186, %c0_187] : memref<1x7x7x32xbf16, #tpu.memory_space<vmem>>, vector<1x1x7x32xbf16>
    %198 = vector.shape_cast %197 : vector<1x1x7x32xbf16> to vector<7x32xbf16>
    %199 = vector.shape_cast %196 : vector<7x32xbf16> to vector<1x1x7x32xbf16>
    tpu.vector_store %arg11[%c0_184, %c5_185, %c0_186, %c0_187], %199 {strides = array<i32>} : memref<1x7x7x32xbf16, #tpu.memory_space<vmem>>, vector<1x1x7x32xbf16>,
    %c0_188 = arith.constant 0 : index
    %c6_189 = arith.constant 6 : index
    %c0_190 = arith.constant 0 : index
    %c0_191 = arith.constant 0 : index
    %200 = vector.load %arg1[%c0_188, %c6_189, %c0_190, %c0_191] : memref<4x8x8x4xbf16, #tpu.memory_space<vmem>>, vector<1x1x8x4xbf16>
    %201 = vector.shape_cast %200 : vector<1x1x8x4xbf16> to vector<8x4xbf16>
    %c1_192 = arith.constant 1 : index
    %c6_193 = arith.constant 6 : index
    %c0_194 = arith.constant 0 : index
    %c0_195 = arith.constant 0 : index
    %202 = vector.load %arg1[%c1_192, %c6_193, %c0_194, %c0_195] : memref<4x8x8x4xbf16, #tpu.memory_space<vmem>>, vector<1x1x8x4xbf16>
    %203 = vector.shape_cast %202 : vector<1x1x8x4xbf16> to vector<8x4xbf16>
    %204 = vector.extract_strided_slice %201 {offsets = [0, 0], sizes = [7, 4], strides = [1, 1]} : vector<8x4xbf16> to vector<7x4xbf16>
    %205 = vector.extract_strided_slice %203 {offsets = [0, 0], sizes = [7, 4], strides = [1, 1]} : vector<8x4xbf16> to vector<7x4xbf16>
    %206 = vector.extract_strided_slice %201 {offsets = [1, 0], sizes = [7, 4], strides = [1, 1]} : vector<8x4xbf16> to vector<7x4xbf16>
    %c2_196 = arith.constant 2 : index
    %c6_197 = arith.constant 6 : index
    %c0_198 = arith.constant 0 : index
    %c0_199 = arith.constant 0 : index
    %207 = vector.load %arg1[%c2_196, %c6_197, %c0_198, %c0_199] : memref<4x8x8x4xbf16, #tpu.memory_space<vmem>>, vector<1x1x8x4xbf16>
    %208 = vector.shape_cast %207 : vector<1x1x8x4xbf16> to vector<8x4xbf16>
    %c3_200 = arith.constant 3 : index
    %c6_201 = arith.constant 6 : index
    %c0_202 = arith.constant 0 : index
    %c0_203 = arith.constant 0 : index
    %209 = vector.load %arg1[%c3_200, %c6_201, %c0_202, %c0_203] : memref<4x8x8x4xbf16, #tpu.memory_space<vmem>>, vector<1x1x8x4xbf16>
    %210 = vector.shape_cast %209 : vector<1x1x8x4xbf16> to vector<8x4xbf16>
    %211 = vector.extract_strided_slice %208 {offsets = [0, 0], sizes = [7, 4], strides = [1, 1]} : vector<8x4xbf16> to vector<7x4xbf16>
    %212 = vector.extract_strided_slice %210 {offsets = [0, 0], sizes = [7, 4], strides = [1, 1]} : vector<8x4xbf16> to vector<7x4xbf16>
    %213 = vector.extract_strided_slice %208 {offsets = [1, 0], sizes = [7, 4], strides = [1, 1]} : vector<8x4xbf16> to vector<7x4xbf16>
    %c0_204 = arith.constant 0 : index
    %c7 = arith.constant 7 : index
    %c0_205 = arith.constant 0 : index
    %c0_206 = arith.constant 0 : index
    %214 = vector.load %arg1[%c0_204, %c7, %c0_205, %c0_206] : memref<4x8x8x4xbf16, #tpu.memory_space<vmem>>, vector<1x1x8x4xbf16>
    %215 = vector.shape_cast %214 : vector<1x1x8x4xbf16> to vector<8x4xbf16>
    %c1_207 = arith.constant 1 : index
    %c7_208 = arith.constant 7 : index
    %c0_209 = arith.constant 0 : index
    %c0_210 = arith.constant 0 : index
    %216 = vector.load %arg1[%c1_207, %c7_208, %c0_209, %c0_210] : memref<4x8x8x4xbf16, #tpu.memory_space<vmem>>, vector<1x1x8x4xbf16>
    %217 = vector.shape_cast %216 : vector<1x1x8x4xbf16> to vector<8x4xbf16>
    %218 = vector.extract_strided_slice %215 {offsets = [0, 0], sizes = [7, 4], strides = [1, 1]} : vector<8x4xbf16> to vector<7x4xbf16>
    %219 = vector.extract_strided_slice %217 {offsets = [0, 0], sizes = [7, 4], strides = [1, 1]} : vector<8x4xbf16> to vector<7x4xbf16>
    %220 = vector.extract_strided_slice %215 {offsets = [1, 0], sizes = [7, 4], strides = [1, 1]} : vector<8x4xbf16> to vector<7x4xbf16>
    %221 = tpu.concatenate %204, %205, %206, %211, %212, %213, %218, %219, %220 in 1 : vector<7x4xbf16>, vector<7x4xbf16>, vector<7x4xbf16>, vector<7x4xbf16>, vector<7x4xbf16>, vector<7x4xbf16>, vector<7x4xbf16>, vector<7x4xbf16>, vector<7x4xbf16> -> vector<7x36xbf16>
    %222 = arith.extf %221 : vector<7x36xbf16> to vector<7x36xf32>
    %cst_211 = arith.constant dense<0.000000e+00> : vector<7x32xf32>
    %223 = tpu.matmul %222, %0, %cst_211 {dimension_numbers = #tpu.dot_dimension_numbers<[1], [0], [0], [1], [0, 0, 1, 1], [], []>} : vector<7x36xf32>, vector<36x32xf32>, vector<7x32xf32> -> vector<7x32xf32>
    %224 = vector.broadcast %1 : vector<1x32xf32> to vector<7x32xf32>
    %225 = arith.addf %223, %224 : vector<7x32xf32>
    %cst_212 = arith.constant 0.000000e+00 : f32
    %226 = vector.broadcast %cst_212 : f32 to vector<7x32xf32>
    %227 = arith.maximumf %225, %226 : vector<7x32xf32>
    %228 = arith.truncf %227 : vector<7x32xf32> to vector<7x32xbf16>
    %c0_213 = arith.constant 0 : index
    %c6_214 = arith.constant 6 : index
    %c0_215 = arith.constant 0 : index
    %c0_216 = arith.constant 0 : index
    %229 = vector.load %arg11[%c0_213, %c6_214, %c0_215, %c0_216] : memref<1x7x7x32xbf16, #tpu.memory_space<vmem>>, vector<1x1x7x32xbf16>
    %230 = vector.shape_cast %229 : vector<1x1x7x32xbf16> to vector<7x32xbf16>
    %231 = vector.shape_cast %228 : vector<7x32xbf16> to vector<1x1x7x32xbf16>
    tpu.vector_store %arg11[%c0_213, %c6_214, %c0_215, %c0_216], %231 {strides = array<i32>} : memref<1x7x7x32xbf16, #tpu.memory_space<vmem>>, vector<1x1x7x32xbf16>,
    %c0_217 = arith.constant 0 : index
    %c0_218 = arith.constant 0 : index
    %c0_219 = arith.constant 0 : index
    %c0_220 = arith.constant 0 : index
    %232 = vector.load %arg11[%c0_217, %c0_218, %c0_219, %c0_220] : memref<1x7x7x32xbf16, #tpu.memory_space<vmem>>, vector<1x1x7x32xbf16>
    %233 = vector.shape_cast %232 : vector<1x1x7x32xbf16> to vector<7x32xbf16>
    %234 = vector.extract_strided_slice %233 {offsets = [0, 0], sizes = [5, 32], strides = [1, 1]} : vector<7x32xbf16> to vector<5x32xbf16>
    %235 = vector.extract_strided_slice %233 {offsets = [1, 0], sizes = [5, 32], strides = [1, 1]} : vector<7x32xbf16> to vector<5x32xbf16>
    %236 = vector.extract_strided_slice %233 {offsets = [2, 0], sizes = [5, 32], strides = [1, 1]} : vector<7x32xbf16> to vector<5x32xbf16>
    %c0_221 = arith.constant 0 : index
    %c1_222 = arith.constant 1 : index
    %c0_223 = arith.constant 0 : index
    %c0_224 = arith.constant 0 : index
    %237 = vector.load %arg11[%c0_221, %c1_222, %c0_223, %c0_224] : memref<1x7x7x32xbf16, #tpu.memory_space<vmem>>, vector<1x1x7x32xbf16>
    %238 = vector.shape_cast %237 : vector<1x1x7x32xbf16> to vector<7x32xbf16>
    %239 = vector.extract_strided_slice %238 {offsets = [0, 0], sizes = [5, 32], strides = [1, 1]} : vector<7x32xbf16> to vector<5x32xbf16>
    %240 = vector.extract_strided_slice %238 {offsets = [1, 0], sizes = [5, 32], strides = [1, 1]} : vector<7x32xbf16> to vector<5x32xbf16>
    %241 = vector.extract_strided_slice %238 {offsets = [2, 0], sizes = [5, 32], strides = [1, 1]} : vector<7x32xbf16> to vector<5x32xbf16>
    %c0_225 = arith.constant 0 : index
    %c2_226 = arith.constant 2 : index
    %c0_227 = arith.constant 0 : index
    %c0_228 = arith.constant 0 : index
    %242 = vector.load %arg11[%c0_225, %c2_226, %c0_227, %c0_228] : memref<1x7x7x32xbf16, #tpu.memory_space<vmem>>, vector<1x1x7x32xbf16>
    %243 = vector.shape_cast %242 : vector<1x1x7x32xbf16> to vector<7x32xbf16>
    %244 = vector.extract_strided_slice %243 {offsets = [0, 0], sizes = [5, 32], strides = [1, 1]} : vector<7x32xbf16> to vector<5x32xbf16>
    %245 = vector.extract_strided_slice %243 {offsets = [1, 0], sizes = [5, 32], strides = [1, 1]} : vector<7x32xbf16> to vector<5x32xbf16>
    %246 = vector.extract_strided_slice %243 {offsets = [2, 0], sizes = [5, 32], strides = [1, 1]} : vector<7x32xbf16> to vector<5x32xbf16>
    %247 = tpu.concatenate %234, %235, %236, %239, %240, %241, %244, %245, %246 in 1 : vector<5x32xbf16>, vector<5x32xbf16>, vector<5x32xbf16>, vector<5x32xbf16>, vector<5x32xbf16>, vector<5x32xbf16>, vector<5x32xbf16>, vector<5x32xbf16>, vector<5x32xbf16> -> vector<5x288xbf16>
    %cst_229 = arith.constant dense<0.000000e+00> : vector<5x32xf32>
    %248 = tpu.matmul %247, %2, %cst_229 {dimension_numbers = #tpu.dot_dimension_numbers<[1], [0], [0], [1], [0, 0, 1, 1], [], []>} : vector<5x288xbf16>, vector<288x32xbf16>, vector<5x32xf32> -> vector<5x32xf32>
    %249 = vector.broadcast %3 : vector<1x32xf32> to vector<5x32xf32>
    %250 = arith.addf %248, %249 : vector<5x32xf32>
    %cst_230 = arith.constant 0.000000e+00 : f32
    %251 = vector.broadcast %cst_230 : f32 to vector<5x32xf32>
    %252 = arith.maximumf %250, %251 : vector<5x32xf32>
    %253 = arith.truncf %252 : vector<5x32xf32> to vector<5x32xbf16>
    %c0_231 = arith.constant 0 : index
    %c0_232 = arith.constant 0 : index
    %c0_233 = arith.constant 0 : index
    %c0_234 = arith.constant 0 : index
    %254 = vector.load %arg12[%c0_231, %c0_232, %c0_233, %c0_234] : memref<1x5x5x32xbf16, #tpu.memory_space<vmem>>, vector<1x1x5x32xbf16>
    %255 = vector.shape_cast %254 : vector<1x1x5x32xbf16> to vector<5x32xbf16>
    %256 = vector.shape_cast %253 : vector<5x32xbf16> to vector<1x1x5x32xbf16>
    tpu.vector_store %arg12[%c0_231, %c0_232, %c0_233, %c0_234], %256 {strides = array<i32>} : memref<1x5x5x32xbf16, #tpu.memory_space<vmem>>, vector<1x1x5x32xbf16>,
    %c0_235 = arith.constant 0 : index
    %c1_236 = arith.constant 1 : index
    %c0_237 = arith.constant 0 : index
    %c0_238 = arith.constant 0 : index
    %257 = vector.load %arg11[%c0_235, %c1_236, %c0_237, %c0_238] : memref<1x7x7x32xbf16, #tpu.memory_space<vmem>>, vector<1x1x7x32xbf16>
    %258 = vector.shape_cast %257 : vector<1x1x7x32xbf16> to vector<7x32xbf16>
    %259 = vector.extract_strided_slice %258 {offsets = [0, 0], sizes = [5, 32], strides = [1, 1]} : vector<7x32xbf16> to vector<5x32xbf16>
    %260 = vector.extract_strided_slice %258 {offsets = [1, 0], sizes = [5, 32], strides = [1, 1]} : vector<7x32xbf16> to vector<5x32xbf16>
    %261 = vector.extract_strided_slice %258 {offsets = [2, 0], sizes = [5, 32], strides = [1, 1]} : vector<7x32xbf16> to vector<5x32xbf16>
    %c0_239 = arith.constant 0 : index
    %c2_240 = arith.constant 2 : index
    %c0_241 = arith.constant 0 : index
    %c0_242 = arith.constant 0 : index
    %262 = vector.load %arg11[%c0_239, %c2_240, %c0_241, %c0_242] : memref<1x7x7x32xbf16, #tpu.memory_space<vmem>>, vector<1x1x7x32xbf16>
    %263 = vector.shape_cast %262 : vector<1x1x7x32xbf16> to vector<7x32xbf16>
    %264 = vector.extract_strided_slice %263 {offsets = [0, 0], sizes = [5, 32], strides = [1, 1]} : vector<7x32xbf16> to vector<5x32xbf16>
    %265 = vector.extract_strided_slice %263 {offsets = [1, 0], sizes = [5, 32], strides = [1, 1]} : vector<7x32xbf16> to vector<5x32xbf16>
    %266 = vector.extract_strided_slice %263 {offsets = [2, 0], sizes = [5, 32], strides = [1, 1]} : vector<7x32xbf16> to vector<5x32xbf16>
    %c0_243 = arith.constant 0 : index
    %c3_244 = arith.constant 3 : index
    %c0_245 = arith.constant 0 : index
    %c0_246 = arith.constant 0 : index
    %267 = vector.load %arg11[%c0_243, %c3_244, %c0_245, %c0_246] : memref<1x7x7x32xbf16, #tpu.memory_space<vmem>>, vector<1x1x7x32xbf16>
    %268 = vector.shape_cast %267 : vector<1x1x7x32xbf16> to vector<7x32xbf16>
    %269 = vector.extract_strided_slice %268 {offsets = [0, 0], sizes = [5, 32], strides = [1, 1]} : vector<7x32xbf16> to vector<5x32xbf16>
    %270 = vector.extract_strided_slice %268 {offsets = [1, 0], sizes = [5, 32], strides = [1, 1]} : vector<7x32xbf16> to vector<5x32xbf16>
    %271 = vector.extract_strided_slice %268 {offsets = [2, 0], sizes = [5, 32], strides = [1, 1]} : vector<7x32xbf16> to vector<5x32xbf16>
    %272 = tpu.concatenate %259, %260, %261, %264, %265, %266, %269, %270, %271 in 1 : vector<5x32xbf16>, vector<5x32xbf16>, vector<5x32xbf16>, vector<5x32xbf16>, vector<5x32xbf16>, vector<5x32xbf16>, vector<5x32xbf16>, vector<5x32xbf16>, vector<5x32xbf16> -> vector<5x288xbf16>
    %cst_247 = arith.constant dense<0.000000e+00> : vector<5x32xf32>
    %273 = tpu.matmul %272, %2, %cst_247 {dimension_numbers = #tpu.dot_dimension_numbers<[1], [0], [0], [1], [0, 0, 1, 1], [], []>} : vector<5x288xbf16>, vector<288x32xbf16>, vector<5x32xf32> -> vector<5x32xf32>
    %274 = vector.broadcast %3 : vector<1x32xf32> to vector<5x32xf32>
    %275 = arith.addf %273, %274 : vector<5x32xf32>
    %cst_248 = arith.constant 0.000000e+00 : f32
    %276 = vector.broadcast %cst_248 : f32 to vector<5x32xf32>
    %277 = arith.maximumf %275, %276 : vector<5x32xf32>
    %278 = arith.truncf %277 : vector<5x32xf32> to vector<5x32xbf16>
    %c0_249 = arith.constant 0 : index
    %c1_250 = arith.constant 1 : index
    %c0_251 = arith.constant 0 : index
    %c0_252 = arith.constant 0 : index
    %279 = vector.load %arg12[%c0_249, %c1_250, %c0_251, %c0_252] : memref<1x5x5x32xbf16, #tpu.memory_space<vmem>>, vector<1x1x5x32xbf16>
    %280 = vector.shape_cast %279 : vector<1x1x5x32xbf16> to vector<5x32xbf16>
    %281 = vector.shape_cast %278 : vector<5x32xbf16> to vector<1x1x5x32xbf16>
    tpu.vector_store %arg12[%c0_249, %c1_250, %c0_251, %c0_252], %281 {strides = array<i32>} : memref<1x5x5x32xbf16, #tpu.memory_space<vmem>>, vector<1x1x5x32xbf16>,
    %c0_253 = arith.constant 0 : index
    %c2_254 = arith.constant 2 : index
    %c0_255 = arith.constant 0 : index
    %c0_256 = arith.constant 0 : index
    %282 = vector.load %arg11[%c0_253, %c2_254, %c0_255, %c0_256] : memref<1x7x7x32xbf16, #tpu.memory_space<vmem>>, vector<1x1x7x32xbf16>
    %283 = vector.shape_cast %282 : vector<1x1x7x32xbf16> to vector<7x32xbf16>
    %284 = vector.extract_strided_slice %283 {offsets = [0, 0], sizes = [5, 32], strides = [1, 1]} : vector<7x32xbf16> to vector<5x32xbf16>
    %285 = vector.extract_strided_slice %283 {offsets = [1, 0], sizes = [5, 32], strides = [1, 1]} : vector<7x32xbf16> to vector<5x32xbf16>
    %286 = vector.extract_strided_slice %283 {offsets = [2, 0], sizes = [5, 32], strides = [1, 1]} : vector<7x32xbf16> to vector<5x32xbf16>
    %c0_257 = arith.constant 0 : index
    %c3_258 = arith.constant 3 : index
    %c0_259 = arith.constant 0 : index
    %c0_260 = arith.constant 0 : index
    %287 = vector.load %arg11[%c0_257, %c3_258, %c0_259, %c0_260] : memref<1x7x7x32xbf16, #tpu.memory_space<vmem>>, vector<1x1x7x32xbf16>
    %288 = vector.shape_cast %287 : vector<1x1x7x32xbf16> to vector<7x32xbf16>
    %289 = vector.extract_strided_slice %288 {offsets = [0, 0], sizes = [5, 32], strides = [1, 1]} : vector<7x32xbf16> to vector<5x32xbf16>
    %290 = vector.extract_strided_slice %288 {offsets = [1, 0], sizes = [5, 32], strides = [1, 1]} : vector<7x32xbf16> to vector<5x32xbf16>
    %291 = vector.extract_strided_slice %288 {offsets = [2, 0], sizes = [5, 32], strides = [1, 1]} : vector<7x32xbf16> to vector<5x32xbf16>
    %c0_261 = arith.constant 0 : index
    %c4_262 = arith.constant 4 : index
    %c0_263 = arith.constant 0 : index
    %c0_264 = arith.constant 0 : index
    %292 = vector.load %arg11[%c0_261, %c4_262, %c0_263, %c0_264] : memref<1x7x7x32xbf16, #tpu.memory_space<vmem>>, vector<1x1x7x32xbf16>
    %293 = vector.shape_cast %292 : vector<1x1x7x32xbf16> to vector<7x32xbf16>
    %294 = vector.extract_strided_slice %293 {offsets = [0, 0], sizes = [5, 32], strides = [1, 1]} : vector<7x32xbf16> to vector<5x32xbf16>
    %295 = vector.extract_strided_slice %293 {offsets = [1, 0], sizes = [5, 32], strides = [1, 1]} : vector<7x32xbf16> to vector<5x32xbf16>
    %296 = vector.extract_strided_slice %293 {offsets = [2, 0], sizes = [5, 32], strides = [1, 1]} : vector<7x32xbf16> to vector<5x32xbf16>
    %297 = tpu.concatenate %284, %285, %286, %289, %290, %291, %294, %295, %296 in 1 : vector<5x32xbf16>, vector<5x32xbf16>, vector<5x32xbf16>, vector<5x32xbf16>, vector<5x32xbf16>, vector<5x32xbf16>, vector<5x32xbf16>, vector<5x32xbf16>, vector<5x32xbf16> -> vector<5x288xbf16>
    %cst_265 = arith.constant dense<0.000000e+00> : vector<5x32xf32>
    %298 = tpu.matmul %297, %2, %cst_265 {dimension_numbers = #tpu.dot_dimension_numbers<[1], [0], [0], [1], [0, 0, 1, 1], [], []>} : vector<5x288xbf16>, vector<288x32xbf16>, vector<5x32xf32> -> vector<5x32xf32>
    %299 = vector.broadcast %3 : vector<1x32xf32> to vector<5x32xf32>
    %300 = arith.addf %298, %299 : vector<5x32xf32>
    %cst_266 = arith.constant 0.000000e+00 : f32
    %301 = vector.broadcast %cst_266 : f32 to vector<5x32xf32>
    %302 = arith.maximumf %300, %301 : vector<5x32xf32>
    %303 = arith.truncf %302 : vector<5x32xf32> to vector<5x32xbf16>
    %c0_267 = arith.constant 0 : index
    %c2_268 = arith.constant 2 : index
    %c0_269 = arith.constant 0 : index
    %c0_270 = arith.constant 0 : index
    %304 = vector.load %arg12[%c0_267, %c2_268, %c0_269, %c0_270] : memref<1x5x5x32xbf16, #tpu.memory_space<vmem>>, vector<1x1x5x32xbf16>
    %305 = vector.shape_cast %304 : vector<1x1x5x32xbf16> to vector<5x32xbf16>
    %306 = vector.shape_cast %303 : vector<5x32xbf16> to vector<1x1x5x32xbf16>
    tpu.vector_store %arg12[%c0_267, %c2_268, %c0_269, %c0_270], %306 {strides = array<i32>} : memref<1x5x5x32xbf16, #tpu.memory_space<vmem>>, vector<1x1x5x32xbf16>,
    %c0_271 = arith.constant 0 : index
    %c3_272 = arith.constant 3 : index
    %c0_273 = arith.constant 0 : index
    %c0_274 = arith.constant 0 : index
    %307 = vector.load %arg11[%c0_271, %c3_272, %c0_273, %c0_274] : memref<1x7x7x32xbf16, #tpu.memory_space<vmem>>, vector<1x1x7x32xbf16>
    %308 = vector.shape_cast %307 : vector<1x1x7x32xbf16> to vector<7x32xbf16>
    %309 = vector.extract_strided_slice %308 {offsets = [0, 0], sizes = [5, 32], strides = [1, 1]} : vector<7x32xbf16> to vector<5x32xbf16>
    %310 = vector.extract_strided_slice %308 {offsets = [1, 0], sizes = [5, 32], strides = [1, 1]} : vector<7x32xbf16> to vector<5x32xbf16>
    %311 = vector.extract_strided_slice %308 {offsets = [2, 0], sizes = [5, 32], strides = [1, 1]} : vector<7x32xbf16> to vector<5x32xbf16>
    %c0_275 = arith.constant 0 : index
    %c4_276 = arith.constant 4 : index
    %c0_277 = arith.constant 0 : index
    %c0_278 = arith.constant 0 : index
    %312 = vector.load %arg11[%c0_275, %c4_276, %c0_277, %c0_278] : memref<1x7x7x32xbf16, #tpu.memory_space<vmem>>, vector<1x1x7x32xbf16>
    %313 = vector.shape_cast %312 : vector<1x1x7x32xbf16> to vector<7x32xbf16>
    %314 = vector.extract_strided_slice %313 {offsets = [0, 0], sizes = [5, 32], strides = [1, 1]} : vector<7x32xbf16> to vector<5x32xbf16>
    %315 = vector.extract_strided_slice %313 {offsets = [1, 0], sizes = [5, 32], strides = [1, 1]} : vector<7x32xbf16> to vector<5x32xbf16>
    %316 = vector.extract_strided_slice %313 {offsets = [2, 0], sizes = [5, 32], strides = [1, 1]} : vector<7x32xbf16> to vector<5x32xbf16>
    %c0_279 = arith.constant 0 : index
    %c5_280 = arith.constant 5 : index
    %c0_281 = arith.constant 0 : index
    %c0_282 = arith.constant 0 : index
    %317 = vector.load %arg11[%c0_279, %c5_280, %c0_281, %c0_282] : memref<1x7x7x32xbf16, #tpu.memory_space<vmem>>, vector<1x1x7x32xbf16>
    %318 = vector.shape_cast %317 : vector<1x1x7x32xbf16> to vector<7x32xbf16>
    %319 = vector.extract_strided_slice %318 {offsets = [0, 0], sizes = [5, 32], strides = [1, 1]} : vector<7x32xbf16> to vector<5x32xbf16>
    %320 = vector.extract_strided_slice %318 {offsets = [1, 0], sizes = [5, 32], strides = [1, 1]} : vector<7x32xbf16> to vector<5x32xbf16>
    %321 = vector.extract_strided_slice %318 {offsets = [2, 0], sizes = [5, 32], strides = [1, 1]} : vector<7x32xbf16> to vector<5x32xbf16>
    %322 = tpu.concatenate %309, %310, %311, %314, %315, %316, %319, %320, %321 in 1 : vector<5x32xbf16>, vector<5x32xbf16>, vector<5x32xbf16>, vector<5x32xbf16>, vector<5x32xbf16>, vector<5x32xbf16>, vector<5x32xbf16>, vector<5x32xbf16>, vector<5x32xbf16> -> vector<5x288xbf16>
    %cst_283 = arith.constant dense<0.000000e+00> : vector<5x32xf32>
    %323 = tpu.matmul %322, %2, %cst_283 {dimension_numbers = #tpu.dot_dimension_numbers<[1], [0], [0], [1], [0, 0, 1, 1], [], []>} : vector<5x288xbf16>, vector<288x32xbf16>, vector<5x32xf32> -> vector<5x32xf32>
    %324 = vector.broadcast %3 : vector<1x32xf32> to vector<5x32xf32>
    %325 = arith.addf %323, %324 : vector<5x32xf32>
    %cst_284 = arith.constant 0.000000e+00 : f32
    %326 = vector.broadcast %cst_284 : f32 to vector<5x32xf32>
    %327 = arith.maximumf %325, %326 : vector<5x32xf32>
    %328 = arith.truncf %327 : vector<5x32xf32> to vector<5x32xbf16>
    %c0_285 = arith.constant 0 : index
    %c3_286 = arith.constant 3 : index
    %c0_287 = arith.constant 0 : index
    %c0_288 = arith.constant 0 : index
    %329 = vector.load %arg12[%c0_285, %c3_286, %c0_287, %c0_288] : memref<1x5x5x32xbf16, #tpu.memory_space<vmem>>, vector<1x1x5x32xbf16>
    %330 = vector.shape_cast %329 : vector<1x1x5x32xbf16> to vector<5x32xbf16>
    %331 = vector.shape_cast %328 : vector<5x32xbf16> to vector<1x1x5x32xbf16>
    tpu.vector_store %arg12[%c0_285, %c3_286, %c0_287, %c0_288], %331 {strides = array<i32>} : memref<1x5x5x32xbf16, #tpu.memory_space<vmem>>, vector<1x1x5x32xbf16>,
    %c0_289 = arith.constant 0 : index
    %c4_290 = arith.constant 4 : index
    %c0_291 = arith.constant 0 : index
    %c0_292 = arith.constant 0 : index
    %332 = vector.load %arg11[%c0_289, %c4_290, %c0_291, %c0_292] : memref<1x7x7x32xbf16, #tpu.memory_space<vmem>>, vector<1x1x7x32xbf16>
    %333 = vector.shape_cast %332 : vector<1x1x7x32xbf16> to vector<7x32xbf16>
    %334 = vector.extract_strided_slice %333 {offsets = [0, 0], sizes = [5, 32], strides = [1, 1]} : vector<7x32xbf16> to vector<5x32xbf16>
    %335 = vector.extract_strided_slice %333 {offsets = [1, 0], sizes = [5, 32], strides = [1, 1]} : vector<7x32xbf16> to vector<5x32xbf16>
    %336 = vector.extract_strided_slice %333 {offsets = [2, 0], sizes = [5, 32], strides = [1, 1]} : vector<7x32xbf16> to vector<5x32xbf16>
    %c0_293 = arith.constant 0 : index
    %c5_294 = arith.constant 5 : index
    %c0_295 = arith.constant 0 : index
    %c0_296 = arith.constant 0 : index
    %337 = vector.load %arg11[%c0_293, %c5_294, %c0_295, %c0_296] : memref<1x7x7x32xbf16, #tpu.memory_space<vmem>>, vector<1x1x7x32xbf16>
    %338 = vector.shape_cast %337 : vector<1x1x7x32xbf16> to vector<7x32xbf16>
    %339 = vector.extract_strided_slice %338 {offsets = [0, 0], sizes = [5, 32], strides = [1, 1]} : vector<7x32xbf16> to vector<5x32xbf16>
    %340 = vector.extract_strided_slice %338 {offsets = [1, 0], sizes = [5, 32], strides = [1, 1]} : vector<7x32xbf16> to vector<5x32xbf16>
    %341 = vector.extract_strided_slice %338 {offsets = [2, 0], sizes = [5, 32], strides = [1, 1]} : vector<7x32xbf16> to vector<5x32xbf16>
    %c0_297 = arith.constant 0 : index
    %c6_298 = arith.constant 6 : index
    %c0_299 = arith.constant 0 : index
    %c0_300 = arith.constant 0 : index
    %342 = vector.load %arg11[%c0_297, %c6_298, %c0_299, %c0_300] : memref<1x7x7x32xbf16, #tpu.memory_space<vmem>>, vector<1x1x7x32xbf16>
    %343 = vector.shape_cast %342 : vector<1x1x7x32xbf16> to vector<7x32xbf16>
    %344 = vector.extract_strided_slice %343 {offsets = [0, 0], sizes = [5, 32], strides = [1, 1]} : vector<7x32xbf16> to vector<5x32xbf16>
    %345 = vector.extract_strided_slice %343 {offsets = [1, 0], sizes = [5, 32], strides = [1, 1]} : vector<7x32xbf16> to vector<5x32xbf16>
    %346 = vector.extract_strided_slice %343 {offsets = [2, 0], sizes = [5, 32], strides = [1, 1]} : vector<7x32xbf16> to vector<5x32xbf16>
    %347 = tpu.concatenate %334, %335, %336, %339, %340, %341, %344, %345, %346 in 1 : vector<5x32xbf16>, vector<5x32xbf16>, vector<5x32xbf16>, vector<5x32xbf16>, vector<5x32xbf16>, vector<5x32xbf16>, vector<5x32xbf16>, vector<5x32xbf16>, vector<5x32xbf16> -> vector<5x288xbf16>
    %cst_301 = arith.constant dense<0.000000e+00> : vector<5x32xf32>
    %348 = tpu.matmul %347, %2, %cst_301 {dimension_numbers = #tpu.dot_dimension_numbers<[1], [0], [0], [1], [0, 0, 1, 1], [], []>} : vector<5x288xbf16>, vector<288x32xbf16>, vector<5x32xf32> -> vector<5x32xf32>
    %349 = vector.broadcast %3 : vector<1x32xf32> to vector<5x32xf32>
    %350 = arith.addf %348, %349 : vector<5x32xf32>
    %cst_302 = arith.constant 0.000000e+00 : f32
    %351 = vector.broadcast %cst_302 : f32 to vector<5x32xf32>
    %352 = arith.maximumf %350, %351 : vector<5x32xf32>
    %353 = arith.truncf %352 : vector<5x32xf32> to vector<5x32xbf16>
    %c0_303 = arith.constant 0 : index
    %c4_304 = arith.constant 4 : index
    %c0_305 = arith.constant 0 : index
    %c0_306 = arith.constant 0 : index
    %354 = vector.load %arg12[%c0_303, %c4_304, %c0_305, %c0_306] : memref<1x5x5x32xbf16, #tpu.memory_space<vmem>>, vector<1x1x5x32xbf16>
    %355 = vector.shape_cast %354 : vector<1x1x5x32xbf16> to vector<5x32xbf16>
    %356 = vector.shape_cast %353 : vector<5x32xbf16> to vector<1x1x5x32xbf16>
    tpu.vector_store %arg12[%c0_303, %c4_304, %c0_305, %c0_306], %356 {strides = array<i32>} : memref<1x5x5x32xbf16, #tpu.memory_space<vmem>>, vector<1x1x5x32xbf16>,
    %c0_307 = arith.constant 0 : index
    %c0_308 = arith.constant 0 : index
    %c0_309 = arith.constant 0 : index
    %c0_310 = arith.constant 0 : index
    %357 = vector.load %arg12[%c0_307, %c0_308, %c0_309, %c0_310] : memref<1x5x5x32xbf16, #tpu.memory_space<vmem>>, vector<1x1x5x32xbf16>
    %358 = vector.shape_cast %357 : vector<1x1x5x32xbf16> to vector<5x32xbf16>
    %359 = vector.extract_strided_slice %358 {offsets = [0, 0], sizes = [3, 32], strides = [1, 1]} : vector<5x32xbf16> to vector<3x32xbf16>
    %360 = vector.extract_strided_slice %358 {offsets = [1, 0], sizes = [3, 32], strides = [1, 1]} : vector<5x32xbf16> to vector<3x32xbf16>
    %361 = vector.extract_strided_slice %358 {offsets = [2, 0], sizes = [3, 32], strides = [1, 1]} : vector<5x32xbf16> to vector<3x32xbf16>
    %c0_311 = arith.constant 0 : index
    %c1_312 = arith.constant 1 : index
    %c0_313 = arith.constant 0 : index
    %c0_314 = arith.constant 0 : index
    %362 = vector.load %arg12[%c0_311, %c1_312, %c0_313, %c0_314] : memref<1x5x5x32xbf16, #tpu.memory_space<vmem>>, vector<1x1x5x32xbf16>
    %363 = vector.shape_cast %362 : vector<1x1x5x32xbf16> to vector<5x32xbf16>
    %364 = vector.extract_strided_slice %363 {offsets = [0, 0], sizes = [3, 32], strides = [1, 1]} : vector<5x32xbf16> to vector<3x32xbf16>
    %365 = vector.extract_strided_slice %363 {offsets = [1, 0], sizes = [3, 32], strides = [1, 1]} : vector<5x32xbf16> to vector<3x32xbf16>
    %366 = vector.extract_strided_slice %363 {offsets = [2, 0], sizes = [3, 32], strides = [1, 1]} : vector<5x32xbf16> to vector<3x32xbf16>
    %c0_315 = arith.constant 0 : index
    %c2_316 = arith.constant 2 : index
    %c0_317 = arith.constant 0 : index
    %c0_318 = arith.constant 0 : index
    %367 = vector.load %arg12[%c0_315, %c2_316, %c0_317, %c0_318] : memref<1x5x5x32xbf16, #tpu.memory_space<vmem>>, vector<1x1x5x32xbf16>
    %368 = vector.shape_cast %367 : vector<1x1x5x32xbf16> to vector<5x32xbf16>
    %369 = vector.extract_strided_slice %368 {offsets = [0, 0], sizes = [3, 32], strides = [1, 1]} : vector<5x32xbf16> to vector<3x32xbf16>
    %370 = vector.extract_strided_slice %368 {offsets = [1, 0], sizes = [3, 32], strides = [1, 1]} : vector<5x32xbf16> to vector<3x32xbf16>
    %371 = vector.extract_strided_slice %368 {offsets = [2, 0], sizes = [3, 32], strides = [1, 1]} : vector<5x32xbf16> to vector<3x32xbf16>
    %372 = tpu.concatenate %359, %360, %361, %364, %365, %366, %369, %370, %371 in 1 : vector<3x32xbf16>, vector<3x32xbf16>, vector<3x32xbf16>, vector<3x32xbf16>, vector<3x32xbf16>, vector<3x32xbf16>, vector<3x32xbf16>, vector<3x32xbf16>, vector<3x32xbf16> -> vector<3x288xbf16>
    %cst_319 = arith.constant dense<0.000000e+00> : vector<3x32xf32>
    %373 = tpu.matmul %372, %4, %cst_319 {dimension_numbers = #tpu.dot_dimension_numbers<[1], [0], [0], [1], [0, 0, 1, 1], [], []>} : vector<3x288xbf16>, vector<288x32xbf16>, vector<3x32xf32> -> vector<3x32xf32>
    %374 = vector.broadcast %5 : vector<1x32xf32> to vector<3x32xf32>
    %375 = arith.addf %373, %374 : vector<3x32xf32>
    %cst_320 = arith.constant 0.000000e+00 : f32
    %376 = vector.broadcast %cst_320 : f32 to vector<3x32xf32>
    %377 = arith.maximumf %375, %376 : vector<3x32xf32>
    %378 = arith.truncf %377 : vector<3x32xf32> to vector<3x32xbf16>
    %c0_321 = arith.constant 0 : index
    %c0_322 = arith.constant 0 : index
    %c0_323 = arith.constant 0 : index
    %c0_324 = arith.constant 0 : index
    %379 = vector.load %arg13[%c0_321, %c0_322, %c0_323, %c0_324] : memref<1x3x3x32xbf16, #tpu.memory_space<vmem>>, vector<1x1x3x32xbf16>
    %380 = vector.shape_cast %379 : vector<1x1x3x32xbf16> to vector<3x32xbf16>
    %381 = vector.shape_cast %378 : vector<3x32xbf16> to vector<1x1x3x32xbf16>
    tpu.vector_store %arg13[%c0_321, %c0_322, %c0_323, %c0_324], %381 {strides = array<i32>} : memref<1x3x3x32xbf16, #tpu.memory_space<vmem>>, vector<1x1x3x32xbf16>,
    %c0_325 = arith.constant 0 : index
    %c1_326 = arith.constant 1 : index
    %c0_327 = arith.constant 0 : index
    %c0_328 = arith.constant 0 : index
    %382 = vector.load %arg12[%c0_325, %c1_326, %c0_327, %c0_328] : memref<1x5x5x32xbf16, #tpu.memory_space<vmem>>, vector<1x1x5x32xbf16>
    %383 = vector.shape_cast %382 : vector<1x1x5x32xbf16> to vector<5x32xbf16>
    %384 = vector.extract_strided_slice %383 {offsets = [0, 0], sizes = [3, 32], strides = [1, 1]} : vector<5x32xbf16> to vector<3x32xbf16>
    %385 = vector.extract_strided_slice %383 {offsets = [1, 0], sizes = [3, 32], strides = [1, 1]} : vector<5x32xbf16> to vector<3x32xbf16>
    %386 = vector.extract_strided_slice %383 {offsets = [2, 0], sizes = [3, 32], strides = [1, 1]} : vector<5x32xbf16> to vector<3x32xbf16>
    %c0_329 = arith.constant 0 : index
    %c2_330 = arith.constant 2 : index
    %c0_331 = arith.constant 0 : index
    %c0_332 = arith.constant 0 : index
    %387 = vector.load %arg12[%c0_329, %c2_330, %c0_331, %c0_332] : memref<1x5x5x32xbf16, #tpu.memory_space<vmem>>, vector<1x1x5x32xbf16>
    %388 = vector.shape_cast %387 : vector<1x1x5x32xbf16> to vector<5x32xbf16>
    %389 = vector.extract_strided_slice %388 {offsets = [0, 0], sizes = [3, 32], strides = [1, 1]} : vector<5x32xbf16> to vector<3x32xbf16>
    %390 = vector.extract_strided_slice %388 {offsets = [1, 0], sizes = [3, 32], strides = [1, 1]} : vector<5x32xbf16> to vector<3x32xbf16>
    %391 = vector.extract_strided_slice %388 {offsets = [2, 0], sizes = [3, 32], strides = [1, 1]} : vector<5x32xbf16> to vector<3x32xbf16>
    %c0_333 = arith.constant 0 : index
    %c3_334 = arith.constant 3 : index
    %c0_335 = arith.constant 0 : index
    %c0_336 = arith.constant 0 : index
    %392 = vector.load %arg12[%c0_333, %c3_334, %c0_335, %c0_336] : memref<1x5x5x32xbf16, #tpu.memory_space<vmem>>, vector<1x1x5x32xbf16>
    %393 = vector.shape_cast %392 : vector<1x1x5x32xbf16> to vector<5x32xbf16>
    %394 = vector.extract_strided_slice %393 {offsets = [0, 0], sizes = [3, 32], strides = [1, 1]} : vector<5x32xbf16> to vector<3x32xbf16>
    %395 = vector.extract_strided_slice %393 {offsets = [1, 0], sizes = [3, 32], strides = [1, 1]} : vector<5x32xbf16> to vector<3x32xbf16>
    %396 = vector.extract_strided_slice %393 {offsets = [2, 0], sizes = [3, 32], strides = [1, 1]} : vector<5x32xbf16> to vector<3x32xbf16>
    %397 = tpu.concatenate %384, %385, %386, %389, %390, %391, %394, %395, %396 in 1 : vector<3x32xbf16>, vector<3x32xbf16>, vector<3x32xbf16>, vector<3x32xbf16>, vector<3x32xbf16>, vector<3x32xbf16>, vector<3x32xbf16>, vector<3x32xbf16>, vector<3x32xbf16> -> vector<3x288xbf16>
    %cst_337 = arith.constant dense<0.000000e+00> : vector<3x32xf32>
    %398 = tpu.matmul %397, %4, %cst_337 {dimension_numbers = #tpu.dot_dimension_numbers<[1], [0], [0], [1], [0, 0, 1, 1], [], []>} : vector<3x288xbf16>, vector<288x32xbf16>, vector<3x32xf32> -> vector<3x32xf32>
    %399 = vector.broadcast %5 : vector<1x32xf32> to vector<3x32xf32>
    %400 = arith.addf %398, %399 : vector<3x32xf32>
    %cst_338 = arith.constant 0.000000e+00 : f32
    %401 = vector.broadcast %cst_338 : f32 to vector<3x32xf32>
    %402 = arith.maximumf %400, %401 : vector<3x32xf32>
    %403 = arith.truncf %402 : vector<3x32xf32> to vector<3x32xbf16>
    %c0_339 = arith.constant 0 : index
    %c1_340 = arith.constant 1 : index
    %c0_341 = arith.constant 0 : index
    %c0_342 = arith.constant 0 : index
    %404 = vector.load %arg13[%c0_339, %c1_340, %c0_341, %c0_342] : memref<1x3x3x32xbf16, #tpu.memory_space<vmem>>, vector<1x1x3x32xbf16>
    %405 = vector.shape_cast %404 : vector<1x1x3x32xbf16> to vector<3x32xbf16>
    %406 = vector.shape_cast %403 : vector<3x32xbf16> to vector<1x1x3x32xbf16>
    tpu.vector_store %arg13[%c0_339, %c1_340, %c0_341, %c0_342], %406 {strides = array<i32>} : memref<1x3x3x32xbf16, #tpu.memory_space<vmem>>, vector<1x1x3x32xbf16>,
    %c0_343 = arith.constant 0 : index
    %c2_344 = arith.constant 2 : index
    %c0_345 = arith.constant 0 : index
    %c0_346 = arith.constant 0 : index
    %407 = vector.load %arg12[%c0_343, %c2_344, %c0_345, %c0_346] : memref<1x5x5x32xbf16, #tpu.memory_space<vmem>>, vector<1x1x5x32xbf16>
    %408 = vector.shape_cast %407 : vector<1x1x5x32xbf16> to vector<5x32xbf16>
    %409 = vector.extract_strided_slice %408 {offsets = [0, 0], sizes = [3, 32], strides = [1, 1]} : vector<5x32xbf16> to vector<3x32xbf16>
    %410 = vector.extract_strided_slice %408 {offsets = [1, 0], sizes = [3, 32], strides = [1, 1]} : vector<5x32xbf16> to vector<3x32xbf16>
    %411 = vector.extract_strided_slice %408 {offsets = [2, 0], sizes = [3, 32], strides = [1, 1]} : vector<5x32xbf16> to vector<3x32xbf16>
    %c0_347 = arith.constant 0 : index
    %c3_348 = arith.constant 3 : index
    %c0_349 = arith.constant 0 : index
    %c0_350 = arith.constant 0 : index
    %412 = vector.load %arg12[%c0_347, %c3_348, %c0_349, %c0_350] : memref<1x5x5x32xbf16, #tpu.memory_space<vmem>>, vector<1x1x5x32xbf16>
    %413 = vector.shape_cast %412 : vector<1x1x5x32xbf16> to vector<5x32xbf16>
    %414 = vector.extract_strided_slice %413 {offsets = [0, 0], sizes = [3, 32], strides = [1, 1]} : vector<5x32xbf16> to vector<3x32xbf16>
    %415 = vector.extract_strided_slice %413 {offsets = [1, 0], sizes = [3, 32], strides = [1, 1]} : vector<5x32xbf16> to vector<3x32xbf16>
    %416 = vector.extract_strided_slice %413 {offsets = [2, 0], sizes = [3, 32], strides = [1, 1]} : vector<5x32xbf16> to vector<3x32xbf16>
    %c0_351 = arith.constant 0 : index
    %c4_352 = arith.constant 4 : index
    %c0_353 = arith.constant 0 : index
    %c0_354 = arith.constant 0 : index
    %417 = vector.load %arg12[%c0_351, %c4_352, %c0_353, %c0_354] : memref<1x5x5x32xbf16, #tpu.memory_space<vmem>>, vector<1x1x5x32xbf16>
    %418 = vector.shape_cast %417 : vector<1x1x5x32xbf16> to vector<5x32xbf16>
    %419 = vector.extract_strided_slice %418 {offsets = [0, 0], sizes = [3, 32], strides = [1, 1]} : vector<5x32xbf16> to vector<3x32xbf16>
    %420 = vector.extract_strided_slice %418 {offsets = [1, 0], sizes = [3, 32], strides = [1, 1]} : vector<5x32xbf16> to vector<3x32xbf16>
    %421 = vector.extract_strided_slice %418 {offsets = [2, 0], sizes = [3, 32], strides = [1, 1]} : vector<5x32xbf16> to vector<3x32xbf16>
    %422 = tpu.concatenate %409, %410, %411, %414, %415, %416, %419, %420, %421 in 1 : vector<3x32xbf16>, vector<3x32xbf16>, vector<3x32xbf16>, vector<3x32xbf16>, vector<3x32xbf16>, vector<3x32xbf16>, vector<3x32xbf16>, vector<3x32xbf16>, vector<3x32xbf16> -> vector<3x288xbf16>
    %cst_355 = arith.constant dense<0.000000e+00> : vector<3x32xf32>
    %423 = tpu.matmul %422, %4, %cst_355 {dimension_numbers = #tpu.dot_dimension_numbers<[1], [0], [0], [1], [0, 0, 1, 1], [], []>} : vector<3x288xbf16>, vector<288x32xbf16>, vector<3x32xf32> -> vector<3x32xf32>
    %424 = vector.broadcast %5 : vector<1x32xf32> to vector<3x32xf32>
    %425 = arith.addf %423, %424 : vector<3x32xf32>
    %cst_356 = arith.constant 0.000000e+00 : f32
    %426 = vector.broadcast %cst_356 : f32 to vector<3x32xf32>
    %427 = arith.maximumf %425, %426 : vector<3x32xf32>
    %428 = arith.truncf %427 : vector<3x32xf32> to vector<3x32xbf16>
    %c0_357 = arith.constant 0 : index
    %c2_358 = arith.constant 2 : index
    %c0_359 = arith.constant 0 : index
    %c0_360 = arith.constant 0 : index
    %429 = vector.load %arg13[%c0_357, %c2_358, %c0_359, %c0_360] : memref<1x3x3x32xbf16, #tpu.memory_space<vmem>>, vector<1x1x3x32xbf16>
    %430 = vector.shape_cast %429 : vector<1x1x3x32xbf16> to vector<3x32xbf16>
    %431 = vector.shape_cast %428 : vector<3x32xbf16> to vector<1x1x3x32xbf16>
    tpu.vector_store %arg13[%c0_357, %c2_358, %c0_359, %c0_360], %431 {strides = array<i32>} : memref<1x3x3x32xbf16, #tpu.memory_space<vmem>>, vector<1x1x3x32xbf16>,
    %c0_361 = arith.constant 0 : index
    %c0_362 = arith.constant 0 : index
    %c0_363 = arith.constant 0 : index
    %c0_364 = arith.constant 0 : index
    %432 = vector.load %arg13[%c0_361, %c0_362, %c0_363, %c0_364] : memref<1x3x3x32xbf16, #tpu.memory_space<vmem>>, vector<1x1x3x32xbf16>
    %433 = vector.shape_cast %432 : vector<1x1x3x32xbf16> to vector<3x32xbf16>
    %434 = vector.extract_strided_slice %433 {offsets = [0, 0], sizes = [1, 32], strides = [1, 1]} : vector<3x32xbf16> to vector<1x32xbf16>
    %435 = vector.extract_strided_slice %433 {offsets = [1, 0], sizes = [1, 32], strides = [1, 1]} : vector<3x32xbf16> to vector<1x32xbf16>
    %436 = vector.extract_strided_slice %433 {offsets = [2, 0], sizes = [1, 32], strides = [1, 1]} : vector<3x32xbf16> to vector<1x32xbf16>
    %c0_365 = arith.constant 0 : index
    %c1_366 = arith.constant 1 : index
    %c0_367 = arith.constant 0 : index
    %c0_368 = arith.constant 0 : index
    %437 = vector.load %arg13[%c0_365, %c1_366, %c0_367, %c0_368] : memref<1x3x3x32xbf16, #tpu.memory_space<vmem>>, vector<1x1x3x32xbf16>
    %438 = vector.shape_cast %437 : vector<1x1x3x32xbf16> to vector<3x32xbf16>
    %439 = vector.extract_strided_slice %438 {offsets = [0, 0], sizes = [1, 32], strides = [1, 1]} : vector<3x32xbf16> to vector<1x32xbf16>
    %440 = vector.extract_strided_slice %438 {offsets = [1, 0], sizes = [1, 32], strides = [1, 1]} : vector<3x32xbf16> to vector<1x32xbf16>
    %441 = vector.extract_strided_slice %438 {offsets = [2, 0], sizes = [1, 32], strides = [1, 1]} : vector<3x32xbf16> to vector<1x32xbf16>
    %c0_369 = arith.constant 0 : index
    %c2_370 = arith.constant 2 : index
    %c0_371 = arith.constant 0 : index
    %c0_372 = arith.constant 0 : index
    %442 = vector.load %arg13[%c0_369, %c2_370, %c0_371, %c0_372] : memref<1x3x3x32xbf16, #tpu.memory_space<vmem>>, vector<1x1x3x32xbf16>
    %443 = vector.shape_cast %442 : vector<1x1x3x32xbf16> to vector<3x32xbf16>
    %444 = vector.extract_strided_slice %443 {offsets = [0, 0], sizes = [1, 32], strides = [1, 1]} : vector<3x32xbf16> to vector<1x32xbf16>
    %445 = vector.extract_strided_slice %443 {offsets = [1, 0], sizes = [1, 32], strides = [1, 1]} : vector<3x32xbf16> to vector<1x32xbf16>
    %446 = vector.extract_strided_slice %443 {offsets = [2, 0], sizes = [1, 32], strides = [1, 1]} : vector<3x32xbf16> to vector<1x32xbf16>
    %447 = tpu.concatenate %434, %435, %436, %439, %440, %441, %444, %445, %446 in 1 : vector<1x32xbf16>, vector<1x32xbf16>, vector<1x32xbf16>, vector<1x32xbf16>, vector<1x32xbf16>, vector<1x32xbf16>, vector<1x32xbf16>, vector<1x32xbf16>, vector<1x32xbf16> -> vector<1x288xbf16>
    %cst_373 = arith.constant dense<0.000000e+00> : vector<1x32xf32>
    %448 = tpu.matmul %447, %6, %cst_373 {dimension_numbers = #tpu.dot_dimension_numbers<[1], [0], [0], [1], [0, 0, 1, 1], [], []>} : vector<1x288xbf16>, vector<288x32xbf16>, vector<1x32xf32> -> vector<1x32xf32>
    %449 = arith.addf %448, %7 : vector<1x32xf32>
    %cst_374 = arith.constant 0.000000e+00 : f32
    %450 = vector.broadcast %cst_374 : f32 to vector<1x32xf32>
    %451 = arith.maximumf %449, %450 : vector<1x32xf32>
    %c0_375 = arith.constant 0 : index
    %c0_376 = arith.constant 0 : index
    %c0_377 = arith.constant 0 : index
    %452 = vector.load %arg10[%c0_375, %c0_376, %c0_377] : memref<1x1x32xf32, #tpu.memory_space<vmem>>, vector<1x1x32xf32>
    %453 = vector.shape_cast %452 : vector<1x1x32xf32> to vector<1x32xf32>
    %454 = vector.shape_cast %451 : vector<1x32xf32> to vector<1x1x32xf32>
    tpu.vector_store %arg10[%c0_375, %c0_376, %c0_377], %454 {strides = array<i32>} : memref<1x1x32xf32, #tpu.memory_space<vmem>>, vector<1x1x32xf32>,
    return
  }
  func.func @transform_0(%arg0: i32) -> (i32, i32, i32, i32) {
    %c0_i32 = arith.constant 0 : i32
    %c0_i32_0 = arith.constant 0 : i32
    %c0_i32_1 = arith.constant 0 : i32
    %c0_i32_2 = arith.constant 0 : i32
    return %arg0, %c0_i32, %c0_i32_0, %c0_i32_1 : i32, i32, i32, i32
  }
  func.func @transform_1(%arg0: i32) -> (i32, i32) {
    %c0_i32 = arith.constant 0 : i32
    %c0_i32_0 = arith.constant 0 : i32
    %c0_i32_1 = arith.constant 0 : i32
    return %c0_i32, %c0_i32_0 : i32, i32
  }
  func.func @transform_2(%arg0: i32) -> (i32, i32) {
    %c0_i32 = arith.constant 0 : i32
    %c0_i32_0 = arith.constant 0 : i32
    %c0_i32_1 = arith.constant 0 : i32
    return %c0_i32, %c0_i32_0 : i32, i32
  }
  func.func @transform_3(%arg0: i32) -> (i32, i32) {
    %c0_i32 = arith.constant 0 : i32
    %c0_i32_0 = arith.constant 0 : i32
    %c0_i32_1 = arith.constant 0 : i32
    return %c0_i32, %c0_i32_0 : i32, i32
  }
  func.func @transform_4(%arg0: i32) -> (i32, i32) {
    %c0_i32 = arith.constant 0 : i32
    %c0_i32_0 = arith.constant 0 : i32
    %c0_i32_1 = arith.constant 0 : i32
    return %c0_i32, %c0_i32_0 : i32, i32
  }
  func.func @transform_5(%arg0: i32) -> (i32, i32) {
    %c0_i32 = arith.constant 0 : i32
    %c0_i32_0 = arith.constant 0 : i32
    %c0_i32_1 = arith.constant 0 : i32
    return %c0_i32, %c0_i32_0 : i32, i32
  }
  func.func @transform_6(%arg0: i32) -> (i32, i32) {
    %c0_i32 = arith.constant 0 : i32
    %c0_i32_0 = arith.constant 0 : i32
    %c0_i32_1 = arith.constant 0 : i32
    return %c0_i32, %c0_i32_0 : i32, i32
  }
  func.func @transform_7(%arg0: i32) -> (i32, i32) {
    %c0_i32 = arith.constant 0 : i32
    %c0_i32_0 = arith.constant 0 : i32
    %c0_i32_1 = arith.constant 0 : i32
    return %c0_i32, %c0_i32_0 : i32, i32
  }
  func.func @transform_8(%arg0: i32) -> (i32, i32) {
    %c0_i32 = arith.constant 0 : i32
    %c0_i32_0 = arith.constant 0 : i32
    %c0_i32_1 = arith.constant 0 : i32
    return %c0_i32, %c0_i32_0 : i32, i32
  }
  func.func @transform_9(%arg0: i32) -> (i32, i32, i32) {
    %c0_i32 = arith.constant 0 : i32
    %c0_i32_0 = arith.constant 0 : i32
    %c0_i32_1 = arith.constant 0 : i32
    return %arg0, %c0_i32, %c0_i32_0 : i32, i32, i32
  }
}

</mosaic_0001>

<llo_original>
// kernel: encoder_forward.1
$region0: #{encoder_forward.1}
  #allocation0 [shape = 'u32[]', space=smem, size = 0x4, offset = 0x4, fixed_abs, tag = 'smem constant byte address 0x4 - core index']
  #allocation1 [shape = 'u32[144,128]{1,0:T(1,128)}', space=vmem, size = 0x12000, scoped, tag = 'internal scratch']
  #allocation2 [shape = 'bf16[1,7,7,32]{3,2,1,0:T(8,128)(2,1)}', space=vmem, size = 0x3800, scoped, tag = 'scratch operand']
  #allocation3 [shape = 'bf16[1,5,5,32]{3,2,1,0:T(8,128)(2,1)}', space=vmem, size = 0x2800, scoped, tag = 'scratch operand']
  #allocation4 [shape = 'bf16[1,3,3,32]{3,2,1,0:T(4,128)(2,1)}', space=vmem, size = 0xc00, scoped, tag = 'scratch operand']
  %s0 = inlined_call_operand.vmem [shape: bf16[8,8,8,4], index: 0, kind: input, shape index: {}]
  %s1 = inlined_call_operand.vmem [shape: f32[36,32], index: 1, kind: input, shape index: {}]
  %s2 = inlined_call_operand.vmem [shape: f32[1,32], index: 2, kind: input, shape index: {}]
  %s3 = inlined_call_operand.vmem [shape: bf16[288,32], index: 3, kind: input, shape index: {}]
  %s4 = inlined_call_operand.vmem [shape: f32[1,32], index: 4, kind: input, shape index: {}]
  %s5 = inlined_call_operand.vmem [shape: bf16[288,32], index: 5, kind: input, shape index: {}]
  %s6 = inlined_call_operand.vmem [shape: f32[1,32], index: 6, kind: input, shape index: {}]
  %s7 = inlined_call_operand.vmem [shape: bf16[288,32], index: 7, kind: input, shape index: {}]
  %s8 = inlined_call_operand.vmem [shape: f32[1,32], index: 8, kind: input, shape index: {}]
  %s9 = inlined_call_operand.hbm [shape: f32[2,1,32], index: 9, kind: output, shape index: {}]
  %s10 = sld [smem:[#allocation0]]
  $region69: #{encoder_forward.1} parent=0
    _
  %s12 = ssub.s32 1, %s10
  %s13 = scalar_select 0, %s12, %s10
  $region1: #{encoder_forward.1} parent=0
    #allocation5 [shape = 'u8[1024]{0}', space=vmem, size = 0x400, scoped, tag = 'output window, operand 0']
    #allocation6 [shape = 's32[2]{0}', space=sflag, size = 0x8, scoped, tag = 'scoped memory for encoder_forward.1']
    %14 = vsyncpa [#allocation6], 0
    %s15 = scalar_lea.sflag [#allocation6], 1
    %16 = vsyncpa %s15, 0
    loop: start=0, step=1, limit=4
    $region2: #{encoder_forward.1} parent=1 // loop_pre_header
      _
    $region3: #{encoder_forward.1} parent=1 // loop_header
      %s18 = sphi 0, %s22
      %p19 = scmp.ge.s32.totalorder %s18, 4
      %s28 = sphi 0, %s30
      %s31 = sphi 0, %s28
      %s32 = sphi 0, %s31
      %s48 = sphi 0, %s32
      %s52 = sphi 0, %s52
      %s54 = sphi 0, %s52
      %s55 = sphi 0, %s54
      %s69 = sphi 0, %s55
      %s73 = sphi 0, %s73
      %s75 = sphi 0, %s73
      %s76 = sphi 0, %s75
      %s90 = sphi 0, %s76
      %s94 = sphi 0, %s94
      %s96 = sphi 0, %s94
      %s97 = sphi 0, %s96
      %s111 = sphi 0, %s97
      %s115 = sphi 0, %s115
      %s117 = sphi 0, %s115
      %s118 = sphi 0, %s117
      %s132 = sphi 0, %s118
      %s136 = sphi 0, %s136
      %s138 = sphi 0, %s136
      %s139 = sphi 0, %s138
      %s153 = sphi 0, %s139
      %s157 = sphi 0, %s157
      %s159 = sphi 0, %s157
      %s160 = sphi 0, %s159
      %s174 = sphi 0, %s160
      %s178 = sphi 0, %s178
      %s180 = sphi 0, %s178
      %s181 = sphi 0, %s180
      %s195 = sphi 0, %s181
      %s199 = sphi 0, %s199
      %s201 = sphi 0, %s199
      %s202 = sphi 0, %s201
      %s216 = sphi 0, %s202
      %s222 = sphi 0, %s224
      %s225 = sphi 0, %s222
      %s226 = sphi 0, %s225
      %s242 = sphi 0, %s226
    $region4: #{encoder_forward.1} parent=1 // loop_header_branch
      %21 = sbr.rel (%p19) target = $region8
    $region5: #{encoder_forward.1} parent=1 // loop_body
      %s23 = ssub.s32 %s18, 1
      %s24 = ssub.s32 %s18, 2
      %s25 = sadd.s32 %s18, 1
      %s26 = ssub.s32 %s18, %s25
      %p27 = scmp.eq.s32.totalorder %s26, 0
      %s29 = sadd.s32 %s28, 1
      %s30 = scalar_select %p27, %s28, %s29
      %p33 = pneg %p27
      %p34 = scmp.eq.s32.totalorder %s18, 1
      %p35 = por %p33, %p34
      %p36 = scmp.ne.s32.totalorder %s28, %s31
      %p37 = scmp.eq.s32.totalorder %s18, 0
      %p38 = por %p36, %p37
      %p39 = scmp.ne.s32.totalorder %s28, %s31
      %p40 = scmp.eq.s32.totalorder %s23, 1
      %p41 = por %p39, %p40
      %p42 = scmp.ne.s32.totalorder %s31, %s32
      %p43 = scmp.eq.s32.totalorder %s23, 0
      %p44 = por %p42, %p43
      %p45 = scmp.ne.s32.totalorder %s31, %s32
      %p46 = scmp.eq.s32.totalorder %s24, 1
      %p47 = por %p45, %p46
      %p49 = scmp.ne.s32.totalorder %s32, %s48
      %p50 = scmp.eq.s32.totalorder %s24, 0
      %p51 = por %p49, %p50
      %s53 = sadd.s32 %s52, 1
      %p56 = scmp.eq.s32.totalorder %s18, 1
      %p57 = scmp.ne.s32.totalorder %s52, %s54
      %p58 = scmp.eq.s32.totalorder %s18, 0
      %p59 = por %p57, %p58
      %p60 = scmp.ne.s32.totalorder %s52, %s54
      %p61 = scmp.eq.s32.totalorder %s23, 1
      %p62 = por %p60, %p61
      %p63 = scmp.ne.s32.totalorder %s54, %s55
      %p64 = scmp.eq.s32.totalorder %s23, 0
      %p65 = por %p63, %p64
      %p66 = scmp.ne.s32.totalorder %s54, %s55
      %p67 = scmp.eq.s32.totalorder %s24, 1
      %p68 = por %p66, %p67
      %p70 = scmp.ne.s32.totalorder %s55, %s69
      %p71 = scmp.eq.s32.totalorder %s24, 0
      %p72 = por %p70, %p71
      %s74 = sadd.s32 %s73, 1
      %p77 = scmp.eq.s32.totalorder %s18, 1
      %p78 = scmp.ne.s32.totalorder %s73, %s75
      %p79 = scmp.eq.s32.totalorder %s18, 0
      %p80 = por %p78, %p79
      %p81 = scmp.ne.s32.totalorder %s73, %s75
      %p82 = scmp.eq.s32.totalorder %s23, 1
      %p83 = por %p81, %p82
      %p84 = scmp.ne.s32.totalorder %s75, %s76
      %p85 = scmp.eq.s32.totalorder %s23, 0
      %p86 = por %p84, %p85
      %p87 = scmp.ne.s32.totalorder %s75, %s76
      %p88 = scmp.eq.s32.totalorder %s24, 1
      %p89 = por %p87, %p88
      %p91 = scmp.ne.s32.totalorder %s76, %s90
      %p92 = scmp.eq.s32.totalorder %s24, 0
      %p93 = por %p91, %p92
      %s95 = sadd.s32 %s94, 1
      %p98 = scmp.eq.s32.totalorder %s18, 1
      %p99 = scmp.ne.s32.totalorder %s94, %s96
      %p100 = scmp.eq.s32.totalorder %s18, 0
      %p101 = por %p99, %p100
      %p102 = scmp.ne.s32.totalorder %s94, %s96
      %p103 = scmp.eq.s32.totalorder %s23, 1
      %p104 = por %p102, %p103
      %p105 = scmp.ne.s32.totalorder %s96, %s97
      %p106 = scmp.eq.s32.totalorder %s23, 0
      %p107 = por %p105, %p106
      %p108 = scmp.ne.s32.totalorder %s96, %s97
      %p109 = scmp.eq.s32.totalorder %s24, 1
      %p110 = por %p108, %p109
      %p112 = scmp.ne.s32.totalorder %s97, %s111
      %p113 = scmp.eq.s32.totalorder %s24, 0
      %p114 = por %p112, %p113
      %s116 = sadd.s32 %s115, 1
      %p119 = scmp.eq.s32.totalorder %s18, 1
      %p120 = scmp.ne.s32.totalorder %s115, %s117
      %p121 = scmp.eq.s32.totalorder %s18, 0
      %p122 = por %p120, %p121
      %p123 = scmp.ne.s32.totalorder %s115, %s117
      %p124 = scmp.eq.s32.totalorder %s23, 1
      %p125 = por %p123, %p124
      %p126 = scmp.ne.s32.totalorder %s117, %s118
      %p127 = scmp.eq.s32.totalorder %s23, 0
      %p128 = por %p126, %p127
      %p129 = scmp.ne.s32.totalorder %s117, %s118
      %p130 = scmp.eq.s32.totalorder %s24, 1
      %p131 = por %p129, %p130
      %p133 = scmp.ne.s32.totalorder %s118, %s132
      %p134 = scmp.eq.s32.totalorder %s24, 0
      %p135 = por %p133, %p134
      %s137 = sadd.s32 %s136, 1
      %p140 = scmp.eq.s32.totalorder %s18, 1
      %p141 = scmp.ne.s32.totalorder %s136, %s138
      %p142 = scmp.eq.s32.totalorder %s18, 0
      %p143 = por %p141, %p142
      %p144 = scmp.ne.s32.totalorder %s136, %s138
      %p145 = scmp.eq.s32.totalorder %s23, 1
      %p146 = por %p144, %p145
      %p147 = scmp.ne.s32.totalorder %s138, %s139
      %p148 = scmp.eq.s32.totalorder %s23, 0
      %p149 = por %p147, %p148
      %p150 = scmp.ne.s32.totalorder %s138, %s139
      %p151 = scmp.eq.s32.totalorder %s24, 1
      %p152 = por %p150, %p151
      %p154 = scmp.ne.s32.totalorder %s139, %s153
      %p155 = scmp.eq.s32.totalorder %s24, 0
      %p156 = por %p154, %p155
      %s158 = sadd.s32 %s157, 1
      %p161 = scmp.eq.s32.totalorder %s18, 1
      %p162 = scmp.ne.s32.totalorder %s157, %s159
      %p163 = scmp.eq.s32.totalorder %s18, 0
      %p164 = por %p162, %p163
      %p165 = scmp.ne.s32.totalorder %s157, %s159
      %p166 = scmp.eq.s32.totalorder %s23, 1
      %p167 = por %p165, %p166
      %p168 = scmp.ne.s32.totalorder %s159, %s160
      %p169 = scmp.eq.s32.totalorder %s23, 0
      %p170 = por %p168, %p169
      %p171 = scmp.ne.s32.totalorder %s159, %s160
      %p172 = scmp.eq.s32.totalorder %s24, 1
      %p173 = por %p171, %p172
      %p175 = scmp.ne.s32.totalorder %s160, %s174
      %p176 = scmp.eq.s32.totalorder %s24, 0
      %p177 = por %p175, %p176
      %s179 = sadd.s32 %s178, 1
      %p182 = scmp.eq.s32.totalorder %s18, 1
      %p183 = scmp.ne.s32.totalorder %s178, %s180
      %p184 = scmp.eq.s32.totalorder %s18, 0
      %p185 = por %p183, %p184
      %p186 = scmp.ne.s32.totalorder %s178, %s180
      %p187 = scmp.eq.s32.totalorder %s23, 1
      %p188 = por %p186, %p187
      %p189 = scmp.ne.s32.totalorder %s180, %s181
      %p190 = scmp.eq.s32.totalorder %s23, 0
      %p191 = por %p189, %p190
      %p192 = scmp.ne.s32.totalorder %s180, %s181
      %p193 = scmp.eq.s32.totalorder %s24, 1
      %p194 = por %p192, %p193
      %p196 = scmp.ne.s32.totalorder %s181, %s195
      %p197 = scmp.eq.s32.totalorder %s24, 0
      %p198 = por %p196, %p197
      %s200 = sadd.s32 %s199, 1
      %p203 = scmp.eq.s32.totalorder %s18, 1
      %p204 = scmp.ne.s32.totalorder %s199, %s201
      %p205 = scmp.eq.s32.totalorder %s18, 0
      %p206 = por %p204, %p205
      %p207 = scmp.ne.s32.totalorder %s199, %s201
      %p208 = scmp.eq.s32.totalorder %s23, 1
      %p209 = por %p207, %p208
      %p210 = scmp.ne.s32.totalorder %s201, %s202
      %p211 = scmp.eq.s32.totalorder %s23, 0
      %p212 = por %p210, %p211
      %p213 = scmp.ne.s32.totalorder %s201, %s202
      %p214 = scmp.eq.s32.totalorder %s24, 1
      %p215 = por %p213, %p214
      %p217 = scmp.ne.s32.totalorder %s202, %s216
      %p218 = scmp.eq.s32.totalorder %s24, 0
      %p219 = por %p217, %p218
      %s220 = ssub.s32 %s18, %s25
      %p221 = scmp.eq.s32.totalorder %s220, 0
      %s223 = sadd.s32 %s222, 1
      %s224 = scalar_select %p221, %s222, %s223
      %p227 = pneg %p221
      %p228 = scmp.eq.s32.totalorder %s18, 1
      %p229 = por %p227, %p228
      %p230 = scmp.ne.s32.totalorder %s222, %s225
      %p231 = scmp.eq.s32.totalorder %s18, 0
      %p232 = por %p230, %p231
      %p233 = scmp.ne.s32.totalorder %s222, %s225
      %p234 = scmp.eq.s32.totalorder %s23, 1
      %p235 = por %p233, %p234
      %p236 = scmp.ne.s32.totalorder %s225, %s226
      %p237 = scmp.eq.s32.totalorder %s23, 0
      %p238 = por %p236, %p237
      %p239 = scmp.ne.s32.totalorder %s225, %s226
      %p240 = scmp.eq.s32.totalorder %s24, 1
      %p241 = por %p239, %p240
      %p243 = scmp.ne.s32.totalorder %s226, %s242
      %p244 = scmp.eq.s32.totalorder %s24, 0
      %p245 = por %p243, %p244
      %p246 = scmp.le.s32.totalorder 1, %s18
      %p247 = scmp.lt.s32.totalorder %s18, 3
      %p248 = pnand %p246, %p247
      %p249 = pneg %p248
      // Predicated region
      $region9: #{encoder_forward.1} parent=5 // pred_check
        _
      $region10: #{encoder_forward.1} parent=5 // pred_check_branch
        %251 = sbr.rel (%p248) target = $region12
      $region11: #{encoder_forward.1} parent=5 // pred_region
        %s252 = ssub.s32 %s18, 1
        // Predicated region
        $region13: #{encoder_forward.1} parent=11 // pred_check
          %p253 = pneg %p65
        $region14: #{encoder_forward.1} parent=11 // pred_check_branch
          %255 = sbr.rel (%p253) target = $region16
        $region15: #{encoder_forward.1} parent=11 // pred_region
          _
        $region16: #{encoder_forward.1} parent=11 // pred_fallthru
          _
        // Predicated region
        $region17: #{encoder_forward.1} parent=11 // pred_check
          %p256 = pneg %p86
        $region18: #{encoder_forward.1} parent=11 // pred_check_branch
          %258 = sbr.rel (%p256) target = $region20
        $region19: #{encoder_forward.1} parent=11 // pred_region
          _
        $region20: #{encoder_forward.1} parent=11 // pred_fallthru
          _
        // Predicated region
        $region21: #{encoder_forward.1} parent=11 // pred_check
          %p259 = pneg %p107
        $region22: #{encoder_forward.1} parent=11 // pred_check_branch
          %261 = sbr.rel (%p259) target = $region24
        $region23: #{encoder_forward.1} parent=11 // pred_region
          _
        $region24: #{encoder_forward.1} parent=11 // pred_fallthru
          _
        // Predicated region
        $region25: #{encoder_forward.1} parent=11 // pred_check
          %p262 = pneg %p128
        $region26: #{encoder_forward.1} parent=11 // pred_check_branch
          %264 = sbr.rel (%p262) target = $region28
        $region27: #{encoder_forward.1} parent=11 // pred_region
          _
        $region28: #{encoder_forward.1} parent=11 // pred_fallthru
          _
        // Predicated region
        $region29: #{encoder_forward.1} parent=11 // pred_check
          %p265 = pneg %p149
        $region30: #{encoder_forward.1} parent=11 // pred_check_branch
          %267 = sbr.rel (%p265) target = $region32
        $region31: #{encoder_forward.1} parent=11 // pred_region
          _
        $region32: #{encoder_forward.1} parent=11 // pred_fallthru
          _
        // Predicated region
        $region33: #{encoder_forward.1} parent=11 // pred_check
          %p268 = pneg %p170
        $region34: #{encoder_forward.1} parent=11 // pred_check_branch
          %270 = sbr.rel (%p268) target = $region36
        $region35: #{encoder_forward.1} parent=11 // pred_region
          _
        $region36: #{encoder_forward.1} parent=11 // pred_fallthru
          _
        // Predicated region
        $region37: #{encoder_forward.1} parent=11 // pred_check
          %p271 = pneg %p191
        $region38: #{encoder_forward.1} parent=11 // pred_check_branch
          %273 = sbr.rel (%p271) target = $region40
        $region39: #{encoder_forward.1} parent=11 // pred_region
          _
        $region40: #{encoder_forward.1} parent=11 // pred_fallthru
          _
        // Predicated region
        $region41: #{encoder_forward.1} parent=11 // pred_check
          %p274 = pneg %p212
        $region42: #{encoder_forward.1} parent=11 // pred_check_branch
          %276 = sbr.rel (%p274) target = $region44
        $region43: #{encoder_forward.1} parent=11 // pred_region
          _
        $region44: #{encoder_forward.1} parent=11 // pred_fallthru
          _
      $region12: #{encoder_forward.1} parent=5 // pred_fallthru
        _
      %p277 = scmp.lt.s32.totalorder %s18, 2
      // Predicated region
      $region45: #{encoder_forward.1} parent=5 // pred_check
        %p278 = pneg %p277
      $region46: #{encoder_forward.1} parent=5 // pred_check_branch
        %280 = sbr.rel (%p278) target = $region48
      $region47: #{encoder_forward.1} parent=5 // pred_region
        // Predicated region
        $region49: #{encoder_forward.1} parent=47 // pred_check
          %p281 = pneg %p38
        $region50: #{encoder_forward.1} parent=47 // pred_check_branch
          %283 = sbr.rel (%p281) target = $region52
        $region51: #{encoder_forward.1} parent=47 // pred_region
          %s284 = smul.u32 4, %s18
          %p285 = scmp.lt.s32.totalorder %s284, 7
          %s286 = scalar_select %p285, %s284, 7
          %s287 = smul.addr %s286, 8
          %s288 = smul.addr %s287, 4
          %s289 = scalar_lea.vmem %s0, %s288
          %s290 = smul.u32 4, %s18
        $region52: #{encoder_forward.1} parent=47 // pred_fallthru
          _
      $region48: #{encoder_forward.1} parent=5 // pred_fallthru
        _
      %p291 = scmp.le.s32.totalorder 1, %s18
      %p292 = scmp.lt.s32.totalorder %s18, 3
      %p293 = pnand %p291, %p292
      %p294 = pneg %p293
      // Predicated region
      $region53: #{encoder_forward.1} parent=5 // pred_check
        _
      $region54: #{encoder_forward.1} parent=5 // pred_check_branch
        %296 = sbr.rel (%p293) target = $region56
      $region55: #{encoder_forward.1} parent=5 // pred_region
        %s297 = ssub.s32 %s18, 1
        %s298 = smul.u32 4, %s23
        %p299 = scmp.lt.s32.totalorder %s298, 7
        %s300 = scalar_select %p299, %s298, 7
        %s301 = smul.addr %s300, 8
        %s302 = smul.addr %s301, 4
        %s303 = scalar_lea.vmem %s0, %s302
        %p304 = pneg %p44
        %p305 = pneg %p41
        %p306 = pneg %p65
        %p307 = pneg %p62
        %p308 = pneg %p86
        %p309 = pneg %p83
        %p310 = pneg %p107
        %p311 = pneg %p104
        %p312 = pneg %p128
        %p313 = pneg %p125
        %p314 = pneg %p149
        %p315 = pneg %p146
        %p316 = pneg %p170
        %p317 = pneg %p167
        %p318 = pneg %p191
        %p319 = pneg %p188
        %p320 = pneg %p212
        %p321 = pneg %p209
        %p322 = pneg %p238
        %p323 = pneg %p235
        %s324 = sand.u32 %s225, 1
        %s325 = scalar_lea.sflag [#allocation6], %s324
        %s326 = sand.u32 %s225, 1
        %s327 = scalar_lea.vmem [#allocation5], %s326
        %s328 = smul.u32 4, %s23
        %p329 = scmp.lt.s32.totalorder %s328, 7
        %s330 = scalar_select %p329, %s328, 7
        %s331 = smul.addr %s330, 8
        %s332 = smul.addr %s331, 4
        %s333 = scalar_lea.vmem %s0, %s332
        %s334 = smul.u32 4, %s23
        %v336 = vld [vmem:[%s1] sm:$0xff]
        %v337 = vld [vmem:[%s1 + $0x8] sm:$0xff]
        %v338 = vld [vmem:[%s1 + $0x10] sm:$0xff]
        %v339 = vld [vmem:[%s1 + $0x18] sm:$0xff]
        %v340 = vld [vmem:[%s1 + $0x20] sm:$0xf]
        %v341 = vld [vmem:[%s2] sm:$0x1]
        %v342 = vld [vmem:[%s3] sm:$0xf]
        %v343 = vld [vmem:[%s3 + $0x4] sm:$0xf]
        %v344 = vld [vmem:[%s3 + $0x8] sm:$0xf]
        %v345 = vld [vmem:[%s3 + $0xc] sm:$0xf]
        %v346 = vld [vmem:[%s3 + $0x10] sm:$0xf]
        %v347 = vld [vmem:[%s3 + $0x14] sm:$0xf]
        %v348 = vld [vmem:[%s3 + $0x18] sm:$0xf]
        %v349 = vld [vmem:[%s3 + $0x1c] sm:$0xf]
        %v350 = vld [vmem:[%s3 + $0x20] sm:$0xf]
        %v351 = vld [vmem:[%s3 + $0x24] sm:$0xf]
        %v352 = vld [vmem:[%s3 + $0x28] sm:$0xf]
        %v353 = vld [vmem:[%s3 + $0x2c] sm:$0xf]
        %v354 = vld [vmem:[%s3 + $0x30] sm:$0xf]
        %v355 = vld [vmem:[%s3 + $0x34] sm:$0xf]
        %v356 = vld [vmem:[%s3 + $0x38] sm:$0xf]
        %v357 = vld [vmem:[%s3 + $0x3c] sm:$0xf]
        %v358 = vld [vmem:[%s3 + $0x40] sm:$0xf]
        %v359 = vld [vmem:[%s3 + $0x44] sm:$0xf]
        %v360 = vld [vmem:[%s3 + $0x48] sm:$0xf]
        %v361 = vld [vmem:[%s3 + $0x4c] sm:$0xf]
        %v362 = vld [vmem:[%s3 + $0x50] sm:$0xf]
        %v363 = vld [vmem:[%s3 + $0x54] sm:$0xf]
        %v364 = vld [vmem:[%s3 + $0x58] sm:$0xf]
        %v365 = vld [vmem:[%s3 + $0x5c] sm:$0xf]
        %v366 = vld [vmem:[%s3 + $0x60] sm:$0xf]
        %v367 = vld [vmem:[%s3 + $0x64] sm:$0xf]
        %v368 = vld [vmem:[%s3 + $0x68] sm:$0xf]
        %v369 = vld [vmem:[%s3 + $0x6c] sm:$0xf]
        %v370 = vld [vmem:[%s3 + $0x70] sm:$0xf]
        %v371 = vld [vmem:[%s3 + $0x74] sm:$0xf]
        %v372 = vld [vmem:[%s3 + $0x78] sm:$0xf]
        %v373 = vld [vmem:[%s3 + $0x7c] sm:$0xf]
        %v374 = vld [vmem:[%s3 + $0x80] sm:$0xf]
        %v375 = vld [vmem:[%s3 + $0x84] sm:$0xf]
        %v376 = vld [vmem:[%s3 + $0x88] sm:$0xf]
        %v377 = vld [vmem:[%s3 + $0x8c] sm:$0xf]
        %v378 = vld [vmem:[%s4] sm:$0x1]
        %v379 = vld [vmem:[%s5] sm:$0xf]
        %v380 = vld [vmem:[%s5 + $0x4] sm:$0xf]
        %v381 = vld [vmem:[%s5 + $0x8] sm:$0xf]
        %v382 = vld [vmem:[%s5 + $0xc] sm:$0xf]
        %v383 = vld [vmem:[%s5 + $0x10] sm:$0xf]
        %v384 = vld [vmem:[%s5 + $0x14] sm:$0xf]
        %v385 = vld [vmem:[%s5 + $0x18] sm:$0xf]
        %v386 = vld [vmem:[%s5 + $0x1c] sm:$0xf]
        %v387 = vld [vmem:[%s5 + $0x20] sm:$0xf]
        %v388 = vld [vmem:[%s5 + $0x24] sm:$0xf]
        %v389 = vld [vmem:[%s5 + $0x28] sm:$0xf]
        %v390 = vld [vmem:[%s5 + $0x2c] sm:$0xf]
        %v391 = vld [vmem:[%s5 + $0x30] sm:$0xf]
        %v392 = vld [vmem:[%s5 + $0x34] sm:$0xf]
        %v393 = vld [vmem:[%s5 + $0x38] sm:$0xf]
        %v394 = vld [vmem:[%s5 + $0x3c] sm:$0xf]
        %v395 = vld [vmem:[%s5 + $0x40] sm:$0xf]
        %v396 = vld [vmem:[%s5 + $0x44] sm:$0xf]
        %v397 = vld [vmem:[%s5 + $0x48] sm:$0xf]
        %v398 = vld [vmem:[%s5 + $0x4c] sm:$0xf]
        %v399 = vld [vmem:[%s5 + $0x50] sm:$0xf]
        %v400 = vld [vmem:[%s5 + $0x54] sm:$0xf]
        %v401 = vld [vmem:[%s5 + $0x58] sm:$0xf]
        %v402 = vld [vmem:[%s5 + $0x5c] sm:$0xf]
        %v403 = vld [vmem:[%s5 + $0x60] sm:$0xf]
        %v404 = vld [vmem:[%s5 + $0x64] sm:$0xf]
        %v405 = vld [vmem:[%s5 + $0x68] sm:$0xf]
        %v406 = vld [vmem:[%s5 + $0x6c] sm:$0xf]
        %v407 = vld [vmem:[%s5 + $0x70] sm:$0xf]
        %v408 = vld [vmem:[%s5 + $0x74] sm:$0xf]
        %v409 = vld [vmem:[%s5 + $0x78] sm:$0xf]
        %v410 = vld [vmem:[%s5 + $0x7c] sm:$0xf]
        %v411 = vld [vmem:[%s5 + $0x80] sm:$0xf]
        %v412 = vld [vmem:[%s5 + $0x84] sm:$0xf]
        %v413 = vld [vmem:[%s5 + $0x88] sm:$0xf]
        %v414 = vld [vmem:[%s5 + $0x8c] sm:$0xf]
        %v415 = vld [vmem:[%s6] sm:$0x1]
        %v416 = vld [vmem:[%s7] sm:$0xf]
        %v417 = vld [vmem:[%s7 + $0x4] sm:$0xf]
        %v418 = vld [vmem:[%s7 + $0x8] sm:$0xf]
        %v419 = vld [vmem:[%s7 + $0xc] sm:$0xf]
        %v420 = vld [vmem:[%s7 + $0x10] sm:$0xf]
        %v421 = vld [vmem:[%s7 + $0x14] sm:$0xf]
        %v422 = vld [vmem:[%s7 + $0x18] sm:$0xf]
        %v423 = vld [vmem:[%s7 + $0x1c] sm:$0xf]
        %v424 = vld [vmem:[%s7 + $0x20] sm:$0xf]
        %v425 = vld [vmem:[%s7 + $0x24] sm:$0xf]
        %v426 = vld [vmem:[%s7 + $0x28] sm:$0xf]
        %v427 = vld [vmem:[%s7 + $0x2c] sm:$0xf]
        %v428 = vld [vmem:[%s7 + $0x30] sm:$0xf]
        %v429 = vld [vmem:[%s7 + $0x34] sm:$0xf]
        %v430 = vld [vmem:[%s7 + $0x38] sm:$0xf]
        %v431 = vld [vmem:[%s7 + $0x3c] sm:$0xf]
        %v432 = vld [vmem:[%s7 + $0x40] sm:$0xf]
        %v433 = vld [vmem:[%s7 + $0x44] sm:$0xf]
        %v434 = vld [vmem:[%s7 + $0x48] sm:$0xf]
        %v435 = vld [vmem:[%s7 + $0x4c] sm:$0xf]
        %v436 = vld [vmem:[%s7 + $0x50] sm:$0xf]
        %v437 = vld [vmem:[%s7 + $0x54] sm:$0xf]
        %v438 = vld [vmem:[%s7 + $0x58] sm:$0xf]
        %v439 = vld [vmem:[%s7 + $0x5c] sm:$0xf]
        %v440 = vld [vmem:[%s7 + $0x60] sm:$0xf]
        %v441 = vld [vmem:[%s7 + $0x64] sm:$0xf]
        %v442 = vld [vmem:[%s7 + $0x68] sm:$0xf]
        %v443 = vld [vmem:[%s7 + $0x6c] sm:$0xf]
        %v444 = vld [vmem:[%s7 + $0x70] sm:$0xf]
        %v445 = vld [vmem:[%s7 + $0x74] sm:$0xf]
        %v446 = vld [vmem:[%s7 + $0x78] sm:$0xf]
        %v447 = vld [vmem:[%s7 + $0x7c] sm:$0xf]
        %v448 = vld [vmem:[%s7 + $0x80] sm:$0xf]
        %v449 = vld [vmem:[%s7 + $0x84] sm:$0xf]
        %v450 = vld [vmem:[%s7 + $0x88] sm:$0xf]
        %v451 = vld [vmem:[%s7 + $0x8c] sm:$0xf]
        %v452 = vld [vmem:[%s8] sm:$0x1]
        %v453 = vld [vmem:[%s333] sm:$0xf]
        %s454 = scalar_lea.vmem %s333, 32
        %v455 = vld [vmem:[%s454] sm:$0xf]
        %s456 = scalar_lea.vmem %s333, 64
        %v457 = vld [vmem:[%s456] sm:$0xf]
        %s458 = scalar_lea.vmem %s333, 96
        %v459 = vld [vmem:[%s458] sm:$0xf]
        %s460 = scalar_lea.vmem %s333, 4
        %v461 = vld [vmem:[%s460] sm:$0xf]
        %s462 = scalar_lea.vmem %s333, 36
        %v463 = vld [vmem:[%s462] sm:$0xf]
        %v465 = vunpack.c.l.b16 %v455
        %v466 = vpack.c.b16 %v465, %v465
        %467 = vrot.lane.b32.xlu0 %v466, 4
        %v468 = vpop.permute.xlu0 %467
        %v470 = vunpack.c.l.b16 %v453
        %v471 = vpack.c.b16 %v470, %v470
        %v473 = vshrl.u32 %v471, 16
        %v475 = vshll.u32 %v471, 16
        %v477 = vrot.slane %v475, 1
        %v478 = vor.u32 %v473, %v477
        %479 = vrot.lane.b32.xlu0 %v478, 8
        %v480 = vpop.permute.xlu0 %479
        %v482 = vunpack.c.l.b16 %v457
        %v483 = vpack.c.b16 %v482, %v482
        %484 = vrot.lane.b32.xlu0 %v483, 12
        %v485 = vpop.permute.xlu0 %484
        %v487 = vunpack.c.l.b16 %v459
        %v488 = vpack.c.b16 %v487, %v487
        %489 = vrot.lane.b32.xlu0 %v488, 16
        %v490 = vpop.permute.xlu0 %489
        %v492 = vshrl.u32 %v483, 16
        %v494 = vshll.u32 %v483, 16
        %v496 = vrot.slane %v494, 1
        %v497 = vor.u32 %v492, %v496
        %498 = vrot.lane.b32.xlu0 %v497, 20
        %v499 = vpop.permute.xlu0 %498
        %v501 = vunpack.c.l.b16 %v461
        %v502 = vpack.c.b16 %v501, %v501
        %503 = vrot.lane.b32.xlu0 %v502, 24
        %v504 = vpop.permute.xlu0 %503
        %v506 = vunpack.c.l.b16 %v463
        %v507 = vpack.c.b16 %v506, %v506
        %508 = vrot.lane.b32.xlu0 %v507, 28
        %v509 = vpop.permute.xlu0 %508
        %v511 = vshrl.u32 %v502, 16
        %v513 = vshll.u32 %v502, 16
        %v515 = vrot.slane %v513, 1
        %v516 = vor.u32 %v511, %v515
        %517 = vrot.lane.b32.xlu0 %v516, 32
        %v518 = vpop.permute.xlu0 %517
        %vm519 = vcmask 31744
        %v522 = vsel %vm519, %v453, %v468
        %vm523 = vcmask 64512
        %v525 = vsel %vm523, %v522, %v480
        %vm526 = vcmask 97280
        %v528 = vsel %vm526, %v525, %v485
        %vm529 = vcmask 130048
        %v531 = vsel %vm529, %v528, %v490
        %vm532 = vcmask 162816
        %v534 = vsel %vm532, %v531, %v499
        %vm535 = vcmask 195584
        %v537 = vsel %vm535, %v534, %v504
        %vm538 = vcmask 228352
        %v540 = vsel %vm538, %v537, %v509
        %vm541 = vcmask 261120
        %v543 = vsel %vm541, %v540, %v518
        %v545 = vunpack.c.l.bf16 %v543
        %v547 = vlaneseq
        %v548 = vshrl.u32 %v547, 7
        %v549 = vsub.s32 0, %v548
        %v550 = vrot.slane %v341, %v549
        %vm552 = vcmask 293888
        %v554 = vsel %vm552, %v545, 0
        %vm556 = vcmask 1043456
        %v558 = vsel %vm556, %v340, 0
        %560 = vmatprep.subr.mxu0 0.0
        %561 = vmatpush1.msra.mxu0 %v336
        %562 = vmatprep.subr.mxu0 0.0
        %563 = vmatpush1.msra.mxu0 %v337
        %564 = vmatprep.subr.mxu0 0.0
        %565 = vmatpush1.msra.mxu0 %v338
        %566 = vmatprep.subr.mxu0 0.0
        %567 = vmatpush1.msra.mxu0 %v339
        %568 = vmatprep.subr.mxu0 0.0
        %569 = vmatpush1.msra.mxu0 %v558
        %570 = vmatprep.subr.mxu0 0.0
        %571 = vmatpush1.msra.mxu0 0.0
        %572 = vmatprep.subr.mxu0 0.0
        %573 = vmatpush1.msra.mxu0 0.0
        %574 = vmatprep.subr.mxu0 0.0
        %575 = vmatpush1.msra.mxu0 0.0
        %576 = vmatprep.subr.mxu0 0.0
        %577 = vmatpush1.msra.mxu0 0.0
        %578 = vmatprep.subr.mxu0 0.0
        %579 = vmatpush1.msra.mxu0 0.0
        %580 = vmatprep.subr.mxu0 0.0
        %581 = vmatpush1.msra.mxu0 0.0
        %582 = vmatprep.subr.mxu0 0.0
        %583 = vmatpush1.msra.mxu0 0.0
        %584 = vmatprep.subr.mxu0 0.0
        %585 = vmatpush1.msra.mxu0 0.0
        %586 = vmatprep.subr.mxu0 0.0
        %587 = vmatpush1.msra.mxu0 0.0
        %588 = vmatprep.subr.mxu0 0.0
        %589 = vmatpush1.msra.mxu0 0.0
        %590 = vmatprep.subr.mxu0 0.0
        %591 = vmatpush1.msra.mxu0 0.0
        %592 = vmatprep.subr.mxu0 0.0
        %593 = vmatpush1.msra.mxu0 0.0
        %594 = vmatprep.subr.mxu0 0.0
        %595 = vmatpush1.msra.mxu0 0.0
        %596 = vmatprep.subr.mxu0 0.0
        %597 = vmatpush1.msra.mxu0 0.0
        %598 = vmatprep.subr.mxu0 0.0
        %599 = vmatpush1.msra.mxu0 0.0
        %600 = vmatprep.subr.mxu0 0.0
        %601 = vmatpush1.msra.mxu0 0.0
        %602 = vmatprep.subr.mxu0 0.0
        %603 = vmatpush1.msra.mxu0 0.0
        %604 = vmatprep.subr.mxu0 0.0
        %605 = vmatpush1.msra.mxu0 0.0
        %606 = vmatprep.subr.mxu0 0.0
        %607 = vmatpush1.msra.mxu0 0.0
        %608 = vmatprep.subr.mxu0 0.0
        %609 = vmatpush1.msra.mxu0 0.0
        %610 = vmatprep.subr.mxu0 0.0
        %611 = vmatpush1.msra.mxu0 0.0
        %612 = vmatprep.subr.mxu0 0.0
        %613 = vmatpush1.msra.mxu0 0.0
        %614 = vmatprep.subr.mxu0 0.0
        %615 = vmatpush1.msra.mxu0 0.0
        %616 = vmatprep.subr.mxu0 0.0
        %617 = vmatpush1.msra.mxu0 0.0
        %618 = vmatprep.subr.mxu0 0.0
        %619 = vmatpush1.msra.mxu0 0.0
        %620 = vmatprep.subr.mxu0 0.0
        %621 = vmatpush1.msra.mxu0 0.0
        %622 = vmatprep.subr.mxu0 0.0
        %623 = vmatpush1.msra.mxu0 0.0
        %624 = vmatprep.mubr.f32.mxu0 0.0
        %625 = vmatmul.mubr.f32.gmra.mrb[0].mxu0 %v554
        %v626 = vpop.f32.mrb[0].mxu0
        %v627 = vadd.f32 %v550, %v626
        %v628 = vpop.f32.mrb[0].mxu0
        %629 = vdwg.mxu0
        %v630 = vmax.f32 %v627, 0.0
        %v631 = vpack.c.bf16 %v630, %v630
        %vm632 = vcmask 257024
        %vm633 = vsmask.f32 3328
        %vm634 = vmand %vm632, %vm633
        %v635 = vld [vmem:[#allocation2] sm:$0xf]
        %v636 = vsel %vm634, %v631, %v635
        %637 = vst [vmem:[#allocation2] sm:$0xf] %v636
        %v638 = vld [vmem:[%s460] sm:$0xf]
        %v639 = vld [vmem:[%s462] sm:$0xf]
        %s640 = scalar_lea.vmem %s333, 68
        %v641 = vld [vmem:[%s640] sm:$0xf]
        %s642 = scalar_lea.vmem %s333, 100
        %v643 = vld [vmem:[%s642] sm:$0xf]
        %s644 = scalar_lea.vmem %s333, 8
        %v645 = vld [vmem:[%s644] sm:$0xf]
        %s646 = scalar_lea.vmem %s333, 40
        %v647 = vld [vmem:[%s646] sm:$0xf]
        %v649 = vunpack.c.l.b16 %v639
        %v650 = vpack.c.b16 %v649, %v649
        %651 = vrot.lane.b32.xlu0 %v650, 4
        %v652 = vpop.permute.xlu0 %651
        %v654 = vunpack.c.l.b16 %v638
        %v655 = vpack.c.b16 %v654, %v654
        %v657 = vshrl.u32 %v655, 16
        %v659 = vshll.u32 %v655, 16
        %v661 = vrot.slane %v659, 1
        %v662 = vor.u32 %v657, %v661
        %663 = vrot.lane.b32.xlu0 %v662, 8
        %v664 = vpop.permute.xlu0 %663
        %v666 = vunpack.c.l.b16 %v641
        %v667 = vpack.c.b16 %v666, %v666
        %668 = vrot.lane.b32.xlu0 %v667, 12
        %v669 = vpop.permute.xlu0 %668
        %v671 = vunpack.c.l.b16 %v643
        %v672 = vpack.c.b16 %v671, %v671
        %673 = vrot.lane.b32.xlu0 %v672, 16
        %v674 = vpop.permute.xlu0 %673
        %v676 = vshrl.u32 %v667, 16
        %v678 = vshll.u32 %v667, 16
        %v680 = vrot.slane %v678, 1
        %v681 = vor.u32 %v676, %v680
        %682 = vrot.lane.b32.xlu0 %v681, 20
        %v683 = vpop.permute.xlu0 %682
        %v685 = vunpack.c.l.b16 %v645
        %v686 = vpack.c.b16 %v685, %v685
        %687 = vrot.lane.b32.xlu0 %v686, 24
        %v688 = vpop.permute.xlu0 %687
        %v690 = vunpack.c.l.b16 %v647
        %v691 = vpack.c.b16 %v690, %v690
        %692 = vrot.lane.b32.xlu0 %v691, 28
        %v693 = vpop.permute.xlu0 %692
        %v695 = vshrl.u32 %v686, 16
        %v697 = vshll.u32 %v686, 16
        %v699 = vrot.slane %v697, 1
        %v700 = vor.u32 %v695, %v699
        %701 = vrot.lane.b32.xlu0 %v700, 32
        %v702 = vpop.permute.xlu0 %701
        %v705 = vsel %vm519, %v638, %v652
        %v707 = vsel %vm523, %v705, %v664
        %v709 = vsel %vm526, %v707, %v669
        %v711 = vsel %vm529, %v709, %v674
        %v713 = vsel %vm532, %v711, %v683
        %v715 = vsel %vm535, %v713, %v688
        %v717 = vsel %vm538, %v715, %v693
        %v719 = vsel %vm541, %v717, %v702
        %v721 = vunpack.c.l.bf16 %v719
        %v723 = vsel %vm552, %v721, 0
        %725 = vmatprep.subr.mxu0 0.0
        %726 = vmatpush1.msra.mxu0 %v336
        %727 = vmatprep.subr.mxu0 0.0
        %728 = vmatpush1.msra.mxu0 %v337
        %729 = vmatprep.subr.mxu0 0.0
        %730 = vmatpush1.msra.mxu0 %v338
        %731 = vmatprep.subr.mxu0 0.0
        %732 = vmatpush1.msra.mxu0 %v339
        %733 = vmatprep.subr.mxu0 0.0
        %734 = vmatpush1.msra.mxu0 %v558
        %735 = vmatprep.subr.mxu0 0.0
        %736 = vmatpush1.msra.mxu0 0.0
        %737 = vmatprep.subr.mxu0 0.0
        %738 = vmatpush1.msra.mxu0 0.0
        %739 = vmatprep.subr.mxu0 0.0
        %740 = vmatpush1.msra.mxu0 0.0
        %741 = vmatprep.subr.mxu0 0.0
        %742 = vmatpush1.msra.mxu0 0.0
        %743 = vmatprep.subr.mxu0 0.0
        %744 = vmatpush1.msra.mxu0 0.0
        %745 = vmatprep.subr.mxu0 0.0
        %746 = vmatpush1.msra.mxu0 0.0
        %747 = vmatprep.subr.mxu0 0.0
        %748 = vmatpush1.msra.mxu0 0.0
        %749 = vmatprep.subr.mxu0 0.0
        %750 = vmatpush1.msra.mxu0 0.0
        %751 = vmatprep.subr.mxu0 0.0
        %752 = vmatpush1.msra.mxu0 0.0
        %753 = vmatprep.subr.mxu0 0.0
        %754 = vmatpush1.msra.mxu0 0.0
        %755 = vmatprep.subr.mxu0 0.0
        %756 = vmatpush1.msra.mxu0 0.0
        %757 = vmatprep.subr.mxu0 0.0
        %758 = vmatpush1.msra.mxu0 0.0
        %759 = vmatprep.subr.mxu0 0.0
        %760 = vmatpush1.msra.mxu0 0.0
        %761 = vmatprep.subr.mxu0 0.0
        %762 = vmatpush1.msra.mxu0 0.0
        %763 = vmatprep.subr.mxu0 0.0
        %764 = vmatpush1.msra.mxu0 0.0
        %765 = vmatprep.subr.mxu0 0.0
        %766 = vmatpush1.msra.mxu0 0.0
        %767 = vmatprep.subr.mxu0 0.0
        %768 = vmatpush1.msra.mxu0 0.0
        %769 = vmatprep.subr.mxu0 0.0
        %770 = vmatpush1.msra.mxu0 0.0
        %771 = vmatprep.subr.mxu0 0.0
        %772 = vmatpush1.msra.mxu0 0.0
        %773 = vmatprep.subr.mxu0 0.0
        %774 = vmatpush1.msra.mxu0 0.0
        %775 = vmatprep.subr.mxu0 0.0
        %776 = vmatpush1.msra.mxu0 0.0
        %777 = vmatprep.subr.mxu0 0.0
        %778 = vmatpush1.msra.mxu0 0.0
        %779 = vmatprep.subr.mxu0 0.0
        %780 = vmatpush1.msra.mxu0 0.0
        %781 = vmatprep.subr.mxu0 0.0
        %782 = vmatpush1.msra.mxu0 0.0
        %783 = vmatprep.subr.mxu0 0.0
        %784 = vmatpush1.msra.mxu0 0.0
        %785 = vmatprep.subr.mxu0 0.0
        %786 = vmatpush1.msra.mxu0 0.0
        %787 = vmatprep.subr.mxu0 0.0
        %788 = vmatpush1.msra.mxu0 0.0
        %789 = vmatprep.mubr.f32.mxu0 0.0
        %790 = vmatmul.mubr.f32.gmra.mrb[0].mxu0 %v723
        %v791 = vpop.f32.mrb[0].mxu0
        %v792 = vadd.f32 %v550, %v791
        %v793 = vpop.f32.mrb[0].mxu0
        %794 = vdwg.mxu0
        %v795 = vmax.f32 %v792, 0.0
        %v796 = vpack.c.bf16 %v795, %v795
        %s797 = scalar_lea.vmem [#allocation2], 4
        %v798 = vld [vmem:[%s797] sm:$0xf]
        %v799 = vsel %vm634, %v796, %v798
        %800 = vst [vmem:[%s797] sm:$0xf] %v799
        %v801 = vld [vmem:[%s644] sm:$0xf]
        %v802 = vld [vmem:[%s646] sm:$0xf]
        %s803 = scalar_lea.vmem %s333, 72
        %v804 = vld [vmem:[%s803] sm:$0xf]
        %s805 = scalar_lea.vmem %s333, 104
        %v806 = vld [vmem:[%s805] sm:$0xf]
        %s807 = scalar_lea.vmem %s333, 12
        %v808 = vld [vmem:[%s807] sm:$0xf]
        %s809 = scalar_lea.vmem %s333, 44
        %v810 = vld [vmem:[%s809] sm:$0xf]
        %v812 = vunpack.c.l.b16 %v802
        %v813 = vpack.c.b16 %v812, %v812
        %814 = vrot.lane.b32.xlu0 %v813, 4
        %v815 = vpop.permute.xlu0 %814
        %v817 = vunpack.c.l.b16 %v801
        %v818 = vpack.c.b16 %v817, %v817
        %v820 = vshrl.u32 %v818, 16
        %v822 = vshll.u32 %v818, 16
        %v824 = vrot.slane %v822, 1
        %v825 = vor.u32 %v820, %v824
        %826 = vrot.lane.b32.xlu0 %v825, 8
        %v827 = vpop.permute.xlu0 %826
        %v829 = vunpack.c.l.b16 %v804
        %v830 = vpack.c.b16 %v829, %v829
        %831 = vrot.lane.b32.xlu0 %v830, 12
        %v832 = vpop.permute.xlu0 %831
        %v834 = vunpack.c.l.b16 %v806
        %v835 = vpack.c.b16 %v834, %v834
        %836 = vrot.lane.b32.xlu0 %v835, 16
        %v837 = vpop.permute.xlu0 %836
        %v839 = vshrl.u32 %v830, 16
        %v841 = vshll.u32 %v830, 16
        %v843 = vrot.slane %v841, 1
        %v844 = vor.u32 %v839, %v843
        %845 = vrot.lane.b32.xlu0 %v844, 20
        %v846 = vpop.permute.xlu0 %845
        %v848 = vunpack.c.l.b16 %v808
        %v849 = vpack.c.b16 %v848, %v848
        %850 = vrot.lane.b32.xlu0 %v849, 24
        %v851 = vpop.permute.xlu0 %850
        %v853 = vunpack.c.l.b16 %v810
        %v854 = vpack.c.b16 %v853, %v853
        %855 = vrot.lane.b32.xlu0 %v854, 28
        %v856 = vpop.permute.xlu0 %855
        %v858 = vshrl.u32 %v849, 16
        %v860 = vshll.u32 %v849, 16
        %v862 = vrot.slane %v860, 1
        %v863 = vor.u32 %v858, %v862
        %864 = vrot.lane.b32.xlu0 %v863, 32
        %v865 = vpop.permute.xlu0 %864
        %v868 = vsel %vm519, %v801, %v815
        %v870 = vsel %vm523, %v868, %v827
        %v872 = vsel %vm526, %v870, %v832
        %v874 = vsel %vm529, %v872, %v837
        %v876 = vsel %vm532, %v874, %v846
        %v878 = vsel %vm535, %v876, %v851
        %v880 = vsel %vm538, %v878, %v856
        %v882 = vsel %vm541, %v880, %v865
        %v884 = vunpack.c.l.bf16 %v882
        %v886 = vsel %vm552, %v884, 0
        %888 = vmatprep.subr.mxu0 0.0
        %889 = vmatpush1.msra.mxu0 %v336
        %890 = vmatprep.subr.mxu0 0.0
        %891 = vmatpush1.msra.mxu0 %v337
        %892 = vmatprep.subr.mxu0 0.0
        %893 = vmatpush1.msra.mxu0 %v338
        %894 = vmatprep.subr.mxu0 0.0
        %895 = vmatpush1.msra.mxu0 %v339
        %896 = vmatprep.subr.mxu0 0.0
        %897 = vmatpush1.msra.mxu0 %v558
        %898 = vmatprep.subr.mxu0 0.0
        %899 = vmatpush1.msra.mxu0 0.0
        %900 = vmatprep.subr.mxu0 0.0
        %901 = vmatpush1.msra.mxu0 0.0
        %902 = vmatprep.subr.mxu0 0.0
        %903 = vmatpush1.msra.mxu0 0.0
        %904 = vmatprep.subr.mxu0 0.0
        %905 = vmatpush1.msra.mxu0 0.0
        %906 = vmatprep.subr.mxu0 0.0
        %907 = vmatpush1.msra.mxu0 0.0
        %908 = vmatprep.subr.mxu0 0.0
        %909 = vmatpush1.msra.mxu0 0.0
        %910 = vmatprep.subr.mxu0 0.0
        %911 = vmatpush1.msra.mxu0 0.0
        %912 = vmatprep.subr.mxu0 0.0
        %913 = vmatpush1.msra.mxu0 0.0
        %914 = vmatprep.subr.mxu0 0.0
        %915 = vmatpush1.msra.mxu0 0.0
        %916 = vmatprep.subr.mxu0 0.0
        %917 = vmatpush1.msra.mxu0 0.0
        %918 = vmatprep.subr.mxu0 0.0
        %919 = vmatpush1.msra.mxu0 0.0
        %920 = vmatprep.subr.mxu0 0.0
        %921 = vmatpush1.msra.mxu0 0.0
        %922 = vmatprep.subr.mxu0 0.0
        %923 = vmatpush1.msra.mxu0 0.0
        %924 = vmatprep.subr.mxu0 0.0
        %925 = vmatpush1.msra.mxu0 0.0
        %926 = vmatprep.subr.mxu0 0.0
        %927 = vmatpush1.msra.mxu0 0.0
        %928 = vmatprep.subr.mxu0 0.0
        %929 = vmatpush1.msra.mxu0 0.0
        %930 = vmatprep.subr.mxu0 0.0
        %931 = vmatpush1.msra.mxu0 0.0
        %932 = vmatprep.subr.mxu0 0.0
        %933 = vmatpush1.msra.mxu0 0.0
        %934 = vmatprep.subr.mxu0 0.0
        %935 = vmatpush1.msra.mxu0 0.0
        %936 = vmatprep.subr.mxu0 0.0
        %937 = vmatpush1.msra.mxu0 0.0
        %938 = vmatprep.subr.mxu0 0.0
        %939 = vmatpush1.msra.mxu0 0.0
        %940 = vmatprep.subr.mxu0 0.0
        %941 = vmatpush1.msra.mxu0 0.0
        %942 = vmatprep.subr.mxu0 0.0
        %943 = vmatpush1.msra.mxu0 0.0
        %944 = vmatprep.subr.mxu0 0.0
        %945 = vmatpush1.msra.mxu0 0.0
        %946 = vmatprep.subr.mxu0 0.0
        %947 = vmatpush1.msra.mxu0 0.0
        %948 = vmatprep.subr.mxu0 0.0
        %949 = vmatpush1.msra.mxu0 0.0
        %950 = vmatprep.subr.mxu0 0.0
        %951 = vmatpush1.msra.mxu0 0.0
        %952 = vmatprep.mubr.f32.mxu0 0.0
        %953 = vmatmul.mubr.f32.gmra.mrb[0].mxu0 %v886
        %v954 = vpop.f32.mrb[0].mxu0
        %v955 = vadd.f32 %v550, %v954
        %v956 = vpop.f32.mrb[0].mxu0
        %957 = vdwg.mxu0
        %v958 = vmax.f32 %v955, 0.0
        %v959 = vpack.c.bf16 %v958, %v958
        %s960 = scalar_lea.vmem [#allocation2], 8
        %v961 = vld [vmem:[%s960] sm:$0xf]
        %v962 = vsel %vm634, %v959, %v961
        %963 = vst [vmem:[%s960] sm:$0xf] %v962
        %v964 = vld [vmem:[%s807] sm:$0xf]
        %v965 = vld [vmem:[%s809] sm:$0xf]
        %s966 = scalar_lea.vmem %s333, 76
        %v967 = vld [vmem:[%s966] sm:$0xf]
        %s968 = scalar_lea.vmem %s333, 108
        %v969 = vld [vmem:[%s968] sm:$0xf]
        %s970 = scalar_lea.vmem %s333, 16
        %v971 = vld [vmem:[%s970] sm:$0xf]
        %s972 = scalar_lea.vmem %s333, 48
        %v973 = vld [vmem:[%s972] sm:$0xf]
        %v975 = vunpack.c.l.b16 %v965
        %v976 = vpack.c.b16 %v975, %v975
        %977 = vrot.lane.b32.xlu0 %v976, 4
        %v978 = vpop.permute.xlu0 %977
        %v980 = vunpack.c.l.b16 %v964
        %v981 = vpack.c.b16 %v980, %v980
        %v983 = vshrl.u32 %v981, 16
        %v985 = vshll.u32 %v981, 16
        %v987 = vrot.slane %v985, 1
        %v988 = vor.u32 %v983, %v987
        %989 = vrot.lane.b32.xlu0 %v988, 8
        %v990 = vpop.permute.xlu0 %989
        %v992 = vunpack.c.l.b16 %v967
        %v993 = vpack.c.b16 %v992, %v992
        %994 = vrot.lane.b32.xlu0 %v993, 12
        %v995 = vpop.permute.xlu0 %994
        %v997 = vunpack.c.l.b16 %v969
        %v998 = vpack.c.b16 %v997, %v997
        %999 = vrot.lane.b32.xlu0 %v998, 16
        %v1000 = vpop.permute.xlu0 %999
        %v1002 = vshrl.u32 %v993, 16
        %v1004 = vshll.u32 %v993, 16
        %v1006 = vrot.slane %v1004, 1
        %v1007 = vor.u32 %v1002, %v1006
        %1008 = vrot.lane.b32.xlu0 %v1007, 20
        %v1009 = vpop.permute.xlu0 %1008
        %v1011 = vunpack.c.l.b16 %v971
        %v1012 = vpack.c.b16 %v1011, %v1011
        %1013 = vrot.lane.b32.xlu0 %v1012, 24
        %v1014 = vpop.permute.xlu0 %1013
        %v1016 = vunpack.c.l.b16 %v973
        %v1017 = vpack.c.b16 %v1016, %v1016
        %1018 = vrot.lane.b32.xlu0 %v1017, 28
        %v1019 = vpop.permute.xlu0 %1018
        %v1021 = vshrl.u32 %v1012, 16
        %v1023 = vshll.u32 %v1012, 16
        %v1025 = vrot.slane %v1023, 1
        %v1026 = vor.u32 %v1021, %v1025
        %1027 = vrot.lane.b32.xlu0 %v1026, 32
        %v1028 = vpop.permute.xlu0 %1027
        %v1031 = vsel %vm519, %v964, %v978
        %v1033 = vsel %vm523, %v1031, %v990
        %v1035 = vsel %vm526, %v1033, %v995
        %v1037 = vsel %vm529, %v1035, %v1000
        %v1039 = vsel %vm532, %v1037, %v1009
        %v1041 = vsel %vm535, %v1039, %v1014
        %v1043 = vsel %vm538, %v1041, %v1019
        %v1045 = vsel %vm541, %v1043, %v1028
        %v1047 = vunpack.c.l.bf16 %v1045
        %v1049 = vsel %vm552, %v1047, 0
        %1051 = vmatprep.subr.mxu0 0.0
        %1052 = vmatpush1.msra.mxu0 %v336
        %1053 = vmatprep.subr.mxu0 0.0
        %1054 = vmatpush1.msra.mxu0 %v337
        %1055 = vmatprep.subr.mxu0 0.0
        %1056 = vmatpush1.msra.mxu0 %v338
        %1057 = vmatprep.subr.mxu0 0.0
        %1058 = vmatpush1.msra.mxu0 %v339
        %1059 = vmatprep.subr.mxu0 0.0
        %1060 = vmatpush1.msra.mxu0 %v558
        %1061 = vmatprep.subr.mxu0 0.0
        %1062 = vmatpush1.msra.mxu0 0.0
        %1063 = vmatprep.subr.mxu0 0.0
        %1064 = vmatpush1.msra.mxu0 0.0
        %1065 = vmatprep.subr.mxu0 0.0
        %1066 = vmatpush1.msra.mxu0 0.0
        %1067 = vmatprep.subr.mxu0 0.0
        %1068 = vmatpush1.msra.mxu0 0.0
        %1069 = vmatprep.subr.mxu0 0.0
        %1070 = vmatpush1.msra.mxu0 0.0
        %1071 = vmatprep.subr.mxu0 0.0
        %1072 = vmatpush1.msra.mxu0 0.0
        %1073 = vmatprep.subr.mxu0 0.0
        %1074 = vmatpush1.msra.mxu0 0.0
        %1075 = vmatprep.subr.mxu0 0.0
        %1076 = vmatpush1.msra.mxu0 0.0
        %1077 = vmatprep.subr.mxu0 0.0
        %1078 = vmatpush1.msra.mxu0 0.0
        %1079 = vmatprep.subr.mxu0 0.0
        %1080 = vmatpush1.msra.mxu0 0.0
        %1081 = vmatprep.subr.mxu0 0.0
        %1082 = vmatpush1.msra.mxu0 0.0
        %1083 = vmatprep.subr.mxu0 0.0
        %1084 = vmatpush1.msra.mxu0 0.0
        %1085 = vmatprep.subr.mxu0 0.0
        %1086 = vmatpush1.msra.mxu0 0.0
        %1087 = vmatprep.subr.mxu0 0.0
        %1088 = vmatpush1.msra.mxu0 0.0
        %1089 = vmatprep.subr.mxu0 0.0
        %1090 = vmatpush1.msra.mxu0 0.0
        %1091 = vmatprep.subr.mxu0 0.0
        %1092 = vmatpush1.msra.mxu0 0.0
        %1093 = vmatprep.subr.mxu0 0.0
        %1094 = vmatpush1.msra.mxu0 0.0
        %1095 = vmatprep.subr.mxu0 0.0
        %1096 = vmatpush1.msra.mxu0 0.0
        %1097 = vmatprep.subr.mxu0 0.0
        %1098 = vmatpush1.msra.mxu0 0.0
        %1099 = vmatprep.subr.mxu0 0.0
        %1100 = vmatpush1.msra.mxu0 0.0
        %1101 = vmatprep.subr.mxu0 0.0
        %1102 = vmatpush1.msra.mxu0 0.0
        %1103 = vmatprep.subr.mxu0 0.0
        %1104 = vmatpush1.msra.mxu0 0.0
        %1105 = vmatprep.subr.mxu0 0.0
        %1106 = vmatpush1.msra.mxu0 0.0
        %1107 = vmatprep.subr.mxu0 0.0
        %1108 = vmatpush1.msra.mxu0 0.0
        %1109 = vmatprep.subr.mxu0 0.0
        %1110 = vmatpush1.msra.mxu0 0.0
        %1111 = vmatprep.subr.mxu0 0.0
        %1112 = vmatpush1.msra.mxu0 0.0
        %1113 = vmatprep.subr.mxu0 0.0
        %1114 = vmatpush1.msra.mxu0 0.0
        %1115 = vmatprep.mubr.f32.mxu0 0.0
        %1116 = vmatmul.mubr.f32.gmra.mrb[0].mxu0 %v1049
        %v1117 = vpop.f32.mrb[0].mxu0
        %v1118 = vadd.f32 %v550, %v1117
        %v1119 = vpop.f32.mrb[0].mxu0
        %1120 = vdwg.mxu0
        %v1121 = vmax.f32 %v1118, 0.0
        %v1122 = vpack.c.bf16 %v1121, %v1121
        %s1123 = scalar_lea.vmem [#allocation2], 12
        %v1124 = vld [vmem:[%s1123] sm:$0xf]
        %v1125 = vsel %vm634, %v1122, %v1124
        %1126 = vst [vmem:[%s1123] sm:$0xf] %v1125
        %v1127 = vld [vmem:[%s970] sm:$0xf]
        %v1128 = vld [vmem:[%s972] sm:$0xf]
        %s1129 = scalar_lea.vmem %s333, 80
        %v1130 = vld [vmem:[%s1129] sm:$0xf]
        %s1131 = scalar_lea.vmem %s333, 112
        %v1132 = vld [vmem:[%s1131] sm:$0xf]
        %s1133 = scalar_lea.vmem %s333, 20
        %v1134 = vld [vmem:[%s1133] sm:$0xf]
        %s1135 = scalar_lea.vmem %s333, 52
        %v1136 = vld [vmem:[%s1135] sm:$0xf]
        %v1138 = vunpack.c.l.b16 %v1128
        %v1139 = vpack.c.b16 %v1138, %v1138
        %1140 = vrot.lane.b32.xlu0 %v1139, 4
        %v1141 = vpop.permute.xlu0 %1140
        %v1143 = vunpack.c.l.b16 %v1127
        %v1144 = vpack.c.b16 %v1143, %v1143
        %v1146 = vshrl.u32 %v1144, 16
        %v1148 = vshll.u32 %v1144, 16
        %v1150 = vrot.slane %v1148, 1
        %v1151 = vor.u32 %v1146, %v1150
        %1152 = vrot.lane.b32.xlu0 %v1151, 8
        %v1153 = vpop.permute.xlu0 %1152
        %v1155 = vunpack.c.l.b16 %v1130
        %v1156 = vpack.c.b16 %v1155, %v1155
        %1157 = vrot.lane.b32.xlu0 %v1156, 12
        %v1158 = vpop.permute.xlu0 %1157
        %v1160 = vunpack.c.l.b16 %v1132
        %v1161 = vpack.c.b16 %v1160, %v1160
        %1162 = vrot.lane.b32.xlu0 %v1161, 16
        %v1163 = vpop.permute.xlu0 %1162
        %v1165 = vshrl.u32 %v1156, 16
        %v1167 = vshll.u32 %v1156, 16
        %v1169 = vrot.slane %v1167, 1
        %v1170 = vor.u32 %v1165, %v1169
        %1171 = vrot.lane.b32.xlu0 %v1170, 20
        %v1172 = vpop.permute.xlu0 %1171
        %v1174 = vunpack.c.l.b16 %v1134
        %v1175 = vpack.c.b16 %v1174, %v1174
        %1176 = vrot.lane.b32.xlu0 %v1175, 24
        %v1177 = vpop.permute.xlu0 %1176
        %v1179 = vunpack.c.l.b16 %v1136
        %v1180 = vpack.c.b16 %v1179, %v1179
        %1181 = vrot.lane.b32.xlu0 %v1180, 28
        %v1182 = vpop.permute.xlu0 %1181
        %v1184 = vshrl.u32 %v1175, 16
        %v1186 = vshll.u32 %v1175, 16
        %v1188 = vrot.slane %v1186, 1
        %v1189 = vor.u32 %v1184, %v1188
        %1190 = vrot.lane.b32.xlu0 %v1189, 32
        %v1191 = vpop.permute.xlu0 %1190
        %v1194 = vsel %vm519, %v1127, %v1141
        %v1196 = vsel %vm523, %v1194, %v1153
        %v1198 = vsel %vm526, %v1196, %v1158
        %v1200 = vsel %vm529, %v1198, %v1163
        %v1202 = vsel %vm532, %v1200, %v1172
        %v1204 = vsel %vm535, %v1202, %v1177
        %v1206 = vsel %vm538, %v1204, %v1182
        %v1208 = vsel %vm541, %v1206, %v1191
        %v1210 = vunpack.c.l.bf16 %v1208
        %v1212 = vsel %vm552, %v1210, 0
        %1214 = vmatprep.subr.mxu0 0.0
        %1215 = vmatpush1.msra.mxu0 %v336
        %1216 = vmatprep.subr.mxu0 0.0
        %1217 = vmatpush1.msra.mxu0 %v337
        %1218 = vmatprep.subr.mxu0 0.0
        %1219 = vmatpush1.msra.mxu0 %v338
        %1220 = vmatprep.subr.mxu0 0.0
        %1221 = vmatpush1.msra.mxu0 %v339
        %1222 = vmatprep.subr.mxu0 0.0
        %1223 = vmatpush1.msra.mxu0 %v558
        %1224 = vmatprep.subr.mxu0 0.0
        %1225 = vmatpush1.msra.mxu0 0.0
        %1226 = vmatprep.subr.mxu0 0.0
        %1227 = vmatpush1.msra.mxu0 0.0
        %1228 = vmatprep.subr.mxu0 0.0
        %1229 = vmatpush1.msra.mxu0 0.0
        %1230 = vmatprep.subr.mxu0 0.0
        %1231 = vmatpush1.msra.mxu0 0.0
        %1232 = vmatprep.subr.mxu0 0.0
        %1233 = vmatpush1.msra.mxu0 0.0
        %1234 = vmatprep.subr.mxu0 0.0
        %1235 = vmatpush1.msra.mxu0 0.0
        %1236 = vmatprep.subr.mxu0 0.0
        %1237 = vmatpush1.msra.mxu0 0.0
        %1238 = vmatprep.subr.mxu0 0.0
        %1239 = vmatpush1.msra.mxu0 0.0
        %1240 = vmatprep.subr.mxu0 0.0
        %1241 = vmatpush1.msra.mxu0 0.0
        %1242 = vmatprep.subr.mxu0 0.0
        %1243 = vmatpush1.msra.mxu0 0.0
        %1244 = vmatprep.subr.mxu0 0.0
        %1245 = vmatpush1.msra.mxu0 0.0
        %1246 = vmatprep.subr.mxu0 0.0
        %1247 = vmatpush1.msra.mxu0 0.0
        %1248 = vmatprep.subr.mxu0 0.0
        %1249 = vmatpush1.msra.mxu0 0.0
        %1250 = vmatprep.subr.mxu0 0.0
        %1251 = vmatpush1.msra.mxu0 0.0
        %1252 = vmatprep.subr.mxu0 0.0
        %1253 = vmatpush1.msra.mxu0 0.0
        %1254 = vmatprep.subr.mxu0 0.0
        %1255 = vmatpush1.msra.mxu0 0.0
        %1256 = vmatprep.subr.mxu0 0.0
        %1257 = vmatpush1.msra.mxu0 0.0
        %1258 = vmatprep.subr.mxu0 0.0
        %1259 = vmatpush1.msra.mxu0 0.0
        %1260 = vmatprep.subr.mxu0 0.0
        %1261 = vmatpush1.msra.mxu0 0.0
        %1262 = vmatprep.subr.mxu0 0.0
        %1263 = vmatpush1.msra.mxu0 0.0
        %1264 = vmatprep.subr.mxu0 0.0
        %1265 = vmatpush1.msra.mxu0 0.0
        %1266 = vmatprep.subr.mxu0 0.0
        %1267 = vmatpush1.msra.mxu0 0.0
        %1268 = vmatprep.subr.mxu0 0.0
        %1269 = vmatpush1.msra.mxu0 0.0
        %1270 = vmatprep.subr.mxu0 0.0
        %1271 = vmatpush1.msra.mxu0 0.0
        %1272 = vmatprep.subr.mxu0 0.0
        %1273 = vmatpush1.msra.mxu0 0.0
        %1274 = vmatprep.subr.mxu0 0.0
        %1275 = vmatpush1.msra.mxu0 0.0
        %1276 = vmatprep.subr.mxu0 0.0
        %1277 = vmatpush1.msra.mxu0 0.0
        %1278 = vmatprep.mubr.f32.mxu0 0.0
        %1279 = vmatmul.mubr.f32.gmra.mrb[0].mxu0 %v1212
        %v1280 = vpop.f32.mrb[0].mxu0
        %v1281 = vadd.f32 %v550, %v1280
        %v1282 = vpop.f32.mrb[0].mxu0
        %1283 = vdwg.mxu0
        %v1284 = vmax.f32 %v1281, 0.0
        %v1285 = vpack.c.bf16 %v1284, %v1284
        %s1286 = scalar_lea.vmem [#allocation2], 16
        %v1287 = vld [vmem:[%s1286] sm:$0xf]
        %v1288 = vsel %vm634, %v1285, %v1287
        %1289 = vst [vmem:[%s1286] sm:$0xf] %v1288
        %v1290 = vld [vmem:[%s1133] sm:$0xf]
        %v1291 = vld [vmem:[%s1135] sm:$0xf]
        %s1292 = scalar_lea.vmem %s333, 84
        %v1293 = vld [vmem:[%s1292] sm:$0xf]
        %s1294 = scalar_lea.vmem %s333, 116
        %v1295 = vld [vmem:[%s1294] sm:$0xf]
        %s1296 = scalar_lea.vmem %s333, 24
        %v1297 = vld [vmem:[%s1296] sm:$0xf]
        %s1298 = scalar_lea.vmem %s333, 56
        %v1299 = vld [vmem:[%s1298] sm:$0xf]
        %v1301 = vunpack.c.l.b16 %v1291
        %v1302 = vpack.c.b16 %v1301, %v1301
        %1303 = vrot.lane.b32.xlu0 %v1302, 4
        %v1304 = vpop.permute.xlu0 %1303
        %v1306 = vunpack.c.l.b16 %v1290
        %v1307 = vpack.c.b16 %v1306, %v1306
        %v1309 = vshrl.u32 %v1307, 16
        %v1311 = vshll.u32 %v1307, 16
        %v1313 = vrot.slane %v1311, 1
        %v1314 = vor.u32 %v1309, %v1313
        %1315 = vrot.lane.b32.xlu0 %v1314, 8
        %v1316 = vpop.permute.xlu0 %1315
        %v1318 = vunpack.c.l.b16 %v1293
        %v1319 = vpack.c.b16 %v1318, %v1318
        %1320 = vrot.lane.b32.xlu0 %v1319, 12
        %v1321 = vpop.permute.xlu0 %1320
        %v1323 = vunpack.c.l.b16 %v1295
        %v1324 = vpack.c.b16 %v1323, %v1323
        %1325 = vrot.lane.b32.xlu0 %v1324, 16
        %v1326 = vpop.permute.xlu0 %1325
        %v1328 = vshrl.u32 %v1319, 16
        %v1330 = vshll.u32 %v1319, 16
        %v1332 = vrot.slane %v1330, 1
        %v1333 = vor.u32 %v1328, %v1332
        %1334 = vrot.lane.b32.xlu0 %v1333, 20
        %v1335 = vpop.permute.xlu0 %1334
        %v1337 = vunpack.c.l.b16 %v1297
        %v1338 = vpack.c.b16 %v1337, %v1337
        %1339 = vrot.lane.b32.xlu0 %v1338, 24
        %v1340 = vpop.permute.xlu0 %1339
        %v1342 = vunpack.c.l.b16 %v1299
        %v1343 = vpack.c.b16 %v1342, %v1342
        %1344 = vrot.lane.b32.xlu0 %v1343, 28
        %v1345 = vpop.permute.xlu0 %1344
        %v1347 = vshrl.u32 %v1338, 16
        %v1349 = vshll.u32 %v1338, 16
        %v1351 = vrot.slane %v1349, 1
        %v1352 = vor.u32 %v1347, %v1351
        %1353 = vrot.lane.b32.xlu0 %v1352, 32
        %v1354 = vpop.permute.xlu0 %1353
        %v1357 = vsel %vm519, %v1290, %v1304
        %v1359 = vsel %vm523, %v1357, %v1316
        %v1361 = vsel %vm526, %v1359, %v1321
        %v1363 = vsel %vm529, %v1361, %v1326
        %v1365 = vsel %vm532, %v1363, %v1335
        %v1367 = vsel %vm535, %v1365, %v1340
        %v1369 = vsel %vm538, %v1367, %v1345
        %v1371 = vsel %vm541, %v1369, %v1354
        %v1373 = vunpack.c.l.bf16 %v1371
        %v1375 = vsel %vm552, %v1373, 0
        %1377 = vmatprep.subr.mxu0 0.0
        %1378 = vmatpush1.msra.mxu0 %v336
        %1379 = vmatprep.subr.mxu0 0.0
        %1380 = vmatpush1.msra.mxu0 %v337
        %1381 = vmatprep.subr.mxu0 0.0
        %1382 = vmatpush1.msra.mxu0 %v338
        %1383 = vmatprep.subr.mxu0 0.0
        %1384 = vmatpush1.msra.mxu0 %v339
        %1385 = vmatprep.subr.mxu0 0.0
        %1386 = vmatpush1.msra.mxu0 %v558
        %1387 = vmatprep.subr.mxu0 0.0
        %1388 = vmatpush1.msra.mxu0 0.0
        %1389 = vmatprep.subr.mxu0 0.0
        %1390 = vmatpush1.msra.mxu0 0.0
        %1391 = vmatprep.subr.mxu0 0.0
        %1392 = vmatpush1.msra.mxu0 0.0
        %1393 = vmatprep.subr.mxu0 0.0
        %1394 = vmatpush1.msra.mxu0 0.0
        %1395 = vmatprep.subr.mxu0 0.0
        %1396 = vmatpush1.msra.mxu0 0.0
        %1397 = vmatprep.subr.mxu0 0.0
        %1398 = vmatpush1.msra.mxu0 0.0
        %1399 = vmatprep.subr.mxu0 0.0
        %1400 = vmatpush1.msra.mxu0 0.0
        %1401 = vmatprep.subr.mxu0 0.0
        %1402 = vmatpush1.msra.mxu0 0.0
        %1403 = vmatprep.subr.mxu0 0.0
        %1404 = vmatpush1.msra.mxu0 0.0
        %1405 = vmatprep.subr.mxu0 0.0
        %1406 = vmatpush1.msra.mxu0 0.0
        %1407 = vmatprep.subr.mxu0 0.0
        %1408 = vmatpush1.msra.mxu0 0.0
        %1409 = vmatprep.subr.mxu0 0.0
        %1410 = vmatpush1.msra.mxu0 0.0
        %1411 = vmatprep.subr.mxu0 0.0
        %1412 = vmatpush1.msra.mxu0 0.0
        %1413 = vmatprep.subr.mxu0 0.0
        %1414 = vmatpush1.msra.mxu0 0.0
        %1415 = vmatprep.subr.mxu0 0.0
        %1416 = vmatpush1.msra.mxu0 0.0
        %1417 = vmatprep.subr.mxu0 0.0
        %1418 = vmatpush1.msra.mxu0 0.0
        %1419 = vmatprep.subr.mxu0 0.0
        %1420 = vmatpush1.msra.mxu0 0.0
        %1421 = vmatprep.subr.mxu0 0.0
        %1422 = vmatpush1.msra.mxu0 0.0
        %1423 = vmatprep.subr.mxu0 0.0
        %1424 = vmatpush1.msra.mxu0 0.0
        %1425 = vmatprep.subr.mxu0 0.0
        %1426 = vmatpush1.msra.mxu0 0.0
        %1427 = vmatprep.subr.mxu0 0.0
        %1428 = vmatpush1.msra.mxu0 0.0
        %1429 = vmatprep.subr.mxu0 0.0
        %1430 = vmatpush1.msra.mxu0 0.0
        %1431 = vmatprep.subr.mxu0 0.0
        %1432 = vmatpush1.msra.mxu0 0.0
        %1433 = vmatprep.subr.mxu0 0.0
        %1434 = vmatpush1.msra.mxu0 0.0
        %1435 = vmatprep.subr.mxu0 0.0
        %1436 = vmatpush1.msra.mxu0 0.0
        %1437 = vmatprep.subr.mxu0 0.0
        %1438 = vmatpush1.msra.mxu0 0.0
        %1439 = vmatprep.subr.mxu0 0.0
        %1440 = vmatpush1.msra.mxu0 0.0
        %1441 = vmatprep.mubr.f32.mxu0 0.0
        %1442 = vmatmul.mubr.f32.gmra.mrb[0].mxu0 %v1375
        %v1443 = vpop.f32.mrb[0].mxu0
        %v1444 = vadd.f32 %v550, %v1443
        %v1445 = vpop.f32.mrb[0].mxu0
        %1446 = vdwg.mxu0
        %v1447 = vmax.f32 %v1444, 0.0
        %v1448 = vpack.c.bf16 %v1447, %v1447
        %s1449 = scalar_lea.vmem [#allocation2], 20
        %v1450 = vld [vmem:[%s1449] sm:$0xf]
        %v1451 = vsel %vm634, %v1448, %v1450
        %1452 = vst [vmem:[%s1449] sm:$0xf] %v1451
        %v1453 = vld [vmem:[%s1296] sm:$0xf]
        %v1454 = vld [vmem:[%s1298] sm:$0xf]
        %s1455 = scalar_lea.vmem %s333, 88
        %v1456 = vld [vmem:[%s1455] sm:$0xf]
        %s1457 = scalar_lea.vmem %s333, 120
        %v1458 = vld [vmem:[%s1457] sm:$0xf]
        %s1459 = scalar_lea.vmem %s333, 28
        %v1460 = vld [vmem:[%s1459] sm:$0xf]
        %s1461 = scalar_lea.vmem %s333, 60
        %v1462 = vld [vmem:[%s1461] sm:$0xf]
        %v1464 = vunpack.c.l.b16 %v1454
        %v1465 = vpack.c.b16 %v1464, %v1464
        %1466 = vrot.lane.b32.xlu0 %v1465, 4
        %v1467 = vpop.permute.xlu0 %1466
        %v1469 = vunpack.c.l.b16 %v1453
        %v1470 = vpack.c.b16 %v1469, %v1469
        %v1472 = vshrl.u32 %v1470, 16
        %v1474 = vshll.u32 %v1470, 16
        %v1476 = vrot.slane %v1474, 1
        %v1477 = vor.u32 %v1472, %v1476
        %1478 = vrot.lane.b32.xlu0 %v1477, 8
        %v1479 = vpop.permute.xlu0 %1478
        %v1481 = vunpack.c.l.b16 %v1456
        %v1482 = vpack.c.b16 %v1481, %v1481
        %1483 = vrot.lane.b32.xlu0 %v1482, 12
        %v1484 = vpop.permute.xlu0 %1483
        %v1486 = vunpack.c.l.b16 %v1458
        %v1487 = vpack.c.b16 %v1486, %v1486
        %1488 = vrot.lane.b32.xlu0 %v1487, 16
        %v1489 = vpop.permute.xlu0 %1488
        %v1491 = vshrl.u32 %v1482, 16
        %v1493 = vshll.u32 %v1482, 16
        %v1495 = vrot.slane %v1493, 1
        %v1496 = vor.u32 %v1491, %v1495
        %1497 = vrot.lane.b32.xlu0 %v1496, 20
        %v1498 = vpop.permute.xlu0 %1497
        %v1500 = vunpack.c.l.b16 %v1460
        %v1501 = vpack.c.b16 %v1500, %v1500
        %1502 = vrot.lane.b32.xlu0 %v1501, 24
        %v1503 = vpop.permute.xlu0 %1502
        %v1505 = vunpack.c.l.b16 %v1462
        %v1506 = vpack.c.b16 %v1505, %v1505
        %1507 = vrot.lane.b32.xlu0 %v1506, 28
        %v1508 = vpop.permute.xlu0 %1507
        %v1510 = vshrl.u32 %v1501, 16
        %v1512 = vshll.u32 %v1501, 16
        %v1514 = vrot.slane %v1512, 1
        %v1515 = vor.u32 %v1510, %v1514
        %1516 = vrot.lane.b32.xlu0 %v1515, 32
        %v1517 = vpop.permute.xlu0 %1516
        %v1520 = vsel %vm519, %v1453, %v1467
        %v1522 = vsel %vm523, %v1520, %v1479
        %v1524 = vsel %vm526, %v1522, %v1484
        %v1526 = vsel %vm529, %v1524, %v1489
        %v1528 = vsel %vm532, %v1526, %v1498
        %v1530 = vsel %vm535, %v1528, %v1503
        %v1532 = vsel %vm538, %v1530, %v1508
        %v1534 = vsel %vm541, %v1532, %v1517
        %v1536 = vunpack.c.l.bf16 %v1534
        %v1538 = vsel %vm552, %v1536, 0
        %1540 = vmatprep.subr.mxu0 0.0
        %1541 = vmatpush1.msra.mxu0 %v336
        %1542 = vmatprep.subr.mxu0 0.0
        %1543 = vmatpush1.msra.mxu0 %v337
        %1544 = vmatprep.subr.mxu0 0.0
        %1545 = vmatpush1.msra.mxu0 %v338
        %1546 = vmatprep.subr.mxu0 0.0
        %1547 = vmatpush1.msra.mxu0 %v339
        %1548 = vmatprep.subr.mxu0 0.0
        %1549 = vmatpush1.msra.mxu0 %v558
        %1550 = vmatprep.subr.mxu0 0.0
        %1551 = vmatpush1.msra.mxu0 0.0
        %1552 = vmatprep.subr.mxu0 0.0
        %1553 = vmatpush1.msra.mxu0 0.0
        %1554 = vmatprep.subr.mxu0 0.0
        %1555 = vmatpush1.msra.mxu0 0.0
        %1556 = vmatprep.subr.mxu0 0.0
        %1557 = vmatpush1.msra.mxu0 0.0
        %1558 = vmatprep.subr.mxu0 0.0
        %1559 = vmatpush1.msra.mxu0 0.0
        %1560 = vmatprep.subr.mxu0 0.0
        %1561 = vmatpush1.msra.mxu0 0.0
        %1562 = vmatprep.subr.mxu0 0.0
        %1563 = vmatpush1.msra.mxu0 0.0
        %1564 = vmatprep.subr.mxu0 0.0
        %1565 = vmatpush1.msra.mxu0 0.0
        %1566 = vmatprep.subr.mxu0 0.0
        %1567 = vmatpush1.msra.mxu0 0.0
        %1568 = vmatprep.subr.mxu0 0.0
        %1569 = vmatpush1.msra.mxu0 0.0
        %1570 = vmatprep.subr.mxu0 0.0
        %1571 = vmatpush1.msra.mxu0 0.0
        %1572 = vmatprep.subr.mxu0 0.0
        %1573 = vmatpush1.msra.mxu0 0.0
        %1574 = vmatprep.subr.mxu0 0.0
        %1575 = vmatpush1.msra.mxu0 0.0
        %1576 = vmatprep.subr.mxu0 0.0
        %1577 = vmatpush1.msra.mxu0 0.0
        %1578 = vmatprep.subr.mxu0 0.0
        %1579 = vmatpush1.msra.mxu0 0.0
        %1580 = vmatprep.subr.mxu0 0.0
        %1581 = vmatpush1.msra.mxu0 0.0
        %1582 = vmatprep.subr.mxu0 0.0
        %1583 = vmatpush1.msra.mxu0 0.0
        %1584 = vmatprep.subr.mxu0 0.0
        %1585 = vmatpush1.msra.mxu0 0.0
        %1586 = vmatprep.subr.mxu0 0.0
        %1587 = vmatpush1.msra.mxu0 0.0
        %1588 = vmatprep.subr.mxu0 0.0
        %1589 = vmatpush1.msra.mxu0 0.0
        %1590 = vmatprep.subr.mxu0 0.0
        %1591 = vmatpush1.msra.mxu0 0.0
        %1592 = vmatprep.subr.mxu0 0.0
        %1593 = vmatpush1.msra.mxu0 0.0
        %1594 = vmatprep.subr.mxu0 0.0
        %1595 = vmatpush1.msra.mxu0 0.0
        %1596 = vmatprep.subr.mxu0 0.0
        %1597 = vmatpush1.msra.mxu0 0.0
        %1598 = vmatprep.subr.mxu0 0.0
        %1599 = vmatpush1.msra.mxu0 0.0
        %1600 = vmatprep.subr.mxu0 0.0
        %1601 = vmatpush1.msra.mxu0 0.0
        %1602 = vmatprep.subr.mxu0 0.0
        %1603 = vmatpush1.msra.mxu0 0.0
        %1604 = vmatprep.mubr.f32.mxu0 0.0
        %1605 = vmatmul.mubr.f32.gmra.mrb[0].mxu0 %v1538
        %v1606 = vpop.f32.mrb[0].mxu0
        %v1607 = vadd.f32 %v550, %v1606
        %v1608 = vpop.f32.mrb[0].mxu0
        %1609 = vdwg.mxu0
        %v1610 = vmax.f32 %v1607, 0.0
        %v1611 = vpack.c.bf16 %v1610, %v1610
        %s1612 = scalar_lea.vmem [#allocation2], 24
        %v1613 = vld [vmem:[%s1612] sm:$0xf]
        %v1614 = vsel %vm634, %v1611, %v1613
        %1615 = vst [vmem:[%s1612] sm:$0xf] %v1614
        %v1616 = vld [vmem:[#allocation2] sm:$0xf]
        %v1617 = vld [vmem:[%s797] sm:$0xf]
        %v1618 = vld [vmem:[%s960] sm:$0xf]
        %v1620 = vunpack.c.l.b16 %v1616
        %v1621 = vpack.c.b16 %v1620, %v1620
        %v1623 = vshrl.u32 %v1621, 16
        %v1625 = vshll.u32 %v1621, 16
        %v1627 = vrot.slane %v1625, 1
        %v1628 = vor.u32 %v1623, %v1627
        %1629 = vrot.lane.b32.xlu0 %v1628, 32
        %v1630 = vpop.permute.xlu0 %1629
        %v1631 = vrot.slane %v1621, 1
        %1632 = vrot.lane.b32.xlu0 %v1631, 64
        %v1633 = vpop.permute.xlu0 %1632
        %v1635 = vunpack.c.l.b16 %v1617
        %v1636 = vpack.c.b16 %v1635, %v1635
        %1637 = vrot.lane.b32.xlu0 %v1636, 96
        %v1638 = vpop.permute.xlu0 %1637
        %v1640 = vshrl.u32 %v1636, 16
        %v1642 = vshll.u32 %v1636, 16
        %v1644 = vrot.slane %v1642, 1
        %v1645 = vor.u32 %v1640, %v1644
        %v1646 = vrot.slane %v1636, 1
        %1647 = vrot.lane.b32.xlu0 %v1646, 32
        %v1648 = vpop.permute.xlu0 %1647
        %v1650 = vunpack.c.l.b16 %v1618
        %v1651 = vpack.c.b16 %v1650, %v1650
        %1652 = vrot.lane.b32.xlu0 %v1651, 64
        %v1653 = vpop.permute.xlu0 %1652
        %v1655 = vshrl.u32 %v1651, 16
        %v1657 = vshll.u32 %v1651, 16
        %v1659 = vrot.slane %v1657, 1
        %v1660 = vor.u32 %v1655, %v1659
        %1661 = vrot.lane.b32.xlu0 %v1660, 96
        %v1662 = vpop.permute.xlu0 %1661
        %v1663 = vrot.slane %v1651, 1
        %v1666 = vsel %vm541, %v1616, %v1630
        %vm1667 = vcmask 523264
        %v1669 = vsel %vm1667, %v1666, %v1633
        %vm1670 = vcmask 785408
        %v1672 = vsel %vm1670, %v1669, %v1638
        %v1676 = vsel %vm541, %v1645, %v1648
        %v1678 = vsel %vm1667, %v1676, %v1653
        %v1680 = vsel %vm1670, %v1678, %v1662
        %v1683 = vlaneseq
        %v1684 = vshrl.u32 %v1683, 7
        %v1685 = vsub.s32 0, %v1684
        %v1686 = vrot.slane %v378, %v1685
        %v1724 = vunpack.c.l.b16 %v342
        %v1725 = vunpack.c.l.b16 %v343
        %v1726 = vunpack.c.l.b16 %v344
        %v1727 = vunpack.c.l.b16 %v345
        %v1728 = vunpack.c.l.b16 %v346
        %v1729 = vunpack.c.l.b16 %v347
        %v1730 = vunpack.c.l.b16 %v348
        %v1731 = vunpack.c.l.b16 %v349
        %v1732 = vunpack.c.l.b16 %v350
        %v1733 = vunpack.c.l.b16 %v351
        %v1734 = vunpack.c.l.b16 %v352
        %v1735 = vunpack.c.l.b16 %v353
        %v1736 = vunpack.c.l.b16 %v354
        %v1737 = vunpack.c.l.b16 %v355
        %v1738 = vunpack.c.l.b16 %v356
        %v1739 = vunpack.c.l.b16 %v357
        %v1740 = vunpack.c.l.b16 %v358
        %v1741 = vunpack.c.l.b16 %v359
        %v1742 = vunpack.c.l.b16 %v360
        %v1743 = vunpack.c.l.b16 %v361
        %v1744 = vunpack.c.l.b16 %v362
        %v1745 = vunpack.c.l.b16 %v363
        %v1746 = vunpack.c.l.b16 %v364
        %v1747 = vunpack.c.l.b16 %v365
        %v1748 = vunpack.c.l.b16 %v366
        %v1749 = vunpack.c.l.b16 %v367
        %v1750 = vunpack.c.l.b16 %v368
        %v1751 = vunpack.c.l.b16 %v369
        %v1752 = vunpack.c.l.b16 %v370
        %v1753 = vunpack.c.l.b16 %v371
        %v1754 = vunpack.c.l.b16 %v372
        %v1755 = vunpack.c.l.b16 %v373
        %v1756 = vunpack.c.l.b16 %v374
        %v1757 = vunpack.c.l.b16 %v375
        %v1758 = vunpack.c.l.b16 %v376
        %v1759 = vunpack.c.l.b16 %v377
        %v1760 = vpack.c.b16 %v1725, %v1724
        %v1761 = vpack.c.b16 %v1727, %v1726
        %v1762 = vpack.c.b16 %v1729, %v1728
        %v1763 = vpack.c.b16 %v1731, %v1730
        %v1764 = vpack.c.b16 %v1733, %v1732
        %v1765 = vpack.c.b16 %v1735, %v1734
        %v1766 = vpack.c.b16 %v1737, %v1736
        %v1767 = vpack.c.b16 %v1739, %v1738
        %v1768 = vpack.c.b16 %v1741, %v1740
        %v1769 = vpack.c.b16 %v1743, %v1742
        %v1770 = vpack.c.b16 %v1745, %v1744
        %v1771 = vpack.c.b16 %v1747, %v1746
        %v1772 = vpack.c.b16 %v1749, %v1748
        %v1773 = vpack.c.b16 %v1751, %v1750
        %v1774 = vpack.c.b16 %v1753, %v1752
        %v1775 = vpack.c.b16 %v1755, %v1754
        %v1776 = vpack.c.b16 %v1757, %v1756
        %v1777 = vpack.c.b16 %v1759, %v1758
        %v1797 = vsel %vm541, %v1663, 0
        %1799 = vmatprep.subr.bf16.mxu0 0
        %1800 = vmatpush1.bf16.msra.mxu0 %v1760
        %1801 = vmatprep.subr.bf16.mxu0 0
        %1802 = vmatpush1.bf16.msra.mxu0 %v1761
        %1803 = vmatprep.subr.bf16.mxu0 0
        %1804 = vmatpush1.bf16.msra.mxu0 %v1762
        %1805 = vmatprep.subr.bf16.mxu0 0
        %1806 = vmatpush1.bf16.msra.mxu0 %v1763
        %1807 = vmatprep.subr.bf16.mxu0 0
        %1808 = vmatpush1.bf16.msra.mxu0 %v1764
        %1809 = vmatprep.subr.bf16.mxu0 0
        %1810 = vmatpush1.bf16.msra.mxu0 %v1765
        %1811 = vmatprep.subr.bf16.mxu0 0
        %1812 = vmatpush1.bf16.msra.mxu0 %v1766
        %1813 = vmatprep.subr.bf16.mxu0 0
        %1814 = vmatpush1.bf16.msra.mxu0 %v1767
        %1815 = vmatprep.subr.bf16.mxu0 0
        %1816 = vmatpush1.bf16.msra.mxu0 %v1768
        %1817 = vmatprep.subr.bf16.mxu0 0
        %1818 = vmatpush1.bf16.msra.mxu0 %v1769
        %1819 = vmatprep.subr.bf16.mxu0 0
        %1820 = vmatpush1.bf16.msra.mxu0 %v1770
        %1821 = vmatprep.subr.bf16.mxu0 0
        %1822 = vmatpush1.bf16.msra.mxu0 %v1771
        %1823 = vmatprep.subr.bf16.mxu0 0
        %1824 = vmatpush1.bf16.msra.mxu0 %v1772
        %1825 = vmatprep.subr.bf16.mxu0 0
        %1826 = vmatpush1.bf16.msra.mxu0 %v1773
        %1827 = vmatprep.subr.bf16.mxu0 0
        %1828 = vmatpush1.bf16.msra.mxu0 %v1774
        %1829 = vmatprep.subr.bf16.mxu0 0
        %1830 = vmatpush1.bf16.msra.mxu0 %v1775
        %1831 = vmatprep.mubr.bf16.mxu0 %v1680
        %1832 = vmatmul.mubr.bf16.gmra.mrb[0].mxu0 %v1672
        %v1833 = vpop.f32.mrb[0].mxu0
        %v1834 = vadd.f32 %v1686, %v1833
        %v1835 = vpop.f32.mrb[0].mxu0
        %v1836 = vpop.f32.mrb[0].mxu0
        %v1837 = vpop.f32.mrb[0].mxu0
        %1838 = vdwg.mxu0
        %1839 = vmatprep.subr.bf16.mxu0 0
        %1840 = vmatpush1.bf16.msra.mxu0 %v1776
        %1841 = vmatprep.subr.bf16.mxu0 0
        %1842 = vmatpush1.bf16.msra.mxu0 %v1777
        %1843 = vmatprep.subr.bf16.mxu0 0
        %1844 = vmatpush1.bf16.msra.mxu0 0
        %1845 = vmatprep.subr.bf16.mxu0 0
        %1846 = vmatpush1.bf16.msra.mxu0 0
        %1847 = vmatprep.subr.bf16.mxu0 0
        %1848 = vmatpush1.bf16.msra.mxu0 0
        %1849 = vmatprep.subr.bf16.mxu0 0
        %1850 = vmatpush1.bf16.msra.mxu0 0
        %1851 = vmatprep.subr.bf16.mxu0 0
        %1852 = vmatpush1.bf16.msra.mxu0 0
        %1853 = vmatprep.subr.bf16.mxu0 0
        %1854 = vmatpush1.bf16.msra.mxu0 0
        %1855 = vmatprep.subr.bf16.mxu0 0
        %1856 = vmatpush1.bf16.msra.mxu0 0
        %1857 = vmatprep.subr.bf16.mxu0 0
        %1858 = vmatpush1.bf16.msra.mxu0 0
        %1859 = vmatprep.subr.bf16.mxu0 0
        %1860 = vmatpush1.bf16.msra.mxu0 0
        %1861 = vmatprep.subr.bf16.mxu0 0
        %1862 = vmatpush1.bf16.msra.mxu0 0
        %1863 = vmatprep.subr.bf16.mxu0 0
        %1864 = vmatpush1.bf16.msra.mxu0 0
        %1865 = vmatprep.subr.bf16.mxu0 0
        %1866 = vmatpush1.bf16.msra.mxu0 0
        %1867 = vmatprep.subr.bf16.mxu0 0
        %1868 = vmatpush1.bf16.msra.mxu0 0
        %1869 = vmatprep.subr.bf16.mxu0 0
        %1870 = vmatpush1.bf16.msra.mxu0 0
        %1871 = vmatprep.mubr.bf16.mxu0 0
        %1872 = vmatmul.mubr.bf16.gmra.mrb[0].mxu0 %v1797
        %v1873 = vpop.f32.mrb[0].mxu0
        %v1874 = vadd.f32 %v1834, %v1873
        %v1875 = vpop.f32.mrb[0].mxu0
        %v1876 = vpop.f32.mrb[0].mxu0
        %v1877 = vpop.f32.mrb[0].mxu0
        %1878 = vdwg.mxu0
        %v1879 = vmax.f32 %v1874, 0.0
        %v1880 = vpack.c.bf16 %v1879, %v1879
        %vm1881 = vcmask 256000
        %vm1882 = vsmask.f32 2304
        %vm1883 = vmand %vm1881, %vm1882
        %v1884 = vld [vmem:[#allocation3] sm:$0x7]
        %v1885 = vsel %vm1883, %v1880, %v1884
        %1886 = vst [vmem:[#allocation3] sm:$0x7] %v1885
        %v1887 = vld [vmem:[%s797] sm:$0xf]
        %v1888 = vld [vmem:[%s960] sm:$0xf]
        %v1889 = vld [vmem:[%s1123] sm:$0xf]
        %v1891 = vunpack.c.l.b16 %v1887
        %v1892 = vpack.c.b16 %v1891, %v1891
        %v1894 = vshrl.u32 %v1892, 16
        %v1896 = vshll.u32 %v1892, 16
        %v1898 = vrot.slane %v1896, 1
        %v1899 = vor.u32 %v1894, %v1898
        %1900 = vrot.lane.b32.xlu0 %v1899, 32
        %v1901 = vpop.permute.xlu0 %1900
        %v1902 = vrot.slane %v1892, 1
        %1903 = vrot.lane.b32.xlu0 %v1902, 64
        %v1904 = vpop.permute.xlu0 %1903
        %v1906 = vunpack.c.l.b16 %v1888
        %v1907 = vpack.c.b16 %v1906, %v1906
        %1908 = vrot.lane.b32.xlu0 %v1907, 96
        %v1909 = vpop.permute.xlu0 %1908
        %v1911 = vshrl.u32 %v1907, 16
        %v1913 = vshll.u32 %v1907, 16
        %v1915 = vrot.slane %v1913, 1
        %v1916 = vor.u32 %v1911, %v1915
        %v1917 = vrot.slane %v1907, 1
        %1918 = vrot.lane.b32.xlu0 %v1917, 32
        %v1919 = vpop.permute.xlu0 %1918
        %v1921 = vunpack.c.l.b16 %v1889
        %v1922 = vpack.c.b16 %v1921, %v1921
        %1923 = vrot.lane.b32.xlu0 %v1922, 64
        %v1924 = vpop.permute.xlu0 %1923
        %v1926 = vshrl.u32 %v1922, 16
        %v1928 = vshll.u32 %v1922, 16
        %v1930 = vrot.slane %v1928, 1
        %v1931 = vor.u32 %v1926, %v1930
        %1932 = vrot.lane.b32.xlu0 %v1931, 96
        %v1933 = vpop.permute.xlu0 %1932
        %v1934 = vrot.slane %v1922, 1
        %v1937 = vsel %vm541, %v1887, %v1901
        %v1939 = vsel %vm1667, %v1937, %v1904
        %v1941 = vsel %vm1670, %v1939, %v1909
        %v1945 = vsel %vm541, %v1916, %v1919
        %v1947 = vsel %vm1667, %v1945, %v1924
        %v1949 = vsel %vm1670, %v1947, %v1933
        %v1952 = vsel %vm541, %v1934, 0
        %1954 = vmatprep.subr.bf16.mxu0 0
        %1955 = vmatpush1.bf16.msra.mxu0 %v1760
        %1956 = vmatprep.subr.bf16.mxu0 0
        %1957 = vmatpush1.bf16.msra.mxu0 %v1761
        %1958 = vmatprep.subr.bf16.mxu0 0
        %1959 = vmatpush1.bf16.msra.mxu0 %v1762
        %1960 = vmatprep.subr.bf16.mxu0 0
        %1961 = vmatpush1.bf16.msra.mxu0 %v1763
        %1962 = vmatprep.subr.bf16.mxu0 0
        %1963 = vmatpush1.bf16.msra.mxu0 %v1764
        %1964 = vmatprep.subr.bf16.mxu0 0
        %1965 = vmatpush1.bf16.msra.mxu0 %v1765
        %1966 = vmatprep.subr.bf16.mxu0 0
        %1967 = vmatpush1.bf16.msra.mxu0 %v1766
        %1968 = vmatprep.subr.bf16.mxu0 0
        %1969 = vmatpush1.bf16.msra.mxu0 %v1767
        %1970 = vmatprep.subr.bf16.mxu0 0
        %1971 = vmatpush1.bf16.msra.mxu0 %v1768
        %1972 = vmatprep.subr.bf16.mxu0 0
        %1973 = vmatpush1.bf16.msra.mxu0 %v1769
        %1974 = vmatprep.subr.bf16.mxu0 0
        %1975 = vmatpush1.bf16.msra.mxu0 %v1770
        %1976 = vmatprep.subr.bf16.mxu0 0
        %1977 = vmatpush1.bf16.msra.mxu0 %v1771
        %1978 = vmatprep.subr.bf16.mxu0 0
        %1979 = vmatpush1.bf16.msra.mxu0 %v1772
        %1980 = vmatprep.subr.bf16.mxu0 0
        %1981 = vmatpush1.bf16.msra.mxu0 %v1773
        %1982 = vmatprep.subr.bf16.mxu0 0
        %1983 = vmatpush1.bf16.msra.mxu0 %v1774
        %1984 = vmatprep.subr.bf16.mxu0 0
        %1985 = vmatpush1.bf16.msra.mxu0 %v1775
        %1986 = vmatprep.mubr.bf16.mxu0 %v1949
        %1987 = vmatmul.mubr.bf16.gmra.mrb[0].mxu0 %v1941
        %v1988 = vpop.f32.mrb[0].mxu0
        %v1989 = vadd.f32 %v1686, %v1988
        %v1990 = vpop.f32.mrb[0].mxu0
        %v1991 = vpop.f32.mrb[0].mxu0
        %v1992 = vpop.f32.mrb[0].mxu0
        %1993 = vdwg.mxu0
        %1994 = vmatprep.subr.bf16.mxu0 0
        %1995 = vmatpush1.bf16.msra.mxu0 %v1776
        %1996 = vmatprep.subr.bf16.mxu0 0
        %1997 = vmatpush1.bf16.msra.mxu0 %v1777
        %1998 = vmatprep.subr.bf16.mxu0 0
        %1999 = vmatpush1.bf16.msra.mxu0 0
        %2000 = vmatprep.subr.bf16.mxu0 0
        %2001 = vmatpush1.bf16.msra.mxu0 0
        %2002 = vmatprep.subr.bf16.mxu0 0
        %2003 = vmatpush1.bf16.msra.mxu0 0
        %2004 = vmatprep.subr.bf16.mxu0 0
        %2005 = vmatpush1.bf16.msra.mxu0 0
        %2006 = vmatprep.subr.bf16.mxu0 0
        %2007 = vmatpush1.bf16.msra.mxu0 0
        %2008 = vmatprep.subr.bf16.mxu0 0
        %2009 = vmatpush1.bf16.msra.mxu0 0
        %2010 = vmatprep.subr.bf16.mxu0 0
        %2011 = vmatpush1.bf16.msra.mxu0 0
        %2012 = vmatprep.subr.bf16.mxu0 0
        %2013 = vmatpush1.bf16.msra.mxu0 0
        %2014 = vmatprep.subr.bf16.mxu0 0
        %2015 = vmatpush1.bf16.msra.mxu0 0
        %2016 = vmatprep.subr.bf16.mxu0 0
        %2017 = vmatpush1.bf16.msra.mxu0 0
        %2018 = vmatprep.subr.bf16.mxu0 0
        %2019 = vmatpush1.bf16.msra.mxu0 0
        %2020 = vmatprep.subr.bf16.mxu0 0
        %2021 = vmatpush1.bf16.msra.mxu0 0
        %2022 = vmatprep.subr.bf16.mxu0 0
        %2023 = vmatpush1.bf16.msra.mxu0 0
        %2024 = vmatprep.subr.bf16.mxu0 0
        %2025 = vmatpush1.bf16.msra.mxu0 0
        %2026 = vmatprep.mubr.bf16.mxu0 0
        %2027 = vmatmul.mubr.bf16.gmra.mrb[0].mxu0 %v1952
        %v2028 = vpop.f32.mrb[0].mxu0
        %v2029 = vadd.f32 %v1989, %v2028
        %v2030 = vpop.f32.mrb[0].mxu0
        %v2031 = vpop.f32.mrb[0].mxu0
        %v2032 = vpop.f32.mrb[0].mxu0
        %2033 = vdwg.mxu0
        %v2034 = vmax.f32 %v2029, 0.0
        %v2035 = vpack.c.bf16 %v2034, %v2034
        %s2036 = scalar_lea.vmem [#allocation3], 4
        %v2037 = vld [vmem:[%s2036] sm:$0x7]
        %v2038 = vsel %vm1883, %v2035, %v2037
        %2039 = vst [vmem:[%s2036] sm:$0x7] %v2038
        %v2040 = vld [vmem:[%s960] sm:$0xf]
        %v2041 = vld [vmem:[%s1123] sm:$0xf]
        %v2042 = vld [vmem:[%s1286] sm:$0xf]
        %v2044 = vunpack.c.l.b16 %v2040
        %v2045 = vpack.c.b16 %v2044, %v2044
        %v2047 = vshrl.u32 %v2045, 16
        %v2049 = vshll.u32 %v2045, 16
        %v2051 = vrot.slane %v2049, 1
        %v2052 = vor.u32 %v2047, %v2051
        %2053 = vrot.lane.b32.xlu0 %v2052, 32
        %v2054 = vpop.permute.xlu0 %2053
        %v2055 = vrot.slane %v2045, 1
        %2056 = vrot.lane.b32.xlu0 %v2055, 64
        %v2057 = vpop.permute.xlu0 %2056
        %v2059 = vunpack.c.l.b16 %v2041
        %v2060 = vpack.c.b16 %v2059, %v2059
        %2061 = vrot.lane.b32.xlu0 %v2060, 96
        %v2062 = vpop.permute.xlu0 %2061
        %v2064 = vshrl.u32 %v2060, 16
        %v2066 = vshll.u32 %v2060, 16
        %v2068 = vrot.slane %v2066, 1
        %v2069 = vor.u32 %v2064, %v2068
        %v2070 = vrot.slane %v2060, 1
        %2071 = vrot.lane.b32.xlu0 %v2070, 32
        %v2072 = vpop.permute.xlu0 %2071
        %v2074 = vunpack.c.l.b16 %v2042
        %v2075 = vpack.c.b16 %v2074, %v2074
        %2076 = vrot.lane.b32.xlu0 %v2075, 64
        %v2077 = vpop.permute.xlu0 %2076
        %v2079 = vshrl.u32 %v2075, 16
        %v2081 = vshll.u32 %v2075, 16
        %v2083 = vrot.slane %v2081, 1
        %v2084 = vor.u32 %v2079, %v2083
        %2085 = vrot.lane.b32.xlu0 %v2084, 96
        %v2086 = vpop.permute.xlu0 %2085
        %v2087 = vrot.slane %v2075, 1
        %v2090 = vsel %vm541, %v2040, %v2054
        %v2092 = vsel %vm1667, %v2090, %v2057
        %v2094 = vsel %vm1670, %v2092, %v2062
        %v2098 = vsel %vm541, %v2069, %v2072
        %v2100 = vsel %vm1667, %v2098, %v2077
        %v2102 = vsel %vm1670, %v2100, %v2086
        %v2105 = vsel %vm541, %v2087, 0
        %2107 = vmatprep.subr.bf16.mxu0 0
        %2108 = vmatpush1.bf16.msra.mxu0 %v1760
        %2109 = vmatprep.subr.bf16.mxu0 0
        %2110 = vmatpush1.bf16.msra.mxu0 %v1761
        %2111 = vmatprep.subr.bf16.mxu0 0
        %2112 = vmatpush1.bf16.msra.mxu0 %v1762
        %2113 = vmatprep.subr.bf16.mxu0 0
        %2114 = vmatpush1.bf16.msra.mxu0 %v1763
        %2115 = vmatprep.subr.bf16.mxu0 0
        %2116 = vmatpush1.bf16.msra.mxu0 %v1764
        %2117 = vmatprep.subr.bf16.mxu0 0
        %2118 = vmatpush1.bf16.msra.mxu0 %v1765
        %2119 = vmatprep.subr.bf16.mxu0 0
        %2120 = vmatpush1.bf16.msra.mxu0 %v1766
        %2121 = vmatprep.subr.bf16.mxu0 0
        %2122 = vmatpush1.bf16.msra.mxu0 %v1767
        %2123 = vmatprep.subr.bf16.mxu0 0
        %2124 = vmatpush1.bf16.msra.mxu0 %v1768
        %2125 = vmatprep.subr.bf16.mxu0 0
        %2126 = vmatpush1.bf16.msra.mxu0 %v1769
        %2127 = vmatprep.subr.bf16.mxu0 0
        %2128 = vmatpush1.bf16.msra.mxu0 %v1770
        %2129 = vmatprep.subr.bf16.mxu0 0
        %2130 = vmatpush1.bf16.msra.mxu0 %v1771
        %2131 = vmatprep.subr.bf16.mxu0 0
        %2132 = vmatpush1.bf16.msra.mxu0 %v1772
        %2133 = vmatprep.subr.bf16.mxu0 0
        %2134 = vmatpush1.bf16.msra.mxu0 %v1773
        %2135 = vmatprep.subr.bf16.mxu0 0
        %2136 = vmatpush1.bf16.msra.mxu0 %v1774
        %2137 = vmatprep.subr.bf16.mxu0 0
        %2138 = vmatpush1.bf16.msra.mxu0 %v1775
        %2139 = vmatprep.mubr.bf16.mxu0 %v2102
        %2140 = vmatmul.mubr.bf16.gmra.mrb[0].mxu0 %v2094
        %v2141 = vpop.f32.mrb[0].mxu0
        %v2142 = vadd.f32 %v1686, %v2141
        %v2143 = vpop.f32.mrb[0].mxu0
        %v2144 = vpop.f32.mrb[0].mxu0
        %v2145 = vpop.f32.mrb[0].mxu0
        %2146 = vdwg.mxu0
        %2147 = vmatprep.subr.bf16.mxu0 0
        %2148 = vmatpush1.bf16.msra.mxu0 %v1776
        %2149 = vmatprep.subr.bf16.mxu0 0
        %2150 = vmatpush1.bf16.msra.mxu0 %v1777
        %2151 = vmatprep.subr.bf16.mxu0 0
        %2152 = vmatpush1.bf16.msra.mxu0 0
        %2153 = vmatprep.subr.bf16.mxu0 0
        %2154 = vmatpush1.bf16.msra.mxu0 0
        %2155 = vmatprep.subr.bf16.mxu0 0
        %2156 = vmatpush1.bf16.msra.mxu0 0
        %2157 = vmatprep.subr.bf16.mxu0 0
        %2158 = vmatpush1.bf16.msra.mxu0 0
        %2159 = vmatprep.subr.bf16.mxu0 0
        %2160 = vmatpush1.bf16.msra.mxu0 0
        %2161 = vmatprep.subr.bf16.mxu0 0
        %2162 = vmatpush1.bf16.msra.mxu0 0
        %2163 = vmatprep.subr.bf16.mxu0 0
        %2164 = vmatpush1.bf16.msra.mxu0 0
        %2165 = vmatprep.subr.bf16.mxu0 0
        %2166 = vmatpush1.bf16.msra.mxu0 0
        %2167 = vmatprep.subr.bf16.mxu0 0
        %2168 = vmatpush1.bf16.msra.mxu0 0
        %2169 = vmatprep.subr.bf16.mxu0 0
        %2170 = vmatpush1.bf16.msra.mxu0 0
        %2171 = vmatprep.subr.bf16.mxu0 0
        %2172 = vmatpush1.bf16.msra.mxu0 0
        %2173 = vmatprep.subr.bf16.mxu0 0
        %2174 = vmatpush1.bf16.msra.mxu0 0
        %2175 = vmatprep.subr.bf16.mxu0 0
        %2176 = vmatpush1.bf16.msra.mxu0 0
        %2177 = vmatprep.subr.bf16.mxu0 0
        %2178 = vmatpush1.bf16.msra.mxu0 0
        %2179 = vmatprep.mubr.bf16.mxu0 0
        %2180 = vmatmul.mubr.bf16.gmra.mrb[0].mxu0 %v2105
        %v2181 = vpop.f32.mrb[0].mxu0
        %v2182 = vadd.f32 %v2142, %v2181
        %v2183 = vpop.f32.mrb[0].mxu0
        %v2184 = vpop.f32.mrb[0].mxu0
        %v2185 = vpop.f32.mrb[0].mxu0
        %2186 = vdwg.mxu0
        %v2187 = vmax.f32 %v2182, 0.0
        %v2188 = vpack.c.bf16 %v2187, %v2187
        %s2189 = scalar_lea.vmem [#allocation3], 8
        %v2190 = vld [vmem:[%s2189] sm:$0x7]
        %v2191 = vsel %vm1883, %v2188, %v2190
        %2192 = vst [vmem:[%s2189] sm:$0x7] %v2191
        %v2193 = vld [vmem:[%s1123] sm:$0xf]
        %v2194 = vld [vmem:[%s1286] sm:$0xf]
        %v2195 = vld [vmem:[%s1449] sm:$0xf]
        %v2197 = vunpack.c.l.b16 %v2193
        %v2198 = vpack.c.b16 %v2197, %v2197
        %v2200 = vshrl.u32 %v2198, 16
        %v2202 = vshll.u32 %v2198, 16
        %v2204 = vrot.slane %v2202, 1
        %v2205 = vor.u32 %v2200, %v2204
        %2206 = vrot.lane.b32.xlu0 %v2205, 32
        %v2207 = vpop.permute.xlu0 %2206
        %v2208 = vrot.slane %v2198, 1
        %2209 = vrot.lane.b32.xlu0 %v2208, 64
        %v2210 = vpop.permute.xlu0 %2209
        %v2212 = vunpack.c.l.b16 %v2194
        %v2213 = vpack.c.b16 %v2212, %v2212
        %2214 = vrot.lane.b32.xlu0 %v2213, 96
        %v2215 = vpop.permute.xlu0 %2214
        %v2217 = vshrl.u32 %v2213, 16
        %v2219 = vshll.u32 %v2213, 16
        %v2221 = vrot.slane %v2219, 1
        %v2222 = vor.u32 %v2217, %v2221
        %v2223 = vrot.slane %v2213, 1
        %2224 = vrot.lane.b32.xlu0 %v2223, 32
        %v2225 = vpop.permute.xlu0 %2224
        %v2227 = vunpack.c.l.b16 %v2195
        %v2228 = vpack.c.b16 %v2227, %v2227
        %2229 = vrot.lane.b32.xlu0 %v2228, 64
        %v2230 = vpop.permute.xlu0 %2229
        %v2232 = vshrl.u32 %v2228, 16
        %v2234 = vshll.u32 %v2228, 16
        %v2236 = vrot.slane %v2234, 1
        %v2237 = vor.u32 %v2232, %v2236
        %2238 = vrot.lane.b32.xlu0 %v2237, 96
        %v2239 = vpop.permute.xlu0 %2238
        %v2240 = vrot.slane %v2228, 1
        %v2243 = vsel %vm541, %v2193, %v2207
        %v2245 = vsel %vm1667, %v2243, %v2210
        %v2247 = vsel %vm1670, %v2245, %v2215
        %v2251 = vsel %vm541, %v2222, %v2225
        %v2253 = vsel %vm1667, %v2251, %v2230
        %v2255 = vsel %vm1670, %v2253, %v2239
        %v2258 = vsel %vm541, %v2240, 0
        %2260 = vmatprep.subr.bf16.mxu0 0
        %2261 = vmatpush1.bf16.msra.mxu0 %v1760
        %2262 = vmatprep.subr.bf16.mxu0 0
        %2263 = vmatpush1.bf16.msra.mxu0 %v1761
        %2264 = vmatprep.subr.bf16.mxu0 0
        %2265 = vmatpush1.bf16.msra.mxu0 %v1762
        %2266 = vmatprep.subr.bf16.mxu0 0
        %2267 = vmatpush1.bf16.msra.mxu0 %v1763
        %2268 = vmatprep.subr.bf16.mxu0 0
        %2269 = vmatpush1.bf16.msra.mxu0 %v1764
        %2270 = vmatprep.subr.bf16.mxu0 0
        %2271 = vmatpush1.bf16.msra.mxu0 %v1765
        %2272 = vmatprep.subr.bf16.mxu0 0
        %2273 = vmatpush1.bf16.msra.mxu0 %v1766
        %2274 = vmatprep.subr.bf16.mxu0 0
        %2275 = vmatpush1.bf16.msra.mxu0 %v1767
        %2276 = vmatprep.subr.bf16.mxu0 0
        %2277 = vmatpush1.bf16.msra.mxu0 %v1768
        %2278 = vmatprep.subr.bf16.mxu0 0
        %2279 = vmatpush1.bf16.msra.mxu0 %v1769
        %2280 = vmatprep.subr.bf16.mxu0 0
        %2281 = vmatpush1.bf16.msra.mxu0 %v1770
        %2282 = vmatprep.subr.bf16.mxu0 0
        %2283 = vmatpush1.bf16.msra.mxu0 %v1771
        %2284 = vmatprep.subr.bf16.mxu0 0
        %2285 = vmatpush1.bf16.msra.mxu0 %v1772
        %2286 = vmatprep.subr.bf16.mxu0 0
        %2287 = vmatpush1.bf16.msra.mxu0 %v1773
        %2288 = vmatprep.subr.bf16.mxu0 0
        %2289 = vmatpush1.bf16.msra.mxu0 %v1774
        %2290 = vmatprep.subr.bf16.mxu0 0
        %2291 = vmatpush1.bf16.msra.mxu0 %v1775
        %2292 = vmatprep.mubr.bf16.mxu0 %v2255
        %2293 = vmatmul.mubr.bf16.gmra.mrb[0].mxu0 %v2247
        %v2294 = vpop.f32.mrb[0].mxu0
        %v2295 = vadd.f32 %v1686, %v2294
        %v2296 = vpop.f32.mrb[0].mxu0
        %v2297 = vpop.f32.mrb[0].mxu0
        %v2298 = vpop.f32.mrb[0].mxu0
        %2299 = vdwg.mxu0
        %2300 = vmatprep.subr.bf16.mxu0 0
        %2301 = vmatpush1.bf16.msra.mxu0 %v1776
        %2302 = vmatprep.subr.bf16.mxu0 0
        %2303 = vmatpush1.bf16.msra.mxu0 %v1777
        %2304 = vmatprep.subr.bf16.mxu0 0
        %2305 = vmatpush1.bf16.msra.mxu0 0
        %2306 = vmatprep.subr.bf16.mxu0 0
        %2307 = vmatpush1.bf16.msra.mxu0 0
        %2308 = vmatprep.subr.bf16.mxu0 0
        %2309 = vmatpush1.bf16.msra.mxu0 0
        %2310 = vmatprep.subr.bf16.mxu0 0
        %2311 = vmatpush1.bf16.msra.mxu0 0
        %2312 = vmatprep.subr.bf16.mxu0 0
        %2313 = vmatpush1.bf16.msra.mxu0 0
        %2314 = vmatprep.subr.bf16.mxu0 0
        %2315 = vmatpush1.bf16.msra.mxu0 0
        %2316 = vmatprep.subr.bf16.mxu0 0
        %2317 = vmatpush1.bf16.msra.mxu0 0
        %2318 = vmatprep.subr.bf16.mxu0 0
        %2319 = vmatpush1.bf16.msra.mxu0 0
        %2320 = vmatprep.subr.bf16.mxu0 0
        %2321 = vmatpush1.bf16.msra.mxu0 0
        %2322 = vmatprep.subr.bf16.mxu0 0
        %2323 = vmatpush1.bf16.msra.mxu0 0
        %2324 = vmatprep.subr.bf16.mxu0 0
        %2325 = vmatpush1.bf16.msra.mxu0 0
        %2326 = vmatprep.subr.bf16.mxu0 0
        %2327 = vmatpush1.bf16.msra.mxu0 0
        %2328 = vmatprep.subr.bf16.mxu0 0
        %2329 = vmatpush1.bf16.msra.mxu0 0
        %2330 = vmatprep.subr.bf16.mxu0 0
        %2331 = vmatpush1.bf16.msra.mxu0 0
        %2332 = vmatprep.mubr.bf16.mxu0 0
        %2333 = vmatmul.mubr.bf16.gmra.mrb[0].mxu0 %v2258
        %v2334 = vpop.f32.mrb[0].mxu0
        %v2335 = vadd.f32 %v2295, %v2334
        %v2336 = vpop.f32.mrb[0].mxu0
        %v2337 = vpop.f32.mrb[0].mxu0
        %v2338 = vpop.f32.mrb[0].mxu0
        %2339 = vdwg.mxu0
        %v2340 = vmax.f32 %v2335, 0.0
        %v2341 = vpack.c.bf16 %v2340, %v2340
        %s2342 = scalar_lea.vmem [#allocation3], 12
        %v2343 = vld [vmem:[%s2342] sm:$0x7]
        %v2344 = vsel %vm1883, %v2341, %v2343
        %2345 = vst [vmem:[%s2342] sm:$0x7] %v2344
        %v2346 = vld [vmem:[%s1286] sm:$0xf]
        %v2347 = vld [vmem:[%s1449] sm:$0xf]
        %v2348 = vld [vmem:[%s1612] sm:$0xf]
        %v2350 = vunpack.c.l.b16 %v2346
        %v2351 = vpack.c.b16 %v2350, %v2350
        %v2353 = vshrl.u32 %v2351, 16
        %v2355 = vshll.u32 %v2351, 16
        %v2357 = vrot.slane %v2355, 1
        %v2358 = vor.u32 %v2353, %v2357
        %2359 = vrot.lane.b32.xlu0 %v2358, 32
        %v2360 = vpop.permute.xlu0 %2359
        %v2361 = vrot.slane %v2351, 1
        %2362 = vrot.lane.b32.xlu0 %v2361, 64
        %v2363 = vpop.permute.xlu0 %2362
        %v2365 = vunpack.c.l.b16 %v2347
        %v2366 = vpack.c.b16 %v2365, %v2365
        %2367 = vrot.lane.b32.xlu0 %v2366, 96
        %v2368 = vpop.permute.xlu0 %2367
        %v2370 = vshrl.u32 %v2366, 16
        %v2372 = vshll.u32 %v2366, 16
        %v2374 = vrot.slane %v2372, 1
        %v2375 = vor.u32 %v2370, %v2374
        %v2376 = vrot.slane %v2366, 1
        %2377 = vrot.lane.b32.xlu0 %v2376, 32
        %v2378 = vpop.permute.xlu0 %2377
        %v2380 = vunpack.c.l.b16 %v2348
        %v2381 = vpack.c.b16 %v2380, %v2380
        %2382 = vrot.lane.b32.xlu0 %v2381, 64
        %v2383 = vpop.permute.xlu0 %2382
        %v2385 = vshrl.u32 %v2381, 16
        %v2387 = vshll.u32 %v2381, 16
        %v2389 = vrot.slane %v2387, 1
        %v2390 = vor.u32 %v2385, %v2389
        %2391 = vrot.lane.b32.xlu0 %v2390, 96
        %v2392 = vpop.permute.xlu0 %2391
        %v2393 = vrot.slane %v2381, 1
        %v2396 = vsel %vm541, %v2346, %v2360
        %v2398 = vsel %vm1667, %v2396, %v2363
        %v2400 = vsel %vm1670, %v2398, %v2368
        %v2404 = vsel %vm541, %v2375, %v2378
        %v2406 = vsel %vm1667, %v2404, %v2383
        %v2408 = vsel %vm1670, %v2406, %v2392
        %v2411 = vsel %vm541, %v2393, 0
        %2413 = vmatprep.subr.bf16.mxu0 0
        %2414 = vmatpush1.bf16.msra.mxu0 %v1760
        %2415 = vmatprep.subr.bf16.mxu0 0
        %2416 = vmatpush1.bf16.msra.mxu0 %v1761
        %2417 = vmatprep.subr.bf16.mxu0 0
        %2418 = vmatpush1.bf16.msra.mxu0 %v1762
        %2419 = vmatprep.subr.bf16.mxu0 0
        %2420 = vmatpush1.bf16.msra.mxu0 %v1763
        %2421 = vmatprep.subr.bf16.mxu0 0
        %2422 = vmatpush1.bf16.msra.mxu0 %v1764
        %2423 = vmatprep.subr.bf16.mxu0 0
        %2424 = vmatpush1.bf16.msra.mxu0 %v1765
        %2425 = vmatprep.subr.bf16.mxu0 0
        %2426 = vmatpush1.bf16.msra.mxu0 %v1766
        %2427 = vmatprep.subr.bf16.mxu0 0
        %2428 = vmatpush1.bf16.msra.mxu0 %v1767
        %2429 = vmatprep.subr.bf16.mxu0 0
        %2430 = vmatpush1.bf16.msra.mxu0 %v1768
        %2431 = vmatprep.subr.bf16.mxu0 0
        %2432 = vmatpush1.bf16.msra.mxu0 %v1769
        %2433 = vmatprep.subr.bf16.mxu0 0
        %2434 = vmatpush1.bf16.msra.mxu0 %v1770
        %2435 = vmatprep.subr.bf16.mxu0 0
        %2436 = vmatpush1.bf16.msra.mxu0 %v1771
        %2437 = vmatprep.subr.bf16.mxu0 0
        %2438 = vmatpush1.bf16.msra.mxu0 %v1772
        %2439 = vmatprep.subr.bf16.mxu0 0
        %2440 = vmatpush1.bf16.msra.mxu0 %v1773
        %2441 = vmatprep.subr.bf16.mxu0 0
        %2442 = vmatpush1.bf16.msra.mxu0 %v1774
        %2443 = vmatprep.subr.bf16.mxu0 0
        %2444 = vmatpush1.bf16.msra.mxu0 %v1775
        %2445 = vmatprep.mubr.bf16.mxu0 %v2408
        %2446 = vmatmul.mubr.bf16.gmra.mrb[0].mxu0 %v2400
        %v2447 = vpop.f32.mrb[0].mxu0
        %v2448 = vadd.f32 %v1686, %v2447
        %v2449 = vpop.f32.mrb[0].mxu0
        %v2450 = vpop.f32.mrb[0].mxu0
        %v2451 = vpop.f32.mrb[0].mxu0
        %2452 = vdwg.mxu0
        %2453 = vmatprep.subr.bf16.mxu0 0
        %2454 = vmatpush1.bf16.msra.mxu0 %v1776
        %2455 = vmatprep.subr.bf16.mxu0 0
        %2456 = vmatpush1.bf16.msra.mxu0 %v1777
        %2457 = vmatprep.subr.bf16.mxu0 0
        %2458 = vmatpush1.bf16.msra.mxu0 0
        %2459 = vmatprep.subr.bf16.mxu0 0
        %2460 = vmatpush1.bf16.msra.mxu0 0
        %2461 = vmatprep.subr.bf16.mxu0 0
        %2462 = vmatpush1.bf16.msra.mxu0 0
        %2463 = vmatprep.subr.bf16.mxu0 0
        %2464 = vmatpush1.bf16.msra.mxu0 0
        %2465 = vmatprep.subr.bf16.mxu0 0
        %2466 = vmatpush1.bf16.msra.mxu0 0
        %2467 = vmatprep.subr.bf16.mxu0 0
        %2468 = vmatpush1.bf16.msra.mxu0 0
        %2469 = vmatprep.subr.bf16.mxu0 0
        %2470 = vmatpush1.bf16.msra.mxu0 0
        %2471 = vmatprep.subr.bf16.mxu0 0
        %2472 = vmatpush1.bf16.msra.mxu0 0
        %2473 = vmatprep.subr.bf16.mxu0 0
        %2474 = vmatpush1.bf16.msra.mxu0 0
        %2475 = vmatprep.subr.bf16.mxu0 0
        %2476 = vmatpush1.bf16.msra.mxu0 0
        %2477 = vmatprep.subr.bf16.mxu0 0
        %2478 = vmatpush1.bf16.msra.mxu0 0
        %2479 = vmatprep.subr.bf16.mxu0 0
        %2480 = vmatpush1.bf16.msra.mxu0 0
        %2481 = vmatprep.subr.bf16.mxu0 0
        %2482 = vmatpush1.bf16.msra.mxu0 0
        %2483 = vmatprep.subr.bf16.mxu0 0
        %2484 = vmatpush1.bf16.msra.mxu0 0
        %2485 = vmatprep.mubr.bf16.mxu0 0
        %2486 = vmatmul.mubr.bf16.gmra.mrb[0].mxu0 %v2411
        %v2487 = vpop.f32.mrb[0].mxu0
        %v2488 = vadd.f32 %v2448, %v2487
        %v2489 = vpop.f32.mrb[0].mxu0
        %v2490 = vpop.f32.mrb[0].mxu0
        %v2491 = vpop.f32.mrb[0].mxu0
        %2492 = vdwg.mxu0
        %v2493 = vmax.f32 %v2488, 0.0
        %v2494 = vpack.c.bf16 %v2493, %v2493
        %s2495 = scalar_lea.vmem [#allocation3], 16
        %v2496 = vld [vmem:[%s2495] sm:$0x7]
        %v2497 = vsel %vm1883, %v2494, %v2496
        %2498 = vst [vmem:[%s2495] sm:$0x7] %v2497
        %v2499 = vld [vmem:[#allocation3] sm:$0x7]
        %v2500 = vld [vmem:[%s2036] sm:$0x7]
        %v2501 = vld [vmem:[%s2189] sm:$0x7]
        %v2503 = vunpack.c.l.b16 %v2499
        %v2504 = vpack.c.b16 %v2503, %v2503
        %v2506 = vshrl.u32 %v2504, 16
        %v2508 = vshll.u32 %v2504, 16
        %v2510 = vrot.slane %v2508, 1
        %v2511 = vor.u32 %v2506, %v2510
        %2512 = vrot.lane.b32.xlu0 %v2511, 32
        %v2513 = vpop.permute.xlu0 %2512
        %v2514 = vrot.slane %v2504, 1
        %2515 = vrot.lane.b32.xlu0 %v2514, 64
        %v2516 = vpop.permute.xlu0 %2515
        %v2518 = vunpack.c.l.b16 %v2500
        %v2519 = vpack.c.b16 %v2518, %v2518
        %2520 = vrot.lane.b32.xlu0 %v2519, 96
        %v2521 = vpop.permute.xlu0 %2520
        %v2523 = vshrl.u32 %v2519, 16
        %v2525 = vshll.u32 %v2519, 16
        %v2527 = vrot.slane %v2525, 1
        %v2528 = vor.u32 %v2523, %v2527
        %v2529 = vrot.slane %v2519, 1
        %2530 = vrot.lane.b32.xlu0 %v2529, 32
        %v2531 = vpop.permute.xlu0 %2530
        %v2533 = vunpack.c.l.b16 %v2501
        %v2534 = vpack.c.b16 %v2533, %v2533
        %2535 = vrot.lane.b32.xlu0 %v2534, 64
        %v2536 = vpop.permute.xlu0 %2535
        %v2538 = vshrl.u32 %v2534, 16
        %v2540 = vshll.u32 %v2534, 16
        %v2542 = vrot.slane %v2540, 1
        %v2543 = vor.u32 %v2538, %v2542
        %2544 = vrot.lane.b32.xlu0 %v2543, 96
        %v2545 = vpop.permute.xlu0 %2544
        %v2546 = vrot.slane %v2534, 1
        %v2549 = vsel %vm541, %v2499, %v2513
        %v2551 = vsel %vm1667, %v2549, %v2516
        %v2553 = vsel %vm1670, %v2551, %v2521
        %v2557 = vsel %vm541, %v2528, %v2531
        %v2559 = vsel %vm1667, %v2557, %v2536
        %v2561 = vsel %vm1670, %v2559, %v2545
        %v2564 = vlaneseq
        %v2565 = vshrl.u32 %v2564, 7
        %v2566 = vsub.s32 0, %v2565
        %v2567 = vrot.slane %v415, %v2566
        %v2605 = vunpack.c.l.b16 %v379
        %v2606 = vunpack.c.l.b16 %v380
        %v2607 = vunpack.c.l.b16 %v381
        %v2608 = vunpack.c.l.b16 %v382
        %v2609 = vunpack.c.l.b16 %v383
        %v2610 = vunpack.c.l.b16 %v384
        %v2611 = vunpack.c.l.b16 %v385
        %v2612 = vunpack.c.l.b16 %v386
        %v2613 = vunpack.c.l.b16 %v387
        %v2614 = vunpack.c.l.b16 %v388
        %v2615 = vunpack.c.l.b16 %v389
        %v2616 = vunpack.c.l.b16 %v390
        %v2617 = vunpack.c.l.b16 %v391
        %v2618 = vunpack.c.l.b16 %v392
        %v2619 = vunpack.c.l.b16 %v393
        %v2620 = vunpack.c.l.b16 %v394
        %v2621 = vunpack.c.l.b16 %v395
        %v2622 = vunpack.c.l.b16 %v396
        %v2623 = vunpack.c.l.b16 %v397
        %v2624 = vunpack.c.l.b16 %v398
        %v2625 = vunpack.c.l.b16 %v399
        %v2626 = vunpack.c.l.b16 %v400
        %v2627 = vunpack.c.l.b16 %v401
        %v2628 = vunpack.c.l.b16 %v402
        %v2629 = vunpack.c.l.b16 %v403
        %v2630 = vunpack.c.l.b16 %v404
        %v2631 = vunpack.c.l.b16 %v405
        %v2632 = vunpack.c.l.b16 %v406
        %v2633 = vunpack.c.l.b16 %v407
        %v2634 = vunpack.c.l.b16 %v408
        %v2635 = vunpack.c.l.b16 %v409
        %v2636 = vunpack.c.l.b16 %v410
        %v2637 = vunpack.c.l.b16 %v411
        %v2638 = vunpack.c.l.b16 %v412
        %v2639 = vunpack.c.l.b16 %v413
        %v2640 = vunpack.c.l.b16 %v414
        %v2641 = vpack.c.b16 %v2606, %v2605
        %v2642 = vpack.c.b16 %v2608, %v2607
        %v2643 = vpack.c.b16 %v2610, %v2609
        %v2644 = vpack.c.b16 %v2612, %v2611
        %v2645 = vpack.c.b16 %v2614, %v2613
        %v2646 = vpack.c.b16 %v2616, %v2615
        %v2647 = vpack.c.b16 %v2618, %v2617
        %v2648 = vpack.c.b16 %v2620, %v2619
        %v2649 = vpack.c.b16 %v2622, %v2621
        %v2650 = vpack.c.b16 %v2624, %v2623
        %v2651 = vpack.c.b16 %v2626, %v2625
        %v2652 = vpack.c.b16 %v2628, %v2627
        %v2653 = vpack.c.b16 %v2630, %v2629
        %v2654 = vpack.c.b16 %v2632, %v2631
        %v2655 = vpack.c.b16 %v2634, %v2633
        %v2656 = vpack.c.b16 %v2636, %v2635
        %v2657 = vpack.c.b16 %v2638, %v2637
        %v2658 = vpack.c.b16 %v2640, %v2639
        %v2678 = vsel %vm541, %v2546, 0
        %2680 = vmatprep.subr.bf16.mxu0 0
        %2681 = vmatpush1.bf16.msra.mxu0 %v2641
        %2682 = vmatprep.subr.bf16.mxu0 0
        %2683 = vmatpush1.bf16.msra.mxu0 %v2642
        %2684 = vmatprep.subr.bf16.mxu0 0
        %2685 = vmatpush1.bf16.msra.mxu0 %v2643
        %2686 = vmatprep.subr.bf16.mxu0 0
        %2687 = vmatpush1.bf16.msra.mxu0 %v2644
        %2688 = vmatprep.subr.bf16.mxu0 0
        %2689 = vmatpush1.bf16.msra.mxu0 %v2645
        %2690 = vmatprep.subr.bf16.mxu0 0
        %2691 = vmatpush1.bf16.msra.mxu0 %v2646
        %2692 = vmatprep.subr.bf16.mxu0 0
        %2693 = vmatpush1.bf16.msra.mxu0 %v2647
        %2694 = vmatprep.subr.bf16.mxu0 0
        %2695 = vmatpush1.bf16.msra.mxu0 %v2648
        %2696 = vmatprep.subr.bf16.mxu0 0
        %2697 = vmatpush1.bf16.msra.mxu0 %v2649
        %2698 = vmatprep.subr.bf16.mxu0 0
        %2699 = vmatpush1.bf16.msra.mxu0 %v2650
        %2700 = vmatprep.subr.bf16.mxu0 0
        %2701 = vmatpush1.bf16.msra.mxu0 %v2651
        %2702 = vmatprep.subr.bf16.mxu0 0
        %2703 = vmatpush1.bf16.msra.mxu0 %v2652
        %2704 = vmatprep.subr.bf16.mxu0 0
        %2705 = vmatpush1.bf16.msra.mxu0 %v2653
        %2706 = vmatprep.subr.bf16.mxu0 0
        %2707 = vmatpush1.bf16.msra.mxu0 %v2654
        %2708 = vmatprep.subr.bf16.mxu0 0
        %2709 = vmatpush1.bf16.msra.mxu0 %v2655
        %2710 = vmatprep.subr.bf16.mxu0 0
        %2711 = vmatpush1.bf16.msra.mxu0 %v2656
        %2712 = vmatprep.mubr.bf16.mxu0 %v2561
        %2713 = vmatmul.mubr.bf16.gmra.mrb[0].mxu0 %v2553
        %v2714 = vpop.f32.mrb[0].mxu0
        %v2715 = vadd.f32 %v2567, %v2714
        %v2716 = vpop.f32.mrb[0].mxu0
        %v2717 = vpop.f32.mrb[0].mxu0
        %v2718 = vpop.f32.mrb[0].mxu0
        %2719 = vdwg.mxu0
        %2720 = vmatprep.subr.bf16.mxu0 0
        %2721 = vmatpush1.bf16.msra.mxu0 %v2657
        %2722 = vmatprep.subr.bf16.mxu0 0
        %2723 = vmatpush1.bf16.msra.mxu0 %v2658
        %2724 = vmatprep.subr.bf16.mxu0 0
        %2725 = vmatpush1.bf16.msra.mxu0 0
        %2726 = vmatprep.subr.bf16.mxu0 0
        %2727 = vmatpush1.bf16.msra.mxu0 0
        %2728 = vmatprep.subr.bf16.mxu0 0
        %2729 = vmatpush1.bf16.msra.mxu0 0
        %2730 = vmatprep.subr.bf16.mxu0 0
        %2731 = vmatpush1.bf16.msra.mxu0 0
        %2732 = vmatprep.subr.bf16.mxu0 0
        %2733 = vmatpush1.bf16.msra.mxu0 0
        %2734 = vmatprep.subr.bf16.mxu0 0
        %2735 = vmatpush1.bf16.msra.mxu0 0
        %2736 = vmatprep.subr.bf16.mxu0 0
        %2737 = vmatpush1.bf16.msra.mxu0 0
        %2738 = vmatprep.subr.bf16.mxu0 0
        %2739 = vmatpush1.bf16.msra.mxu0 0
        %2740 = vmatprep.subr.bf16.mxu0 0
        %2741 = vmatpush1.bf16.msra.mxu0 0
        %2742 = vmatprep.subr.bf16.mxu0 0
        %2743 = vmatpush1.bf16.msra.mxu0 0
        %2744 = vmatprep.subr.bf16.mxu0 0
        %2745 = vmatpush1.bf16.msra.mxu0 0
        %2746 = vmatprep.subr.bf16.mxu0 0
        %2747 = vmatpush1.bf16.msra.mxu0 0
        %2748 = vmatprep.subr.bf16.mxu0 0
        %2749 = vmatpush1.bf16.msra.mxu0 0
        %2750 = vmatprep.subr.bf16.mxu0 0
        %2751 = vmatpush1.bf16.msra.mxu0 0
        %2752 = vmatprep.mubr.bf16.mxu0 0
        %2753 = vmatmul.mubr.bf16.gmra.mrb[0].mxu0 %v2678
        %v2754 = vpop.f32.mrb[0].mxu0
        %v2755 = vadd.f32 %v2715, %v2754
        %v2756 = vpop.f32.mrb[0].mxu0
        %v2757 = vpop.f32.mrb[0].mxu0
        %v2758 = vpop.f32.mrb[0].mxu0
        %2759 = vdwg.mxu0
        %v2760 = vmax.f32 %v2755, 0.0
        %v2761 = vpack.c.bf16 %v2760, %v2760
        %vm2762 = vcmask 254976
        %vm2763 = vsmask.f32 1280
        %vm2764 = vmand %vm2762, %vm2763
        %v2765 = vld [vmem:[#allocation4] sm:$0x3]
        %v2766 = vsel %vm2764, %v2761, %v2765
        %2767 = vst [vmem:[#allocation4] sm:$0x3] %v2766
        %v2768 = vld [vmem:[%s2036] sm:$0x7]
        %v2769 = vld [vmem:[%s2189] sm:$0x7]
        %v2770 = vld [vmem:[%s2342] sm:$0x7]
        %v2772 = vunpack.c.l.b16 %v2768
        %v2773 = vpack.c.b16 %v2772, %v2772
        %v2775 = vshrl.u32 %v2773, 16
        %v2777 = vshll.u32 %v2773, 16
        %v2779 = vrot.slane %v2777, 1
        %v2780 = vor.u32 %v2775, %v2779
        %2781 = vrot.lane.b32.xlu0 %v2780, 32
        %v2782 = vpop.permute.xlu0 %2781
        %v2783 = vrot.slane %v2773, 1
        %2784 = vrot.lane.b32.xlu0 %v2783, 64
        %v2785 = vpop.permute.xlu0 %2784
        %v2787 = vunpack.c.l.b16 %v2769
        %v2788 = vpack.c.b16 %v2787, %v2787
        %2789 = vrot.lane.b32.xlu0 %v2788, 96
        %v2790 = vpop.permute.xlu0 %2789
        %v2792 = vshrl.u32 %v2788, 16
        %v2794 = vshll.u32 %v2788, 16
        %v2796 = vrot.slane %v2794, 1
        %v2797 = vor.u32 %v2792, %v2796
        %v2798 = vrot.slane %v2788, 1
        %2799 = vrot.lane.b32.xlu0 %v2798, 32
        %v2800 = vpop.permute.xlu0 %2799
        %v2802 = vunpack.c.l.b16 %v2770
        %v2803 = vpack.c.b16 %v2802, %v2802
        %2804 = vrot.lane.b32.xlu0 %v2803, 64
        %v2805 = vpop.permute.xlu0 %2804
        %v2807 = vshrl.u32 %v2803, 16
        %v2809 = vshll.u32 %v2803, 16
        %v2811 = vrot.slane %v2809, 1
        %v2812 = vor.u32 %v2807, %v2811
        %2813 = vrot.lane.b32.xlu0 %v2812, 96
        %v2814 = vpop.permute.xlu0 %2813
        %v2815 = vrot.slane %v2803, 1
        %v2818 = vsel %vm541, %v2768, %v2782
        %v2820 = vsel %vm1667, %v2818, %v2785
        %v2822 = vsel %vm1670, %v2820, %v2790
        %v2826 = vsel %vm541, %v2797, %v2800
        %v2828 = vsel %vm1667, %v2826, %v2805
        %v2830 = vsel %vm1670, %v2828, %v2814
        %v2833 = vsel %vm541, %v2815, 0
        %2835 = vmatprep.subr.bf16.mxu0 0
        %2836 = vmatpush1.bf16.msra.mxu0 %v2641
        %2837 = vmatprep.subr.bf16.mxu0 0
        %2838 = vmatpush1.bf16.msra.mxu0 %v2642
        %2839 = vmatprep.subr.bf16.mxu0 0
        %2840 = vmatpush1.bf16.msra.mxu0 %v2643
        %2841 = vmatprep.subr.bf16.mxu0 0
        %2842 = vmatpush1.bf16.msra.mxu0 %v2644
        %2843 = vmatprep.subr.bf16.mxu0 0
        %2844 = vmatpush1.bf16.msra.mxu0 %v2645
        %2845 = vmatprep.subr.bf16.mxu0 0
        %2846 = vmatpush1.bf16.msra.mxu0 %v2646
        %2847 = vmatprep.subr.bf16.mxu0 0
        %2848 = vmatpush1.bf16.msra.mxu0 %v2647
        %2849 = vmatprep.subr.bf16.mxu0 0
        %2850 = vmatpush1.bf16.msra.mxu0 %v2648
        %2851 = vmatprep.subr.bf16.mxu0 0
        %2852 = vmatpush1.bf16.msra.mxu0 %v2649
        %2853 = vmatprep.subr.bf16.mxu0 0
        %2854 = vmatpush1.bf16.msra.mxu0 %v2650
        %2855 = vmatprep.subr.bf16.mxu0 0
        %2856 = vmatpush1.bf16.msra.mxu0 %v2651
        %2857 = vmatprep.subr.bf16.mxu0 0
        %2858 = vmatpush1.bf16.msra.mxu0 %v2652
        %2859 = vmatprep.subr.bf16.mxu0 0
        %2860 = vmatpush1.bf16.msra.mxu0 %v2653
        %2861 = vmatprep.subr.bf16.mxu0 0
        %2862 = vmatpush1.bf16.msra.mxu0 %v2654
        %2863 = vmatprep.subr.bf16.mxu0 0
        %2864 = vmatpush1.bf16.msra.mxu0 %v2655
        %2865 = vmatprep.subr.bf16.mxu0 0
        %2866 = vmatpush1.bf16.msra.mxu0 %v2656
        %2867 = vmatprep.mubr.bf16.mxu0 %v2830
        %2868 = vmatmul.mubr.bf16.gmra.mrb[0].mxu0 %v2822
        %v2869 = vpop.f32.mrb[0].mxu0
        %v2870 = vadd.f32 %v2567, %v2869
        %v2871 = vpop.f32.mrb[0].mxu0
        %v2872 = vpop.f32.mrb[0].mxu0
        %v2873 = vpop.f32.mrb[0].mxu0
        %2874 = vdwg.mxu0
        %2875 = vmatprep.subr.bf16.mxu0 0
        %2876 = vmatpush1.bf16.msra.mxu0 %v2657
        %2877 = vmatprep.subr.bf16.mxu0 0
        %2878 = vmatpush1.bf16.msra.mxu0 %v2658
        %2879 = vmatprep.subr.bf16.mxu0 0
        %2880 = vmatpush1.bf16.msra.mxu0 0
        %2881 = vmatprep.subr.bf16.mxu0 0
        %2882 = vmatpush1.bf16.msra.mxu0 0
        %2883 = vmatprep.subr.bf16.mxu0 0
        %2884 = vmatpush1.bf16.msra.mxu0 0
        %2885 = vmatprep.subr.bf16.mxu0 0
        %2886 = vmatpush1.bf16.msra.mxu0 0
        %2887 = vmatprep.subr.bf16.mxu0 0
        %2888 = vmatpush1.bf16.msra.mxu0 0
        %2889 = vmatprep.subr.bf16.mxu0 0
        %2890 = vmatpush1.bf16.msra.mxu0 0
        %2891 = vmatprep.subr.bf16.mxu0 0
        %2892 = vmatpush1.bf16.msra.mxu0 0
        %2893 = vmatprep.subr.bf16.mxu0 0
        %2894 = vmatpush1.bf16.msra.mxu0 0
        %2895 = vmatprep.subr.bf16.mxu0 0
        %2896 = vmatpush1.bf16.msra.mxu0 0
        %2897 = vmatprep.subr.bf16.mxu0 0
        %2898 = vmatpush1.bf16.msra.mxu0 0
        %2899 = vmatprep.subr.bf16.mxu0 0
        %2900 = vmatpush1.bf16.msra.mxu0 0
        %2901 = vmatprep.subr.bf16.mxu0 0
        %2902 = vmatpush1.bf16.msra.mxu0 0
        %2903 = vmatprep.subr.bf16.mxu0 0
        %2904 = vmatpush1.bf16.msra.mxu0 0
        %2905 = vmatprep.subr.bf16.mxu0 0
        %2906 = vmatpush1.bf16.msra.mxu0 0
        %2907 = vmatprep.mubr.bf16.mxu0 0
        %2908 = vmatmul.mubr.bf16.gmra.mrb[0].mxu0 %v2833
        %v2909 = vpop.f32.mrb[0].mxu0
        %v2910 = vadd.f32 %v2870, %v2909
        %v2911 = vpop.f32.mrb[0].mxu0
        %v2912 = vpop.f32.mrb[0].mxu0
        %v2913 = vpop.f32.mrb[0].mxu0
        %2914 = vdwg.mxu0
        %v2915 = vmax.f32 %v2910, 0.0
        %v2916 = vpack.c.bf16 %v2915, %v2915
        %s2917 = scalar_lea.vmem [#allocation4], 2
        %v2918 = vld [vmem:[%s2917] sm:$0x3]
        %v2919 = vsel %vm2764, %v2916, %v2918
        %2920 = vst [vmem:[%s2917] sm:$0x3] %v2919
        %v2921 = vld [vmem:[%s2189] sm:$0x7]
        %v2922 = vld [vmem:[%s2342] sm:$0x7]
        %v2923 = vld [vmem:[%s2495] sm:$0x7]
        %v2925 = vunpack.c.l.b16 %v2921
        %v2926 = vpack.c.b16 %v2925, %v2925
        %v2928 = vshrl.u32 %v2926, 16
        %v2930 = vshll.u32 %v2926, 16
        %v2932 = vrot.slane %v2930, 1
        %v2933 = vor.u32 %v2928, %v2932
        %2934 = vrot.lane.b32.xlu0 %v2933, 32
        %v2935 = vpop.permute.xlu0 %2934
        %v2936 = vrot.slane %v2926, 1
        %2937 = vrot.lane.b32.xlu0 %v2936, 64
        %v2938 = vpop.permute.xlu0 %2937
        %v2940 = vunpack.c.l.b16 %v2922
        %v2941 = vpack.c.b16 %v2940, %v2940
        %2942 = vrot.lane.b32.xlu0 %v2941, 96
        %v2943 = vpop.permute.xlu0 %2942
        %v2945 = vshrl.u32 %v2941, 16
        %v2947 = vshll.u32 %v2941, 16
        %v2949 = vrot.slane %v2947, 1
        %v2950 = vor.u32 %v2945, %v2949
        %v2951 = vrot.slane %v2941, 1
        %2952 = vrot.lane.b32.xlu0 %v2951, 32
        %v2953 = vpop.permute.xlu0 %2952
        %v2955 = vunpack.c.l.b16 %v2923
        %v2956 = vpack.c.b16 %v2955, %v2955
        %2957 = vrot.lane.b32.xlu0 %v2956, 64
        %v2958 = vpop.permute.xlu0 %2957
        %v2960 = vshrl.u32 %v2956, 16
        %v2962 = vshll.u32 %v2956, 16
        %v2964 = vrot.slane %v2962, 1
        %v2965 = vor.u32 %v2960, %v2964
        %2966 = vrot.lane.b32.xlu0 %v2965, 96
        %v2967 = vpop.permute.xlu0 %2966
        %v2968 = vrot.slane %v2956, 1
        %v2971 = vsel %vm541, %v2921, %v2935
        %v2973 = vsel %vm1667, %v2971, %v2938
        %v2975 = vsel %vm1670, %v2973, %v2943
        %v2979 = vsel %vm541, %v2950, %v2953
        %v2981 = vsel %vm1667, %v2979, %v2958
        %v2983 = vsel %vm1670, %v2981, %v2967
        %v2986 = vsel %vm541, %v2968, 0
        %2988 = vmatprep.subr.bf16.mxu0 0
        %2989 = vmatpush1.bf16.msra.mxu0 %v2641
        %2990 = vmatprep.subr.bf16.mxu0 0
        %2991 = vmatpush1.bf16.msra.mxu0 %v2642
        %2992 = vmatprep.subr.bf16.mxu0 0
        %2993 = vmatpush1.bf16.msra.mxu0 %v2643
        %2994 = vmatprep.subr.bf16.mxu0 0
        %2995 = vmatpush1.bf16.msra.mxu0 %v2644
        %2996 = vmatprep.subr.bf16.mxu0 0
        %2997 = vmatpush1.bf16.msra.mxu0 %v2645
        %2998 = vmatprep.subr.bf16.mxu0 0
        %2999 = vmatpush1.bf16.msra.mxu0 %v2646
        %3000 = vmatprep.subr.bf16.mxu0 0
        %3001 = vmatpush1.bf16.msra.mxu0 %v2647
        %3002 = vmatprep.subr.bf16.mxu0 0
        %3003 = vmatpush1.bf16.msra.mxu0 %v2648
        %3004 = vmatprep.subr.bf16.mxu0 0
        %3005 = vmatpush1.bf16.msra.mxu0 %v2649
        %3006 = vmatprep.subr.bf16.mxu0 0
        %3007 = vmatpush1.bf16.msra.mxu0 %v2650
        %3008 = vmatprep.subr.bf16.mxu0 0
        %3009 = vmatpush1.bf16.msra.mxu0 %v2651
        %3010 = vmatprep.subr.bf16.mxu0 0
        %3011 = vmatpush1.bf16.msra.mxu0 %v2652
        %3012 = vmatprep.subr.bf16.mxu0 0
        %3013 = vmatpush1.bf16.msra.mxu0 %v2653
        %3014 = vmatprep.subr.bf16.mxu0 0
        %3015 = vmatpush1.bf16.msra.mxu0 %v2654
        %3016 = vmatprep.subr.bf16.mxu0 0
        %3017 = vmatpush1.bf16.msra.mxu0 %v2655
        %3018 = vmatprep.subr.bf16.mxu0 0
        %3019 = vmatpush1.bf16.msra.mxu0 %v2656
        %3020 = vmatprep.mubr.bf16.mxu0 %v2983
        %3021 = vmatmul.mubr.bf16.gmra.mrb[0].mxu0 %v2975
        %v3022 = vpop.f32.mrb[0].mxu0
        %v3023 = vadd.f32 %v2567, %v3022
        %v3024 = vpop.f32.mrb[0].mxu0
        %v3025 = vpop.f32.mrb[0].mxu0
        %v3026 = vpop.f32.mrb[0].mxu0
        %3027 = vdwg.mxu0
        %3028 = vmatprep.subr.bf16.mxu0 0
        %3029 = vmatpush1.bf16.msra.mxu0 %v2657
        %3030 = vmatprep.subr.bf16.mxu0 0
        %3031 = vmatpush1.bf16.msra.mxu0 %v2658
        %3032 = vmatprep.subr.bf16.mxu0 0
        %3033 = vmatpush1.bf16.msra.mxu0 0
        %3034 = vmatprep.subr.bf16.mxu0 0
        %3035 = vmatpush1.bf16.msra.mxu0 0
        %3036 = vmatprep.subr.bf16.mxu0 0
        %3037 = vmatpush1.bf16.msra.mxu0 0
        %3038 = vmatprep.subr.bf16.mxu0 0
        %3039 = vmatpush1.bf16.msra.mxu0 0
        %3040 = vmatprep.subr.bf16.mxu0 0
        %3041 = vmatpush1.bf16.msra.mxu0 0
        %3042 = vmatprep.subr.bf16.mxu0 0
        %3043 = vmatpush1.bf16.msra.mxu0 0
        %3044 = vmatprep.subr.bf16.mxu0 0
        %3045 = vmatpush1.bf16.msra.mxu0 0
        %3046 = vmatprep.subr.bf16.mxu0 0
        %3047 = vmatpush1.bf16.msra.mxu0 0
        %3048 = vmatprep.subr.bf16.mxu0 0
        %3049 = vmatpush1.bf16.msra.mxu0 0
        %3050 = vmatprep.subr.bf16.mxu0 0
        %3051 = vmatpush1.bf16.msra.mxu0 0
        %3052 = vmatprep.subr.bf16.mxu0 0
        %3053 = vmatpush1.bf16.msra.mxu0 0
        %3054 = vmatprep.subr.bf16.mxu0 0
        %3055 = vmatpush1.bf16.msra.mxu0 0
        %3056 = vmatprep.subr.bf16.mxu0 0
        %3057 = vmatpush1.bf16.msra.mxu0 0
        %3058 = vmatprep.subr.bf16.mxu0 0
        %3059 = vmatpush1.bf16.msra.mxu0 0
        %3060 = vmatprep.mubr.bf16.mxu0 0
        %3061 = vmatmul.mubr.bf16.gmra.mrb[0].mxu0 %v2986
        %v3062 = vpop.f32.mrb[0].mxu0
        %v3063 = vadd.f32 %v3023, %v3062
        %v3064 = vpop.f32.mrb[0].mxu0
        %v3065 = vpop.f32.mrb[0].mxu0
        %v3066 = vpop.f32.mrb[0].mxu0
        %3067 = vdwg.mxu0
        %v3068 = vmax.f32 %v3063, 0.0
        %v3069 = vpack.c.bf16 %v3068, %v3068
        %s3070 = scalar_lea.vmem [#allocation4], 4
        %v3071 = vld [vmem:[%s3070] sm:$0x3]
        %v3072 = vsel %vm2764, %v3069, %v3071
        %3073 = vst [vmem:[%s3070] sm:$0x3] %v3072
        %v3074 = vld [vmem:[#allocation4] sm:$0x3]
        %v3075 = vld [vmem:[%s2917] sm:$0x3]
        %v3076 = vld [vmem:[%s3070] sm:$0x3]
        %v3079 = vunpack.c.l.s4 1983009808
        %v3080 = vunpack.c.0.s8 %v3079
        %v3081 = vlaneseq
        %v3082 = vshrl.u32 %v3081, 7
        %v3083 = vsub.s32 %v3080, %v3082
        %v3084 = vrot.slane %v3074, %v3083
        %v3086 = vshrl.u32 %v3084, 16
        %3088 = vrot.lane.b32.xlu0 %v3086, 32
        %v3089 = vpop.permute.xlu0 %3088
        %v3090 = vrot.slane %v3084, 1
        %3091 = vrot.lane.b32.xlu0 %v3090, 64
        %v3092 = vpop.permute.xlu0 %3091
        %v3095 = vunpack.c.l.s4 1983009808
        %v3096 = vunpack.c.0.s8 %v3095
        %v3097 = vlaneseq
        %v3098 = vshrl.u32 %v3097, 7
        %v3099 = vsub.s32 %v3096, %v3098
        %v3100 = vrot.slane %v3075, %v3099
        %3101 = vrot.lane.b32.xlu0 %v3100, 96
        %v3102 = vpop.permute.xlu0 %3101
        %v3104 = vshrl.u32 %v3100, 16
        %v3106 = vrot.slane %v3100, 1
        %3107 = vrot.lane.b32.xlu0 %v3106, 32
        %v3108 = vpop.permute.xlu0 %3107
        %v3111 = vunpack.c.l.s4 1983009808
        %v3112 = vunpack.c.0.s8 %v3111
        %v3113 = vlaneseq
        %v3114 = vshrl.u32 %v3113, 7
        %v3115 = vsub.s32 %v3112, %v3114
        %v3116 = vrot.slane %v3076, %v3115
        %3117 = vrot.lane.b32.xlu0 %v3116, 64
        %v3118 = vpop.permute.xlu0 %3117
        %v3120 = vshrl.u32 %v3116, 16
        %3122 = vrot.lane.b32.xlu0 %v3120, 96
        %v3123 = vpop.permute.xlu0 %3122
        %v3124 = vrot.slane %v3116, 1
        %v3127 = vsel %vm541, %v3074, %v3089
        %v3129 = vsel %vm1667, %v3127, %v3092
        %v3131 = vsel %vm1670, %v3129, %v3102
        %v3135 = vsel %vm541, %v3104, %v3108
        %v3137 = vsel %vm1667, %v3135, %v3118
        %v3139 = vsel %vm1670, %v3137, %v3123
        %v3177 = vunpack.c.l.b16 %v416
        %v3178 = vunpack.c.l.b16 %v417
        %v3179 = vunpack.c.l.b16 %v418
        %v3180 = vunpack.c.l.b16 %v419
        %v3181 = vunpack.c.l.b16 %v420
        %v3182 = vunpack.c.l.b16 %v421
        %v3183 = vunpack.c.l.b16 %v422
        %v3184 = vunpack.c.l.b16 %v423
        %v3185 = vunpack.c.l.b16 %v424
        %v3186 = vunpack.c.l.b16 %v425
        %v3187 = vunpack.c.l.b16 %v426
        %v3188 = vunpack.c.l.b16 %v427
        %v3189 = vunpack.c.l.b16 %v428
        %v3190 = vunpack.c.l.b16 %v429
        %v3191 = vunpack.c.l.b16 %v430
        %v3192 = vunpack.c.l.b16 %v431
        %v3193 = vunpack.c.l.b16 %v432
        %v3194 = vunpack.c.l.b16 %v433
        %v3195 = vunpack.c.l.b16 %v434
        %v3196 = vunpack.c.l.b16 %v435
        %v3197 = vunpack.c.l.b16 %v436
        %v3198 = vunpack.c.l.b16 %v437
        %v3199 = vunpack.c.l.b16 %v438
        %v3200 = vunpack.c.l.b16 %v439
        %v3201 = vunpack.c.l.b16 %v440
        %v3202 = vunpack.c.l.b16 %v441
        %v3203 = vunpack.c.l.b16 %v442
        %v3204 = vunpack.c.l.b16 %v443
        %v3205 = vunpack.c.l.b16 %v444
        %v3206 = vunpack.c.l.b16 %v445
        %v3207 = vunpack.c.l.b16 %v446
        %v3208 = vunpack.c.l.b16 %v447
        %v3209 = vunpack.c.l.b16 %v448
        %v3210 = vunpack.c.l.b16 %v449
        %v3211 = vunpack.c.l.b16 %v450
        %v3212 = vunpack.c.l.b16 %v451
        %v3213 = vpack.c.b16 %v3178, %v3177
        %v3214 = vpack.c.b16 %v3180, %v3179
        %v3215 = vpack.c.b16 %v3182, %v3181
        %v3216 = vpack.c.b16 %v3184, %v3183
        %v3217 = vpack.c.b16 %v3186, %v3185
        %v3218 = vpack.c.b16 %v3188, %v3187
        %v3219 = vpack.c.b16 %v3190, %v3189
        %v3220 = vpack.c.b16 %v3192, %v3191
        %v3221 = vpack.c.b16 %v3194, %v3193
        %v3222 = vpack.c.b16 %v3196, %v3195
        %v3223 = vpack.c.b16 %v3198, %v3197
        %v3224 = vpack.c.b16 %v3200, %v3199
        %v3225 = vpack.c.b16 %v3202, %v3201
        %v3226 = vpack.c.b16 %v3204, %v3203
        %v3227 = vpack.c.b16 %v3206, %v3205
        %v3228 = vpack.c.b16 %v3208, %v3207
        %v3229 = vpack.c.b16 %v3210, %v3209
        %v3230 = vpack.c.b16 %v3212, %v3211
        %v3250 = vsel %vm541, %v3124, 0
        %3252 = vmatprep.subr.bf16.mxu0 0
        %3253 = vmatpush1.bf16.msra.mxu0 %v3213
        %3254 = vmatprep.subr.bf16.mxu0 0
        %3255 = vmatpush1.bf16.msra.mxu0 %v3214
        %3256 = vmatprep.subr.bf16.mxu0 0
        %3257 = vmatpush1.bf16.msra.mxu0 %v3215
        %3258 = vmatprep.subr.bf16.mxu0 0
        %3259 = vmatpush1.bf16.msra.mxu0 %v3216
        %3260 = vmatprep.subr.bf16.mxu0 0
        %3261 = vmatpush1.bf16.msra.mxu0 %v3217
        %3262 = vmatprep.subr.bf16.mxu0 0
        %3263 = vmatpush1.bf16.msra.mxu0 %v3218
        %3264 = vmatprep.subr.bf16.mxu0 0
        %3265 = vmatpush1.bf16.msra.mxu0 %v3219
        %3266 = vmatprep.subr.bf16.mxu0 0
        %3267 = vmatpush1.bf16.msra.mxu0 %v3220
        %3268 = vmatprep.subr.bf16.mxu0 0
        %3269 = vmatpush1.bf16.msra.mxu0 %v3221
        %3270 = vmatprep.subr.bf16.mxu0 0
        %3271 = vmatpush1.bf16.msra.mxu0 %v3222
        %3272 = vmatprep.subr.bf16.mxu0 0
        %3273 = vmatpush1.bf16.msra.mxu0 %v3223
        %3274 = vmatprep.subr.bf16.mxu0 0
        %3275 = vmatpush1.bf16.msra.mxu0 %v3224
        %3276 = vmatprep.subr.bf16.mxu0 0
        %3277 = vmatpush1.bf16.msra.mxu0 %v3225
        %3278 = vmatprep.subr.bf16.mxu0 0
        %3279 = vmatpush1.bf16.msra.mxu0 %v3226
        %3280 = vmatprep.subr.bf16.mxu0 0
        %3281 = vmatpush1.bf16.msra.mxu0 %v3227
        %3282 = vmatprep.subr.bf16.mxu0 0
        %3283 = vmatpush1.bf16.msra.mxu0 %v3228
        %3284 = vmatprep.mubr.bf16.mxu0 %v3139
        %3285 = vmatmul.mubr.bf16.gmra.mrb[0].mxu0 %v3131
        %v3286 = vpop.f32.mrb[0].mxu0
        %v3287 = vadd.f32 %v452, %v3286
        %v3288 = vpop.f32.mrb[0].mxu0
        %v3289 = vpop.f32.mrb[0].mxu0
        %v3290 = vpop.f32.mrb[0].mxu0
        %3291 = vdwg.mxu0
        %3292 = vmatprep.subr.bf16.mxu0 0
        %3293 = vmatpush1.bf16.msra.mxu0 %v3229
        %3294 = vmatprep.subr.bf16.mxu0 0
        %3295 = vmatpush1.bf16.msra.mxu0 %v3230
        %3296 = vmatprep.subr.bf16.mxu0 0
        %3297 = vmatpush1.bf16.msra.mxu0 0
        %3298 = vmatprep.subr.bf16.mxu0 0
        %3299 = vmatpush1.bf16.msra.mxu0 0
        %3300 = vmatprep.subr.bf16.mxu0 0
        %3301 = vmatpush1.bf16.msra.mxu0 0
        %3302 = vmatprep.subr.bf16.mxu0 0
        %3303 = vmatpush1.bf16.msra.mxu0 0
        %3304 = vmatprep.subr.bf16.mxu0 0
        %3305 = vmatpush1.bf16.msra.mxu0 0
        %3306 = vmatprep.subr.bf16.mxu0 0
        %3307 = vmatpush1.bf16.msra.mxu0 0
        %3308 = vmatprep.subr.bf16.mxu0 0
        %3309 = vmatpush1.bf16.msra.mxu0 0
        %3310 = vmatprep.subr.bf16.mxu0 0
        %3311 = vmatpush1.bf16.msra.mxu0 0
        %3312 = vmatprep.subr.bf16.mxu0 0
        %3313 = vmatpush1.bf16.msra.mxu0 0
        %3314 = vmatprep.subr.bf16.mxu0 0
        %3315 = vmatpush1.bf16.msra.mxu0 0
        %3316 = vmatprep.subr.bf16.mxu0 0
        %3317 = vmatpush1.bf16.msra.mxu0 0
        %3318 = vmatprep.subr.bf16.mxu0 0
        %3319 = vmatpush1.bf16.msra.mxu0 0
        %3320 = vmatprep.subr.bf16.mxu0 0
        %3321 = vmatpush1.bf16.msra.mxu0 0
        %3322 = vmatprep.subr.bf16.mxu0 0
        %3323 = vmatpush1.bf16.msra.mxu0 0
        %3324 = vmatprep.mubr.bf16.mxu0 0
        %3325 = vmatmul.mubr.bf16.gmra.mrb[0].mxu0 %v3250
        %v3326 = vpop.f32.mrb[0].mxu0
        %v3327 = vadd.f32 %v3287, %v3326
        %v3328 = vpop.f32.mrb[0].mxu0
        %v3329 = vpop.f32.mrb[0].mxu0
        %v3330 = vpop.f32.mrb[0].mxu0
        %3331 = vdwg.mxu0
        %v3332 = vmax.f32 %v3327, 0.0
        %vm3333 = vcmask 253952
        %3334 = vst.msk [vmem:[%s327] sm:$0x1] %vm3333, %v3332
        %s3335 = sand.u32 %s225, 1
        %s3336 = scalar_lea.sflag [#allocation6], %s3335
        %s3337 = sand.u32 %s225, 1
        %s3338 = scalar_lea.vmem [#allocation5], %s3337
        // Predicated region
        $region57: #{encoder_forward.1} parent=55 // pred_check
          %p3339 = pneg %p235
        $region58: #{encoder_forward.1} parent=55 // pred_check_branch
          %3341 = sbr.rel (%p3339) target = $region60
        $region59: #{encoder_forward.1} parent=55 // pred_region
          %s3343 = ssub.s32 16, 16
          %3344 = vsyncadd %s3336, %s3343
          %s3345 = smul.addr %s23, 16
          %s3346 = scalar_lea.hbm %s9, %s3345
          %s3348 = sshll.u32 %s3338, 4
          %s3349 = int_to_ptr.vmem [resolvable:$true] %s3348
          %3351 = dma.vmem_to_hbm [thread:$0]  %s3349, 16, %s3346, %s3336
        $region60: #{encoder_forward.1} parent=55 // pred_fallthru
          _
      $region56: #{encoder_forward.1} parent=5 // pred_fallthru
        _
      %p3352 = scmp.le.s32.totalorder 2, %s18
      // Predicated region
      $region61: #{encoder_forward.1} parent=5 // pred_check
        %p3353 = pneg %p3352
      $region62: #{encoder_forward.1} parent=5 // pred_check_branch
        %3355 = sbr.rel (%p3353) target = $region64
      $region63: #{encoder_forward.1} parent=5 // pred_region
        %s3356 = ssub.s32 %s18, 2
        // Predicated region
        $region65: #{encoder_forward.1} parent=63 // pred_check
          %p3357 = pneg %p241
        $region66: #{encoder_forward.1} parent=63 // pred_check_branch
          %3359 = sbr.rel (%p3357) target = $region68
        $region67: #{encoder_forward.1} parent=63 // pred_region
          %s3360 = sand.u32 %s226, 1
          %s3361 = scalar_lea.sflag [#allocation6], %s3360
          %s3362 = sand.u32 %s226, 1
          %s3363 = scalar_lea.vmem [#allocation5], %s3362
          %3364 = dma.done %s3361, 16
        $region68: #{encoder_forward.1} parent=63 // pred_fallthru
          _
      $region64: #{encoder_forward.1} parent=5 // pred_fallthru
        _
    $region6: #{encoder_forward.1} parent=1 // loop_footer
      %s22 = sadd.s32 1, %s18
    $region7: #{encoder_forward.1} parent=1 // loop_footer_branch
      %17 = sbr.rel target = $region3
    $region8: #{encoder_forward.1} parent=1 // loop_exit
      _
    %3365 = vsyncpa [#allocation6], 1
    %s3366 = scalar_lea.sflag [#allocation6], 1
    %3367 = vsyncpa %s3366, 1

</llo_original>
